<compile_context>
chip_gen: v6e
topology: v6e:2x2x1
jax: 0.10.0
libtpu: 0.0.40
codegen_flags: <defaults>
</compile_context>

<pallas_src>
import jax
import jax.numpy as jnp
from jax.experimental import pallas as pl
from jax.experimental.pallas import tpu as pltpu

LN_EPS = 1e-5  # nn.LayerNorm default


# ---------------------------------------------------------------------------
# Kernel: gridless — all operands resident in VMEM, layers unrolled in-kernel.
# ---------------------------------------------------------------------------
def _mme_kernel(ego0_ref, en_ref, g_ref, bh_ref, wkv_ref, bkv_ref, whh_ref,
                vec_ref, out_ref):
    num_layers = wkv_ref.shape[0]
    H = out_ref.shape[1]

    def layer_norm(x, gamma, beta):
        mu = jnp.mean(x, axis=-1, keepdims=True)
        var = jnp.mean(jnp.square(x - mu), axis=-1, keepdims=True)
        return (x - mu) * jax.lax.rsqrt(var + LN_EPS) * gamma + beta

    def dot(a, b):
        return jnp.dot(a, b, preferred_element_type=jnp.float32)

    def dot_t(a, b):
        # a.T @ b without materializing a transpose: contract dim 0 of both.
        return jax.lax.dot_general(a, b, (((0,), (0,)), ((), ())),
                                   preferred_element_type=jnp.float32)

    # Resident graph tensors (loaded once, reused by every layer).
    en = en_ref[...]                              # (EM, 2*Hh) == [edge | node]
    G = g_ref[...].astype(jnp.float32)            # (EM, NM) exact 0/1 (bf16 in HBM)
    Bh = bh_ref[...]                              # (H, H) head block-diagonal ones

    ego = ego0_ref[...]                           # (NM, H) carried across layers

    for l in range(num_layers):                   # static unroll; L is small here
        # ---- slice this layer's parameters straight from the packed refs ----
        wkv = wkv_ref[l]                          # (2*Hh, 2*H): [[Wk,Wv1],[0,Wv2]]
        bkv = bkv_ref[l]                          # (1, 2*H):    [bk | bv1+bv2]
        wq = whh_ref[l, 0 * H:1 * H, :]
        w1 = whh_ref[l, 1 * H:2 * H, :]
        wd = whh_ref[l, 2 * H:3 * H, :]
        w2 = whh_ref[l, 3 * H:4 * H, :]
        bq, g1, be1 = vec_ref[l, 0:1, :], vec_ref[l, 1:2, :], vec_ref[l, 2:3, :]
        g2, be2 = vec_ref[l, 3:4, :], vec_ref[l, 4:5, :]
        b1, bd, b2 = vec_ref[l, 5:6, :], vec_ref[l, 6:7, :], vec_ref[l, 7:8, :]

        # ---- self-attention (message-passing) block --------------------------
        x = layer_norm(ego, g1, be1)                       # norm1(ego)
        q = dot(x, wq) + bq                                # (NM, H)
        kv = dot(en, wkv) + bkv                            # fused k / v projection
        k, v = kv[:, :H], kv[:, H:]                        # (EM, H) each

        qg = dot(G, q)                                     # q[batch] gather  (EM, H)
        scores = dot(k * qg, Bh)                           # per-head sums, H lanes
        # TODO(synk): use a per-segment max (segment_max) instead of a single
        # global shift for robustness to extreme inter-segment score ranges.
        ex = jnp.exp(scores - jnp.max(scores))             # shift-invariant per segment
        denom = dot_t(G, ex)                               # per-(node,mode) sums (NM, H)
        # One divide per node row (use approx=True on v6e/v7x for the EUP path),
        # broadcast back with a 0/1 matmul; per-edge work is a VPU multiply.
        recip = pl.reciprocal(jnp.maximum(denom, jnp.finfo(jnp.float32).tiny))
        alpha = ex * dot(G, recip)                         # segment softmax (EM, H)
        msg = v * alpha                                    # weighted values
        ego = ego + dot_t(G, msg)                          # scatter-sum + residual

        # ---- FFN: norm2 -> linear1 -> relu -> "dropout"(Linear) -> linear2 ---
        y = layer_norm(ego, g2, be2)
        y = jnp.maximum(dot(y, w1) + b1, 0.0)
        y = dot(y, wd) + bd
        y = dot(y, w2) + b2
        ego = ego + y

    out_ref[...] = ego


# ---------------------------------------------------------------------------
# Parameter handling
# ---------------------------------------------------------------------------
def init_params(key, hidden_size, num_layers):
    """Per-layer parameter dicts; linear weights stored as (in, out)."""
    H, Hh = hidden_size, hidden_size // 2

    def w(k, shape, scale=0.1):
        return scale * jax.random.normal(k, shape, jnp.float32)

    layers = []
    for _ in range(num_layers):
        key, *ks = jax.random.split(key, 19)
        layers.append(dict(
            wk=w(ks[0], (Hh, H)),  bk=w(ks[1], (H,)),
            wv1=w(ks[2], (Hh, H)), bv1=w(ks[3], (H,)),
            wv2=w(ks[4], (Hh, H)), bv2=w(ks[5], (H,)),
            wq=w(ks[6], (H, H)),   bq=w(ks[7], (H,)),
            g1=1.0 + w(ks[8], (H,)),  be1=w(ks[9], (H,)),
            g2=1.0 + w(ks[10], (H,)), be2=w(ks[11], (H,)),
            w1=w(ks[12], (H, H)),  b1=w(ks[13], (H,)),
            wd=w(ks[14], (H, H)),  bd=w(ks[15], (H,)),
            w2=w(ks[16], (H, H)),  b2=w(ks[17], (H,)),
        ))
    return layers


def pack_params(layers):
    """Pack per-layer params into 4 stacked tensors (fused k/v projection)."""
    H = layers[0]["wq"].shape[0]
    Hh = layers[0]["wk"].shape[0]
    wkv, bkv, whh, vecs = [], [], [], []
    for p in layers:
        top = jnp.concatenate([p["wk"], p["wv1"]], axis=1)                # (Hh, 2H)
        bot = jnp.concatenate([jnp.zeros((Hh, H), jnp.float32),
                               p["wv2"]], axis=1)                         # (Hh, 2H)
        wkv.append(jnp.concatenate([top, bot], axis=0))                   # (2Hh, 2H)
        bkv.append(jnp.concatenate([p["bk"], p["bv1"] + p["bv2"]])[None]) # (1, 2H)
        whh.append(jnp.concatenate([p["wq"], p["w1"], p["wd"], p["w2"]],
                                   axis=0))                               # (4H, H)
        vecs.append(jnp.stack([p["bq"], p["g1"], p["be1"], p["g2"],
                               p["be2"], p["b1"], p["bd"], p["b2"]]))     # (8, H)
    return (jnp.stack(wkv), jnp.stack(bkv), jnp.stack(whh), jnp.stack(vecs))


# ---------------------------------------------------------------------------
# Wrapper
# ---------------------------------------------------------------------------
def multi_mode_encoder(ego_feature, edge_feat, node_feat, batch, layers, *,
                       num_heads):
    """ego_feature: (N, M, H), edge/node_feat: (E, M, H//2), batch: (E,) int32."""
    N, M, H = ego_feature.shape
    E, M2, Hh = edge_feat.shape
    assert M2 == M and Hh == H // 2 and node_feat.shape == (E, M, Hh)
    assert H % num_heads == 0
    hd = H // num_heads
    NM, EM = N * M, E * M

    wkv, bkv, whh, vecs = pack_params(layers)

    ego_flat = ego_feature.reshape(NM, H).astype(jnp.float32)
    en_flat = jnp.concatenate(
        [edge_feat.reshape(EM, Hh), node_feat.reshape(EM, Hh)],
        axis=1).astype(jnp.float32)                                   # (EM, 2*Hh)

    # Dense edge -> (node, mode) one-hot assignment matrix:
    #   G[e*M+m, n*M+m'] = 1 iff batch[e] == n and m == m'.
    # Exactly 0/1 -> stored bf16 (lossless, half the DMA/VMEM); cast in-kernel.
    onehot = (batch[:, None] == jnp.arange(N)[None, :]).astype(jnp.float32)
    eye_m = jnp.eye(M, dtype=jnp.float32)
    G = jnp.einsum("en,ij->einj", onehot, eye_m).reshape(EM, NM)
    G = G.astype(jnp.bfloat16)

    # Head block-diagonal ones: Bh[d, d'] = 1 iff d and d' belong to the same
    # head.  dot(k*qg, Bh) sums per head AND broadcasts to full lane width H.
    head_id = jnp.arange(H) // hd
    Bh = (head_id[:, None] == head_id[None, :]).astype(jnp.float32)   # (H, H)

    vmem = pl.BlockSpec(memory_space=pltpu.MemorySpace.VMEM)
    out = pl.pallas_call(
        _mme_kernel,
        out_shape=jax.ShapeDtypeStruct((NM, H), jnp.float32),
        # Gridless call: every operand gets exactly ONE VMEM buffer (no
        # pipeline double-buffering), weights are fully resident, and the
        # layer recurrence is an in-kernel loop (no per-layer HBM round trips,
        # no per-grid-step overhead).
        in_specs=[vmem] * 8,
        out_specs=vmem,
        compiler_params=pltpu.CompilerParams(
            vmem_limit_bytes=32 * 1024 * 1024),
    )(ego_flat, en_flat, G, Bh, wkv, bkv, whh, vecs)

    return out.reshape(N, M, H)


# ---------------------------------------------------------------------------
# Plain-JAX reference (mirrors the PyTorch forward, incl. torch_geometric
# segment softmax / scatter-sum semantics).
# ---------------------------------------------------------------------------
def multi_mode_encoder_ref(ego, edge, node, batch, layers, *, num_heads):
    N, M, H = ego.shape
    E = edge.shape[0]
    nh, hd = num_heads, H // num_heads

    def layer_norm(x, g, b):
        mu = jnp.mean(x, axis=-1, keepdims=True)
        var = jnp.mean(jnp.square(x - mu), axis=-1, keepdims=True)
        return (x - mu) * jax.lax.rsqrt(var + LN_EPS) * g + b

    for p in layers:
        x = layer_norm(ego, p["g1"], p["be1"])
        q = (x @ p["wq"] + p["bq"]).reshape(N, M, nh, hd)
        k = (edge @ p["wk"] + p["bk"]).reshape(E, M, nh, hd)
        v1 = (edge @ p["wv1"] + p["bv1"]).reshape(E, M, nh, hd)
        v2 = (node @ p["wv2"] + p["bv2"]).reshape(E, M, nh, hd)
        v = v1 + v2
        scores = (k * q[batch]).sum(-1)                      # (E, M, nh)
        smax = jax.ops.segment_max(scores, batch, num_segments=N)
        ex = jnp.exp(scores - smax[batch])
        ssum = jax.ops.segment_sum(ex, batch, num_segments=N)
        alpha = ex / ssum[batch]
        msg = (v * alpha[..., None]).reshape(E, M, H)
        ego = ego + jax.ops.segment_sum(msg, batch, num_segments=N)
        y = layer_norm(ego, p["g2"], p["be2"])
        y = jnp.maximum(y @ p["w1"] + p["b1"], 0.0)
        y = y @ p["wd"] + p["bd"]
        y = y @ p["w2"] + p["b2"]
        ego = ego + y
    return ego


if __name__ == "__main__":
    hidden_dim = 64
    num_layers = 2
    num_modes = 6
    num_heads = 8
    N = 8      # number of ego nodes
    E = 20     # number of graph edges (neighbor entries)

    key = jax.random.PRNGKey(0)
    k_ego, k_edge, k_node, k_batch, k_par = jax.random.split(key, 5)
    ego = jax.random.normal(k_ego, (N, num_modes, hidden_dim), jnp.float32)
    edge = jax.random.normal(k_edge, (E, num_modes, hidden_dim // 2), jnp.float32)
    node = jax.random.normal(k_node, (E, num_modes, hidden_dim // 2), jnp.float32)
    # Arbitrary (unsorted) edge->node assignment; every node has >= 1 edge.
    batch = jnp.concatenate([
        jnp.arange(N, dtype=jnp.int32),
        jax.random.randint(k_batch, (E - N,), 0, N, dtype=jnp.int32)])

    layers = init_params(k_par, hidden_dim, num_layers)

    out = multi_mode_encoder(ego, edge, node, batch, layers, num_heads=num_heads)
    out = jax.block_until_ready(out)

    with jax.default_matmul_precision("highest"):
        ref = multi_mode_encoder_ref(ego, edge, node, batch, layers,
                                     num_heads=num_heads)
        ref = jax.block_until_ready(ref)

    assert out.shape == (N, num_modes, hidden_dim)
    max_err = float(jnp.max(jnp.abs(out - ref)))
    assert max_err < 1e-3, f"max |err| = {max_err}"
    print("KERNEL_OK")
</pallas_src>

<mosaic_0001>
module attributes {stable_mosaic.version = 11 : i64} {
  func.func @_mme_kernel(%arg0: memref<48x64xf32, #tpu.memory_space<vmem>>, %arg1: memref<120x64xf32, #tpu.memory_space<vmem>>, %arg2: memref<120x48xbf16, #tpu.memory_space<vmem>>, %arg3: memref<64x64xf32, #tpu.memory_space<vmem>>, %arg4: memref<2x64x128xf32, #tpu.memory_space<vmem>>, %arg5: memref<2x1x128xf32, #tpu.memory_space<vmem>>, %arg6: memref<2x256x64xf32, #tpu.memory_space<vmem>>, %arg7: memref<2x8x64xf32, #tpu.memory_space<vmem>>, %arg8: memref<48x64xf32, #tpu.memory_space<vmem>>) attributes {dimension_semantics = [], scalar_prefetch = 0 : i64, scratch_operands = 0 : i64, tpu.core_type = #tpu.core_type<tc>} {
    %c0 = arith.constant 0 : index
    %c0_0 = arith.constant 0 : index
    %0 = vector.load %arg1[%c0, %c0_0] : memref<120x64xf32, #tpu.memory_space<vmem>>, vector<120x64xf32>
    %c0_1 = arith.constant 0 : index
    %c0_2 = arith.constant 0 : index
    %1 = vector.load %arg2[%c0_1, %c0_2] : memref<120x48xbf16, #tpu.memory_space<vmem>>, vector<120x48xbf16>
    %2 = arith.extf %1 : vector<120x48xbf16> to vector<120x48xf32>
    %c0_3 = arith.constant 0 : index
    %c0_4 = arith.constant 0 : index
    %3 = vector.load %arg3[%c0_3, %c0_4] : memref<64x64xf32, #tpu.memory_space<vmem>>, vector<64x64xf32>
    %c0_5 = arith.constant 0 : index
    %c0_6 = arith.constant 0 : index
    %4 = vector.load %arg0[%c0_5, %c0_6] : memref<48x64xf32, #tpu.memory_space<vmem>>, vector<48x64xf32>
    %c0_7 = arith.constant 0 : index
    %c0_8 = arith.constant 0 : index
    %c0_9 = arith.constant 0 : index
    %5 = vector.load %arg4[%c0_7, %c0_8, %c0_9] : memref<2x64x128xf32, #tpu.memory_space<vmem>>, vector<1x64x128xf32>
    %6 = vector.shape_cast %5 : vector<1x64x128xf32> to vector<64x128xf32>
    %c0_10 = arith.constant 0 : index
    %c0_11 = arith.constant 0 : index
    %c0_12 = arith.constant 0 : index
    %7 = vector.load %arg5[%c0_10, %c0_11, %c0_12] : memref<2x1x128xf32, #tpu.memory_space<vmem>>, vector<1x1x128xf32>
    %8 = vector.shape_cast %7 : vector<1x1x128xf32> to vector<1x128xf32>
    %c0_13 = arith.constant 0 : index
    %c0_14 = arith.constant 0 : index
    %c0_15 = arith.constant 0 : index
    %9 = vector.load %arg6[%c0_13, %c0_14, %c0_15] : memref<2x256x64xf32, #tpu.memory_space<vmem>>, vector<1x64x64xf32>
    %10 = vector.shape_cast %9 : vector<1x64x64xf32> to vector<64x64xf32>
    %c0_16 = arith.constant 0 : index
    %c64 = arith.constant 64 : index
    %c0_17 = arith.constant 0 : index
    %11 = vector.load %arg6[%c0_16, %c64, %c0_17] : memref<2x256x64xf32, #tpu.memory_space<vmem>>, vector<1x64x64xf32>
    %12 = vector.shape_cast %11 : vector<1x64x64xf32> to vector<64x64xf32>
    %c0_18 = arith.constant 0 : index
    %c128 = arith.constant 128 : index
    %c0_19 = arith.constant 0 : index
    %13 = vector.load %arg6[%c0_18, %c128, %c0_19] : memref<2x256x64xf32, #tpu.memory_space<vmem>>, vector<1x64x64xf32>
    %14 = vector.shape_cast %13 : vector<1x64x64xf32> to vector<64x64xf32>
    %c0_20 = arith.constant 0 : index
    %c192 = arith.constant 192 : index
    %c0_21 = arith.constant 0 : index
    %15 = vector.load %arg6[%c0_20, %c192, %c0_21] : memref<2x256x64xf32, #tpu.memory_space<vmem>>, vector<1x64x64xf32>
    %16 = vector.shape_cast %15 : vector<1x64x64xf32> to vector<64x64xf32>
    %c0_22 = arith.constant 0 : index
    %c0_23 = arith.constant 0 : index
    %c0_24 = arith.constant 0 : index
    %17 = vector.load %arg7[%c0_22, %c0_23, %c0_24] : memref<2x8x64xf32, #tpu.memory_space<vmem>>, vector<1x1x64xf32>
    %18 = vector.shape_cast %17 : vector<1x1x64xf32> to vector<1x64xf32>
    %c0_25 = arith.constant 0 : index
    %c1 = arith.constant 1 : index
    %c0_26 = arith.constant 0 : index
    %19 = vector.load %arg7[%c0_25, %c1, %c0_26] : memref<2x8x64xf32, #tpu.memory_space<vmem>>, vector<1x1x64xf32>
    %20 = vector.shape_cast %19 : vector<1x1x64xf32> to vector<1x64xf32>
    %c0_27 = arith.constant 0 : index
    %c2 = arith.constant 2 : index
    %c0_28 = arith.constant 0 : index
    %21 = vector.load %arg7[%c0_27, %c2, %c0_28] : memref<2x8x64xf32, #tpu.memory_space<vmem>>, vector<1x1x64xf32>
    %22 = vector.shape_cast %21 : vector<1x1x64xf32> to vector<1x64xf32>
    %c0_29 = arith.constant 0 : index
    %c3 = arith.constant 3 : index
    %c0_30 = arith.constant 0 : index
    %23 = vector.load %arg7[%c0_29, %c3, %c0_30] : memref<2x8x64xf32, #tpu.memory_space<vmem>>, vector<1x1x64xf32>
    %24 = vector.shape_cast %23 : vector<1x1x64xf32> to vector<1x64xf32>
    %c0_31 = arith.constant 0 : index
    %c4 = arith.constant 4 : index
    %c0_32 = arith.constant 0 : index
    %25 = vector.load %arg7[%c0_31, %c4, %c0_32] : memref<2x8x64xf32, #tpu.memory_space<vmem>>, vector<1x1x64xf32>
    %26 = vector.shape_cast %25 : vector<1x1x64xf32> to vector<1x64xf32>
    %c0_33 = arith.constant 0 : index
    %c5 = arith.constant 5 : index
    %c0_34 = arith.constant 0 : index
    %27 = vector.load %arg7[%c0_33, %c5, %c0_34] : memref<2x8x64xf32, #tpu.memory_space<vmem>>, vector<1x1x64xf32>
    %28 = vector.shape_cast %27 : vector<1x1x64xf32> to vector<1x64xf32>
    %c0_35 = arith.constant 0 : index
    %c6 = arith.constant 6 : index
    %c0_36 = arith.constant 0 : index
    %29 = vector.load %arg7[%c0_35, %c6, %c0_36] : memref<2x8x64xf32, #tpu.memory_space<vmem>>, vector<1x1x64xf32>
    %30 = vector.shape_cast %29 : vector<1x1x64xf32> to vector<1x64xf32>
    %c0_37 = arith.constant 0 : index
    %c7 = arith.constant 7 : index
    %c0_38 = arith.constant 0 : index
    %31 = vector.load %arg7[%c0_37, %c7, %c0_38] : memref<2x8x64xf32, #tpu.memory_space<vmem>>, vector<1x1x64xf32>
    %32 = vector.shape_cast %31 : vector<1x1x64xf32> to vector<1x64xf32>
    %cst = arith.constant dense<0.000000e+00> : vector<48xf32>
    %33 = vector.multi_reduction <add>, %4, %cst [1] : vector<48x64xf32> to vector<48xf32>
    %34 = vector.shape_cast %33 : vector<48xf32> to vector<48x1xf32>
    %cst_39 = arith.constant 6.400000e+01 : f32
    %35 = vector.broadcast %cst_39 : f32 to vector<48x1xf32>
    %36 = arith.divf %34, %35 : vector<48x1xf32>
    %37 = vector.broadcast %36 : vector<48x1xf32> to vector<48x64xf32>
    %38 = arith.subf %4, %37 : vector<48x64xf32>
    %39 = arith.mulf %38, %38 : vector<48x64xf32>
    %cst_40 = arith.constant dense<0.000000e+00> : vector<48xf32>
    %40 = vector.multi_reduction <add>, %39, %cst_40 [1] : vector<48x64xf32> to vector<48xf32>
    %41 = vector.shape_cast %40 : vector<48xf32> to vector<48x1xf32>
    %cst_41 = arith.constant 6.400000e+01 : f32
    %42 = vector.broadcast %cst_41 : f32 to vector<48x1xf32>
    %43 = arith.divf %41, %42 : vector<48x1xf32>
    %44 = vector.broadcast %36 : vector<48x1xf32> to vector<48x64xf32>
    %45 = arith.subf %4, %44 : vector<48x64xf32>
    %cst_42 = arith.constant 9.99999974E-6 : f32
    %46 = vector.broadcast %cst_42 : f32 to vector<48x1xf32>
    %47 = arith.addf %43, %46 : vector<48x1xf32>
    %48 = math.rsqrt %47 : vector<48x1xf32>
    %49 = vector.broadcast %48 : vector<48x1xf32> to vector<48x64xf32>
    %50 = arith.mulf %45, %49 : vector<48x64xf32>
    %51 = vector.broadcast %20 : vector<1x64xf32> to vector<48x64xf32>
    %52 = arith.mulf %50, %51 : vector<48x64xf32>
    %53 = vector.broadcast %22 : vector<1x64xf32> to vector<48x64xf32>
    %54 = arith.addf %52, %53 : vector<48x64xf32>
    %cst_43 = arith.constant dense<0.000000e+00> : vector<48x64xf32>
    %55 = tpu.matmul %54, %10, %cst_43 {dimension_numbers = #tpu.dot_dimension_numbers<[1], [0], [0], [1], [0, 0, 1, 1], [], []>} : vector<48x64xf32>, vector<64x64xf32>, vector<48x64xf32> -> vector<48x64xf32>
    %56 = vector.broadcast %18 : vector<1x64xf32> to vector<48x64xf32>
    %57 = arith.addf %55, %56 : vector<48x64xf32>
    %cst_44 = arith.constant dense<0.000000e+00> : vector<120x128xf32>
    %58 = tpu.matmul %0, %6, %cst_44 {dimension_numbers = #tpu.dot_dimension_numbers<[1], [0], [0], [1], [0, 0, 1, 1], [], []>} : vector<120x64xf32>, vector<64x128xf32>, vector<120x128xf32> -> vector<120x128xf32>
    %59 = vector.broadcast %8 : vector<1x128xf32> to vector<120x128xf32>
    %60 = arith.addf %58, %59 : vector<120x128xf32>
    %61 = vector.extract_strided_slice %60 {offsets = [0, 0], sizes = [120, 64], strides = [1, 1]} : vector<120x128xf32> to vector<120x64xf32>
    %62 = vector.extract_strided_slice %60 {offsets = [0, 64], sizes = [120, 64], strides = [1, 1]} : vector<120x128xf32> to vector<120x64xf32>
    %cst_45 = arith.constant dense<0.000000e+00> : vector<120x64xf32>
    %63 = tpu.matmul %2, %57, %cst_45 {dimension_numbers = #tpu.dot_dimension_numbers<[1], [0], [0], [1], [0, 0, 1, 1], [], []>} : vector<120x48xf32>, vector<48x64xf32>, vector<120x64xf32> -> vector<120x64xf32>
    %64 = arith.mulf %61, %63 : vector<120x64xf32>
    %cst_46 = arith.constant dense<0.000000e+00> : vector<120x64xf32>
    %65 = tpu.matmul %64, %3, %cst_46 {dimension_numbers = #tpu.dot_dimension_numbers<[1], [0], [0], [1], [0, 0, 1, 1], [], []>} : vector<120x64xf32>, vector<64x64xf32>, vector<120x64xf32> -> vector<120x64xf32>
    %66 = vector.shape_cast %65 : vector<120x64xf32> to vector<1x120x64xf32>
    %cst_47 = arith.constant dense<0xFF800000> : vector<1xf32>
    %67 = vector.multi_reduction <maximumf>, %66, %cst_47 [1, 2] : vector<1x120x64xf32> to vector<1xf32>
    %68 = vector.shape_cast %67 : vector<1xf32> to vector<1x1x1xf32>
    %69 = vector.extract %68[0, 0, 0] : f32 from vector<1x1x1xf32>
    %70 = vector.broadcast %69 : f32 to vector<120x64xf32>
    %71 = arith.subf %65, %70 : vector<120x64xf32>
    %72 = math.exp %71 : vector<120x64xf32>
    %cst_48 = arith.constant dense<0.000000e+00> : vector<48x64xf32>
    %73 = tpu.matmul %2, %72, %cst_48 {dimension_numbers = #tpu.dot_dimension_numbers<[0], [0], [1], [1], [0, 1, 1, 1], [], []>} : vector<120x48xf32>, vector<120x64xf32>, vector<48x64xf32> -> vector<48x64xf32>
    %cst_49 = arith.constant 1.17549435E-38 : f32
    %74 = vector.broadcast %cst_49 : f32 to vector<48x64xf32>
    %75 = arith.maximumf %73, %74 : vector<48x64xf32>
    %76 = tpu.reciprocal %75 : vector<48x64xf32> -> vector<48x64xf32>
    %cst_50 = arith.constant dense<0.000000e+00> : vector<120x64xf32>
    %77 = tpu.matmul %2, %76, %cst_50 {dimension_numbers = #tpu.dot_dimension_numbers<[1], [0], [0], [1], [0, 0, 1, 1], [], []>} : vector<120x48xf32>, vector<48x64xf32>, vector<120x64xf32> -> vector<120x64xf32>
    %78 = arith.mulf %72, %77 : vector<120x64xf32>
    %79 = arith.mulf %62, %78 : vector<120x64xf32>
    %cst_51 = arith.constant dense<0.000000e+00> : vector<48x64xf32>
    %80 = tpu.matmul %2, %79, %cst_51 {dimension_numbers = #tpu.dot_dimension_numbers<[0], [0], [1], [1], [0, 1, 1, 1], [], []>} : vector<120x48xf32>, vector<120x64xf32>, vector<48x64xf32> -> vector<48x64xf32>
    %81 = arith.addf %4, %80 : vector<48x64xf32>
    %cst_52 = arith.constant dense<0.000000e+00> : vector<48xf32>
    %82 = vector.multi_reduction <add>, %81, %cst_52 [1] : vector<48x64xf32> to vector<48xf32>
    %83 = vector.shape_cast %82 : vector<48xf32> to vector<48x1xf32>
    %cst_53 = arith.constant 6.400000e+01 : f32
    %84 = vector.broadcast %cst_53 : f32 to vector<48x1xf32>
    %85 = arith.divf %83, %84 : vector<48x1xf32>
    %86 = vector.broadcast %85 : vector<48x1xf32> to vector<48x64xf32>
    %87 = arith.subf %81, %86 : vector<48x64xf32>
    %88 = arith.mulf %87, %87 : vector<48x64xf32>
    %cst_54 = arith.constant dense<0.000000e+00> : vector<48xf32>
    %89 = vector.multi_reduction <add>, %88, %cst_54 [1] : vector<48x64xf32> to vector<48xf32>
    %90 = vector.shape_cast %89 : vector<48xf32> to vector<48x1xf32>
    %cst_55 = arith.constant 6.400000e+01 : f32
    %91 = vector.broadcast %cst_55 : f32 to vector<48x1xf32>
    %92 = arith.divf %90, %91 : vector<48x1xf32>
    %93 = vector.broadcast %85 : vector<48x1xf32> to vector<48x64xf32>
    %94 = arith.subf %81, %93 : vector<48x64xf32>
    %cst_56 = arith.constant 9.99999974E-6 : f32
    %95 = vector.broadcast %cst_56 : f32 to vector<48x1xf32>
    %96 = arith.addf %92, %95 : vector<48x1xf32>
    %97 = math.rsqrt %96 : vector<48x1xf32>
    %98 = vector.broadcast %97 : vector<48x1xf32> to vector<48x64xf32>
    %99 = arith.mulf %94, %98 : vector<48x64xf32>
    %100 = vector.broadcast %24 : vector<1x64xf32> to vector<48x64xf32>
    %101 = arith.mulf %99, %100 : vector<48x64xf32>
    %102 = vector.broadcast %26 : vector<1x64xf32> to vector<48x64xf32>
    %103 = arith.addf %101, %102 : vector<48x64xf32>
    %cst_57 = arith.constant dense<0.000000e+00> : vector<48x64xf32>
    %104 = tpu.matmul %103, %12, %cst_57 {dimension_numbers = #tpu.dot_dimension_numbers<[1], [0], [0], [1], [0, 0, 1, 1], [], []>} : vector<48x64xf32>, vector<64x64xf32>, vector<48x64xf32> -> vector<48x64xf32>
    %105 = vector.broadcast %28 : vector<1x64xf32> to vector<48x64xf32>
    %106 = arith.addf %104, %105 : vector<48x64xf32>
    %cst_58 = arith.constant 0.000000e+00 : f32
    %107 = vector.broadcast %cst_58 : f32 to vector<48x64xf32>
    %108 = arith.maximumf %106, %107 : vector<48x64xf32>
    %cst_59 = arith.constant dense<0.000000e+00> : vector<48x64xf32>
    %109 = tpu.matmul %108, %14, %cst_59 {dimension_numbers = #tpu.dot_dimension_numbers<[1], [0], [0], [1], [0, 0, 1, 1], [], []>} : vector<48x64xf32>, vector<64x64xf32>, vector<48x64xf32> -> vector<48x64xf32>
    %110 = vector.broadcast %30 : vector<1x64xf32> to vector<48x64xf32>
    %111 = arith.addf %109, %110 : vector<48x64xf32>
    %cst_60 = arith.constant dense<0.000000e+00> : vector<48x64xf32>
    %112 = tpu.matmul %111, %16, %cst_60 {dimension_numbers = #tpu.dot_dimension_numbers<[1], [0], [0], [1], [0, 0, 1, 1], [], []>} : vector<48x64xf32>, vector<64x64xf32>, vector<48x64xf32> -> vector<48x64xf32>
    %113 = vector.broadcast %32 : vector<1x64xf32> to vector<48x64xf32>
    %114 = arith.addf %112, %113 : vector<48x64xf32>
    %115 = arith.addf %81, %114 : vector<48x64xf32>
    %c1_61 = arith.constant 1 : index
    %c0_62 = arith.constant 0 : index
    %c0_63 = arith.constant 0 : index
    %116 = vector.load %arg4[%c1_61, %c0_62, %c0_63] : memref<2x64x128xf32, #tpu.memory_space<vmem>>, vector<1x64x128xf32>
    %117 = vector.shape_cast %116 : vector<1x64x128xf32> to vector<64x128xf32>
    %c1_64 = arith.constant 1 : index
    %c0_65 = arith.constant 0 : index
    %c0_66 = arith.constant 0 : index
    %118 = vector.load %arg5[%c1_64, %c0_65, %c0_66] : memref<2x1x128xf32, #tpu.memory_space<vmem>>, vector<1x1x128xf32>
    %119 = vector.shape_cast %118 : vector<1x1x128xf32> to vector<1x128xf32>
    %c1_67 = arith.constant 1 : index
    %c0_68 = arith.constant 0 : index
    %c0_69 = arith.constant 0 : index
    %120 = vector.load %arg6[%c1_67, %c0_68, %c0_69] : memref<2x256x64xf32, #tpu.memory_space<vmem>>, vector<1x64x64xf32>
    %121 = vector.shape_cast %120 : vector<1x64x64xf32> to vector<64x64xf32>
    %c1_70 = arith.constant 1 : index
    %c64_71 = arith.constant 64 : index
    %c0_72 = arith.constant 0 : index
    %122 = vector.load %arg6[%c1_70, %c64_71, %c0_72] : memref<2x256x64xf32, #tpu.memory_space<vmem>>, vector<1x64x64xf32>
    %123 = vector.shape_cast %122 : vector<1x64x64xf32> to vector<64x64xf32>
    %c1_73 = arith.constant 1 : index
    %c128_74 = arith.constant 128 : index
    %c0_75 = arith.constant 0 : index
    %124 = vector.load %arg6[%c1_73, %c128_74, %c0_75] : memref<2x256x64xf32, #tpu.memory_space<vmem>>, vector<1x64x64xf32>
    %125 = vector.shape_cast %124 : vector<1x64x64xf32> to vector<64x64xf32>
    %c1_76 = arith.constant 1 : index
    %c192_77 = arith.constant 192 : index
    %c0_78 = arith.constant 0 : index
    %126 = vector.load %arg6[%c1_76, %c192_77, %c0_78] : memref<2x256x64xf32, #tpu.memory_space<vmem>>, vector<1x64x64xf32>
    %127 = vector.shape_cast %126 : vector<1x64x64xf32> to vector<64x64xf32>
    %c1_79 = arith.constant 1 : index
    %c0_80 = arith.constant 0 : index
    %c0_81 = arith.constant 0 : index
    %128 = vector.load %arg7[%c1_79, %c0_80, %c0_81] : memref<2x8x64xf32, #tpu.memory_space<vmem>>, vector<1x1x64xf32>
    %129 = vector.shape_cast %128 : vector<1x1x64xf32> to vector<1x64xf32>
    %c1_82 = arith.constant 1 : index
    %c1_83 = arith.constant 1 : index
    %c0_84 = arith.constant 0 : index
    %130 = vector.load %arg7[%c1_82, %c1_83, %c0_84] : memref<2x8x64xf32, #tpu.memory_space<vmem>>, vector<1x1x64xf32>
    %131 = vector.shape_cast %130 : vector<1x1x64xf32> to vector<1x64xf32>
    %c1_85 = arith.constant 1 : index
    %c2_86 = arith.constant 2 : index
    %c0_87 = arith.constant 0 : index
    %132 = vector.load %arg7[%c1_85, %c2_86, %c0_87] : memref<2x8x64xf32, #tpu.memory_space<vmem>>, vector<1x1x64xf32>
    %133 = vector.shape_cast %132 : vector<1x1x64xf32> to vector<1x64xf32>
    %c1_88 = arith.constant 1 : index
    %c3_89 = arith.constant 3 : index
    %c0_90 = arith.constant 0 : index
    %134 = vector.load %arg7[%c1_88, %c3_89, %c0_90] : memref<2x8x64xf32, #tpu.memory_space<vmem>>, vector<1x1x64xf32>
    %135 = vector.shape_cast %134 : vector<1x1x64xf32> to vector<1x64xf32>
    %c1_91 = arith.constant 1 : index
    %c4_92 = arith.constant 4 : index
    %c0_93 = arith.constant 0 : index
    %136 = vector.load %arg7[%c1_91, %c4_92, %c0_93] : memref<2x8x64xf32, #tpu.memory_space<vmem>>, vector<1x1x64xf32>
    %137 = vector.shape_cast %136 : vector<1x1x64xf32> to vector<1x64xf32>
    %c1_94 = arith.constant 1 : index
    %c5_95 = arith.constant 5 : index
    %c0_96 = arith.constant 0 : index
    %138 = vector.load %arg7[%c1_94, %c5_95, %c0_96] : memref<2x8x64xf32, #tpu.memory_space<vmem>>, vector<1x1x64xf32>
    %139 = vector.shape_cast %138 : vector<1x1x64xf32> to vector<1x64xf32>
    %c1_97 = arith.constant 1 : index
    %c6_98 = arith.constant 6 : index
    %c0_99 = arith.constant 0 : index
    %140 = vector.load %arg7[%c1_97, %c6_98, %c0_99] : memref<2x8x64xf32, #tpu.memory_space<vmem>>, vector<1x1x64xf32>
    %141 = vector.shape_cast %140 : vector<1x1x64xf32> to vector<1x64xf32>
    %c1_100 = arith.constant 1 : index
    %c7_101 = arith.constant 7 : index
    %c0_102 = arith.constant 0 : index
    %142 = vector.load %arg7[%c1_100, %c7_101, %c0_102] : memref<2x8x64xf32, #tpu.memory_space<vmem>>, vector<1x1x64xf32>
    %143 = vector.shape_cast %142 : vector<1x1x64xf32> to vector<1x64xf32>
    %cst_103 = arith.constant dense<0.000000e+00> : vector<48xf32>
    %144 = vector.multi_reduction <add>, %115, %cst_103 [1] : vector<48x64xf32> to vector<48xf32>
    %145 = vector.shape_cast %144 : vector<48xf32> to vector<48x1xf32>
    %cst_104 = arith.constant 6.400000e+01 : f32
    %146 = vector.broadcast %cst_104 : f32 to vector<48x1xf32>
    %147 = arith.divf %145, %146 : vector<48x1xf32>
    %148 = vector.broadcast %147 : vector<48x1xf32> to vector<48x64xf32>
    %149 = arith.subf %115, %148 : vector<48x64xf32>
    %150 = arith.mulf %149, %149 : vector<48x64xf32>
    %cst_105 = arith.constant dense<0.000000e+00> : vector<48xf32>
    %151 = vector.multi_reduction <add>, %150, %cst_105 [1] : vector<48x64xf32> to vector<48xf32>
    %152 = vector.shape_cast %151 : vector<48xf32> to vector<48x1xf32>
    %cst_106 = arith.constant 6.400000e+01 : f32
    %153 = vector.broadcast %cst_106 : f32 to vector<48x1xf32>
    %154 = arith.divf %152, %153 : vector<48x1xf32>
    %155 = vector.broadcast %147 : vector<48x1xf32> to vector<48x64xf32>
    %156 = arith.subf %115, %155 : vector<48x64xf32>
    %cst_107 = arith.constant 9.99999974E-6 : f32
    %157 = vector.broadcast %cst_107 : f32 to vector<48x1xf32>
    %158 = arith.addf %154, %157 : vector<48x1xf32>
    %159 = math.rsqrt %158 : vector<48x1xf32>
    %160 = vector.broadcast %159 : vector<48x1xf32> to vector<48x64xf32>
    %161 = arith.mulf %156, %160 : vector<48x64xf32>
    %162 = vector.broadcast %131 : vector<1x64xf32> to vector<48x64xf32>
    %163 = arith.mulf %161, %162 : vector<48x64xf32>
    %164 = vector.broadcast %133 : vector<1x64xf32> to vector<48x64xf32>
    %165 = arith.addf %163, %164 : vector<48x64xf32>
    %cst_108 = arith.constant dense<0.000000e+00> : vector<48x64xf32>
    %166 = tpu.matmul %165, %121, %cst_108 {dimension_numbers = #tpu.dot_dimension_numbers<[1], [0], [0], [1], [0, 0, 1, 1], [], []>} : vector<48x64xf32>, vector<64x64xf32>, vector<48x64xf32> -> vector<48x64xf32>
    %167 = vector.broadcast %129 : vector<1x64xf32> to vector<48x64xf32>
    %168 = arith.addf %166, %167 : vector<48x64xf32>
    %cst_109 = arith.constant dense<0.000000e+00> : vector<120x128xf32>
    %169 = tpu.matmul %0, %117, %cst_109 {dimension_numbers = #tpu.dot_dimension_numbers<[1], [0], [0], [1], [0, 0, 1, 1], [], []>} : vector<120x64xf32>, vector<64x128xf32>, vector<120x128xf32> -> vector<120x128xf32>
    %170 = vector.broadcast %119 : vector<1x128xf32> to vector<120x128xf32>
    %171 = arith.addf %169, %170 : vector<120x128xf32>
    %172 = vector.extract_strided_slice %171 {offsets = [0, 0], sizes = [120, 64], strides = [1, 1]} : vector<120x128xf32> to vector<120x64xf32>
    %173 = vector.extract_strided_slice %171 {offsets = [0, 64], sizes = [120, 64], strides = [1, 1]} : vector<120x128xf32> to vector<120x64xf32>
    %cst_110 = arith.constant dense<0.000000e+00> : vector<120x64xf32>
    %174 = tpu.matmul %2, %168, %cst_110 {dimension_numbers = #tpu.dot_dimension_numbers<[1], [0], [0], [1], [0, 0, 1, 1], [], []>} : vector<120x48xf32>, vector<48x64xf32>, vector<120x64xf32> -> vector<120x64xf32>
    %175 = arith.mulf %172, %174 : vector<120x64xf32>
    %cst_111 = arith.constant dense<0.000000e+00> : vector<120x64xf32>
    %176 = tpu.matmul %175, %3, %cst_111 {dimension_numbers = #tpu.dot_dimension_numbers<[1], [0], [0], [1], [0, 0, 1, 1], [], []>} : vector<120x64xf32>, vector<64x64xf32>, vector<120x64xf32> -> vector<120x64xf32>
    %177 = vector.shape_cast %176 : vector<120x64xf32> to vector<1x120x64xf32>
    %cst_112 = arith.constant dense<0xFF800000> : vector<1xf32>
    %178 = vector.multi_reduction <maximumf>, %177, %cst_112 [1, 2] : vector<1x120x64xf32> to vector<1xf32>
    %179 = vector.shape_cast %178 : vector<1xf32> to vector<1x1x1xf32>
    %180 = vector.extract %179[0, 0, 0] : f32 from vector<1x1x1xf32>
    %181 = vector.broadcast %180 : f32 to vector<120x64xf32>
    %182 = arith.subf %176, %181 : vector<120x64xf32>
    %183 = math.exp %182 : vector<120x64xf32>
    %cst_113 = arith.constant dense<0.000000e+00> : vector<48x64xf32>
    %184 = tpu.matmul %2, %183, %cst_113 {dimension_numbers = #tpu.dot_dimension_numbers<[0], [0], [1], [1], [0, 1, 1, 1], [], []>} : vector<120x48xf32>, vector<120x64xf32>, vector<48x64xf32> -> vector<48x64xf32>
    %cst_114 = arith.constant 1.17549435E-38 : f32
    %185 = vector.broadcast %cst_114 : f32 to vector<48x64xf32>
    %186 = arith.maximumf %184, %185 : vector<48x64xf32>
    %187 = tpu.reciprocal %186 : vector<48x64xf32> -> vector<48x64xf32>
    %cst_115 = arith.constant dense<0.000000e+00> : vector<120x64xf32>
    %188 = tpu.matmul %2, %187, %cst_115 {dimension_numbers = #tpu.dot_dimension_numbers<[1], [0], [0], [1], [0, 0, 1, 1], [], []>} : vector<120x48xf32>, vector<48x64xf32>, vector<120x64xf32> -> vector<120x64xf32>
    %189 = arith.mulf %183, %188 : vector<120x64xf32>
    %190 = arith.mulf %173, %189 : vector<120x64xf32>
    %cst_116 = arith.constant dense<0.000000e+00> : vector<48x64xf32>
    %191 = tpu.matmul %2, %190, %cst_116 {dimension_numbers = #tpu.dot_dimension_numbers<[0], [0], [1], [1], [0, 1, 1, 1], [], []>} : vector<120x48xf32>, vector<120x64xf32>, vector<48x64xf32> -> vector<48x64xf32>
    %192 = arith.addf %115, %191 : vector<48x64xf32>
    %cst_117 = arith.constant dense<0.000000e+00> : vector<48xf32>
    %193 = vector.multi_reduction <add>, %192, %cst_117 [1] : vector<48x64xf32> to vector<48xf32>
    %194 = vector.shape_cast %193 : vector<48xf32> to vector<48x1xf32>
    %cst_118 = arith.constant 6.400000e+01 : f32
    %195 = vector.broadcast %cst_118 : f32 to vector<48x1xf32>
    %196 = arith.divf %194, %195 : vector<48x1xf32>
    %197 = vector.broadcast %196 : vector<48x1xf32> to vector<48x64xf32>
    %198 = arith.subf %192, %197 : vector<48x64xf32>
    %199 = arith.mulf %198, %198 : vector<48x64xf32>
    %cst_119 = arith.constant dense<0.000000e+00> : vector<48xf32>
    %200 = vector.multi_reduction <add>, %199, %cst_119 [1] : vector<48x64xf32> to vector<48xf32>
    %201 = vector.shape_cast %200 : vector<48xf32> to vector<48x1xf32>
    %cst_120 = arith.constant 6.400000e+01 : f32
    %202 = vector.broadcast %cst_120 : f32 to vector<48x1xf32>
    %203 = arith.divf %201, %202 : vector<48x1xf32>
    %204 = vector.broadcast %196 : vector<48x1xf32> to vector<48x64xf32>
    %205 = arith.subf %192, %204 : vector<48x64xf32>
    %cst_121 = arith.constant 9.99999974E-6 : f32
    %206 = vector.broadcast %cst_121 : f32 to vector<48x1xf32>
    %207 = arith.addf %203, %206 : vector<48x1xf32>
    %208 = math.rsqrt %207 : vector<48x1xf32>
    %209 = vector.broadcast %208 : vector<48x1xf32> to vector<48x64xf32>
    %210 = arith.mulf %205, %209 : vector<48x64xf32>
    %211 = vector.broadcast %135 : vector<1x64xf32> to vector<48x64xf32>
    %212 = arith.mulf %210, %211 : vector<48x64xf32>
    %213 = vector.broadcast %137 : vector<1x64xf32> to vector<48x64xf32>
    %214 = arith.addf %212, %213 : vector<48x64xf32>
    %cst_122 = arith.constant dense<0.000000e+00> : vector<48x64xf32>
    %215 = tpu.matmul %214, %123, %cst_122 {dimension_numbers = #tpu.dot_dimension_numbers<[1], [0], [0], [1], [0, 0, 1, 1], [], []>} : vector<48x64xf32>, vector<64x64xf32>, vector<48x64xf32> -> vector<48x64xf32>
    %216 = vector.broadcast %139 : vector<1x64xf32> to vector<48x64xf32>
    %217 = arith.addf %215, %216 : vector<48x64xf32>
    %cst_123 = arith.constant 0.000000e+00 : f32
    %218 = vector.broadcast %cst_123 : f32 to vector<48x64xf32>
    %219 = arith.maximumf %217, %218 : vector<48x64xf32>
    %cst_124 = arith.constant dense<0.000000e+00> : vector<48x64xf32>
    %220 = tpu.matmul %219, %125, %cst_124 {dimension_numbers = #tpu.dot_dimension_numbers<[1], [0], [0], [1], [0, 0, 1, 1], [], []>} : vector<48x64xf32>, vector<64x64xf32>, vector<48x64xf32> -> vector<48x64xf32>
    %221 = vector.broadcast %141 : vector<1x64xf32> to vector<48x64xf32>
    %222 = arith.addf %220, %221 : vector<48x64xf32>
    %cst_125 = arith.constant dense<0.000000e+00> : vector<48x64xf32>
    %223 = tpu.matmul %222, %127, %cst_125 {dimension_numbers = #tpu.dot_dimension_numbers<[1], [0], [0], [1], [0, 0, 1, 1], [], []>} : vector<48x64xf32>, vector<64x64xf32>, vector<48x64xf32> -> vector<48x64xf32>
    %224 = vector.broadcast %143 : vector<1x64xf32> to vector<48x64xf32>
    %225 = arith.addf %223, %224 : vector<48x64xf32>
    %226 = arith.addf %192, %225 : vector<48x64xf32>
    %c0_126 = arith.constant 0 : index
    %c0_127 = arith.constant 0 : index
    %227 = vector.load %arg8[%c0_126, %c0_127] : memref<48x64xf32, #tpu.memory_space<vmem>>, vector<48x64xf32>
    tpu.vector_store %arg8[%c0_126, %c0_127], %226 {strides = array<i32>} : memref<48x64xf32, #tpu.memory_space<vmem>>, vector<48x64xf32>,
    return
  }
}

</mosaic_0001>

<llo_original>
// kernel: tpu_custom_call.1
$region0: #{tpu_custom_call.1}
  #allocation0 [shape = 'u32[]', space=smem, size = 0x4, offset = 0x4, fixed_abs, tag = 'smem constant byte address 0x4 - core index']
  #allocation1 [shape = 'u32[144,128]{1,0:T(1,128)}', space=vmem, size = 0x12000, scoped, tag = 'internal scratch']
  %s0 = inlined_call_operand.vmem [shape: f32[48,64], index: 0, kind: input, shape index: {}]
  %s1 = inlined_call_operand.vmem [shape: f32[120,64], index: 1, kind: input, shape index: {}]
  %s2 = inlined_call_operand.vmem [shape: bf16[120,48], index: 2, kind: input, shape index: {}]
  %s3 = inlined_call_operand.vmem [shape: f32[64,64], index: 3, kind: input, shape index: {}]
  %s4 = inlined_call_operand.vmem [shape: f32[2,64,128], index: 4, kind: input, shape index: {}]
  %s5 = inlined_call_operand.vmem [shape: f32[2,1,128], index: 5, kind: input, shape index: {}]
  %s6 = inlined_call_operand.vmem [shape: f32[2,256,64], index: 6, kind: input, shape index: {}]
  %s7 = inlined_call_operand.vmem [shape: f32[2,8,64], index: 7, kind: input, shape index: {}]
  %s8 = inlined_call_operand.hbm [shape: f32[48,64], index: 8, kind: output, shape index: {}]
  %s9 = sld [smem:[#allocation0]]
  $region42: #{tpu_custom_call.1} parent=0
    _
  %s11 = ssub.s32 1, %s9
  %s12 = scalar_select 0, %s11, %s9
  $region1: #{tpu_custom_call.1} parent=0
    #allocation2 [shape = 'u8[24576]{0}', space=vmem, size = 0x6000, scoped, tag = 'output window, operand 0, single buffered']
    #allocation3 [shape = 's32[1]{0}', space=sflag, size = 0x4, scoped, tag = 'scoped memory for tpu_custom_call.1']
    %13 = vsyncpa [#allocation3], 0
    // Predicated region
    $region2: #{tpu_custom_call.1} parent=1 // pred_check
      _
    $region3: #{tpu_custom_call.1} parent=1 // pred_check_branch
      %15 = sbr.rel (0) target = $region5
    $region4: #{tpu_custom_call.1} parent=1 // pred_region
      _
    $region5: #{tpu_custom_call.1} parent=1 // pred_fallthru
      _
    // Predicated region
    $region6: #{tpu_custom_call.1} parent=1 // pred_check
      _
    $region7: #{tpu_custom_call.1} parent=1 // pred_check_branch
      %17 = sbr.rel (0) target = $region9
    $region8: #{tpu_custom_call.1} parent=1 // pred_region
      _
    $region9: #{tpu_custom_call.1} parent=1 // pred_fallthru
      _
    // Predicated region
    $region10: #{tpu_custom_call.1} parent=1 // pred_check
      _
    $region11: #{tpu_custom_call.1} parent=1 // pred_check_branch
      %19 = sbr.rel (0) target = $region13
    $region12: #{tpu_custom_call.1} parent=1 // pred_region
      _
    $region13: #{tpu_custom_call.1} parent=1 // pred_fallthru
      _
    // Predicated region
    $region14: #{tpu_custom_call.1} parent=1 // pred_check
      _
    $region15: #{tpu_custom_call.1} parent=1 // pred_check_branch
      %21 = sbr.rel (0) target = $region17
    $region16: #{tpu_custom_call.1} parent=1 // pred_region
      _
    $region17: #{tpu_custom_call.1} parent=1 // pred_fallthru
      _
    // Predicated region
    $region18: #{tpu_custom_call.1} parent=1 // pred_check
      _
    $region19: #{tpu_custom_call.1} parent=1 // pred_check_branch
      %23 = sbr.rel (0) target = $region21
    $region20: #{tpu_custom_call.1} parent=1 // pred_region
      _
    $region21: #{tpu_custom_call.1} parent=1 // pred_fallthru
      _
    // Predicated region
    $region22: #{tpu_custom_call.1} parent=1 // pred_check
      _
    $region23: #{tpu_custom_call.1} parent=1 // pred_check_branch
      %25 = sbr.rel (0) target = $region25
    $region24: #{tpu_custom_call.1} parent=1 // pred_region
      _
    $region25: #{tpu_custom_call.1} parent=1 // pred_fallthru
      _
    // Predicated region
    $region26: #{tpu_custom_call.1} parent=1 // pred_check
      _
    $region27: #{tpu_custom_call.1} parent=1 // pred_check_branch
      %27 = sbr.rel (0) target = $region29
    $region28: #{tpu_custom_call.1} parent=1 // pred_region
      _
    $region29: #{tpu_custom_call.1} parent=1 // pred_fallthru
      _
    // Predicated region
    $region30: #{tpu_custom_call.1} parent=1 // pred_check
      _
    $region31: #{tpu_custom_call.1} parent=1 // pred_check_branch
      %29 = sbr.rel (0) target = $region33
    $region32: #{tpu_custom_call.1} parent=1 // pred_region
      _
    $region33: #{tpu_custom_call.1} parent=1 // pred_fallthru
      _
    %v30 = vld [vmem:[%s1] sm:$0xff]
    %v31 = vld [vmem:[%s1 + $0x8] sm:$0xff]
    %v32 = vld [vmem:[%s1 + $0x10] sm:$0xff]
    %v33 = vld [vmem:[%s1 + $0x18] sm:$0xff]
    %v34 = vld [vmem:[%s1 + $0x20] sm:$0xff]
    %v35 = vld [vmem:[%s1 + $0x28] sm:$0xff]
    %v36 = vld [vmem:[%s1 + $0x30] sm:$0xff]
    %v37 = vld [vmem:[%s1 + $0x38] sm:$0xff]
    %v38 = vld [vmem:[%s1 + $0x40] sm:$0xff]
    %v39 = vld [vmem:[%s1 + $0x48] sm:$0xff]
    %v40 = vld [vmem:[%s1 + $0x50] sm:$0xff]
    %v41 = vld [vmem:[%s1 + $0x58] sm:$0xff]
    %v42 = vld [vmem:[%s1 + $0x60] sm:$0xff]
    %v43 = vld [vmem:[%s1 + $0x68] sm:$0xff]
    %v44 = vld [vmem:[%s1 + $0x70] sm:$0xff]
    %v45 = vld [vmem:[%s2] sm:$0xf]
    %v46 = vld [vmem:[%s2 + $0x4] sm:$0xf]
    %v47 = vld [vmem:[%s2 + $0x8] sm:$0xf]
    %v48 = vld [vmem:[%s2 + $0xc] sm:$0xf]
    %v49 = vld [vmem:[%s2 + $0x10] sm:$0xf]
    %v50 = vld [vmem:[%s2 + $0x14] sm:$0xf]
    %v51 = vld [vmem:[%s2 + $0x18] sm:$0xf]
    %v52 = vld [vmem:[%s2 + $0x1c] sm:$0xf]
    %v53 = vld [vmem:[%s2 + $0x20] sm:$0xf]
    %v54 = vld [vmem:[%s2 + $0x24] sm:$0xf]
    %v55 = vld [vmem:[%s2 + $0x28] sm:$0xf]
    %v56 = vld [vmem:[%s2 + $0x2c] sm:$0xf]
    %v57 = vld [vmem:[%s2 + $0x30] sm:$0xf]
    %v58 = vld [vmem:[%s2 + $0x34] sm:$0xf]
    %v59 = vld [vmem:[%s2 + $0x38] sm:$0xf]
    %v60 = vunpack.c.l.bf16 %v45
    %v61 = vunpack.c.l.bf16 %v46
    %v62 = vunpack.c.l.bf16 %v47
    %v63 = vunpack.c.l.bf16 %v48
    %v64 = vunpack.c.l.bf16 %v49
    %v65 = vunpack.c.l.bf16 %v50
    %v66 = vunpack.c.l.bf16 %v51
    %v67 = vunpack.c.l.bf16 %v52
    %v68 = vunpack.c.l.bf16 %v53
    %v69 = vunpack.c.l.bf16 %v54
    %v70 = vunpack.c.l.bf16 %v55
    %v71 = vunpack.c.l.bf16 %v56
    %v72 = vunpack.c.l.bf16 %v57
    %v73 = vunpack.c.l.bf16 %v58
    %v74 = vunpack.c.l.bf16 %v59
    %v75 = vld [vmem:[%s3] sm:$0xff]
    %v76 = vld [vmem:[%s3 + $0x8] sm:$0xff]
    %v77 = vld [vmem:[%s3 + $0x10] sm:$0xff]
    %v78 = vld [vmem:[%s3 + $0x18] sm:$0xff]
    %v79 = vld [vmem:[%s3 + $0x20] sm:$0xff]
    %v80 = vld [vmem:[%s3 + $0x28] sm:$0xff]
    %v81 = vld [vmem:[%s3 + $0x30] sm:$0xff]
    %v82 = vld [vmem:[%s3 + $0x38] sm:$0xff]
    %v83 = vld [vmem:[%s0] sm:$0xff]
    %v84 = vld [vmem:[%s0 + $0x8] sm:$0xff]
    %v85 = vld [vmem:[%s0 + $0x10] sm:$0xff]
    %v86 = vld [vmem:[%s0 + $0x18] sm:$0xff]
    %v87 = vld [vmem:[%s0 + $0x20] sm:$0xff]
    %v88 = vld [vmem:[%s0 + $0x28] sm:$0xff]
    %v89 = vld [vmem:[%s4] sm:$0xff]
    %v90 = vld [vmem:[%s4 + $0x8] sm:$0xff]
    %v91 = vld [vmem:[%s4 + $0x10] sm:$0xff]
    %v92 = vld [vmem:[%s4 + $0x18] sm:$0xff]
    %v93 = vld [vmem:[%s4 + $0x20] sm:$0xff]
    %v94 = vld [vmem:[%s4 + $0x28] sm:$0xff]
    %v95 = vld [vmem:[%s4 + $0x30] sm:$0xff]
    %v96 = vld [vmem:[%s4 + $0x38] sm:$0xff]
    %v97 = vld [vmem:[%s5] sm:$0x1]
    %v98 = vld [vmem:[%s6] sm:$0xff]
    %v99 = vld [vmem:[%s6 + $0x8] sm:$0xff]
    %v100 = vld [vmem:[%s6 + $0x10] sm:$0xff]
    %v101 = vld [vmem:[%s6 + $0x18] sm:$0xff]
    %v102 = vld [vmem:[%s6 + $0x20] sm:$0xff]
    %v103 = vld [vmem:[%s6 + $0x28] sm:$0xff]
    %v104 = vld [vmem:[%s6 + $0x30] sm:$0xff]
    %v105 = vld [vmem:[%s6 + $0x38] sm:$0xff]
    %v106 = vld [vmem:[%s6 + $0x40] sm:$0xff]
    %v107 = vld [vmem:[%s6 + $0x48] sm:$0xff]
    %v108 = vld [vmem:[%s6 + $0x50] sm:$0xff]
    %v109 = vld [vmem:[%s6 + $0x58] sm:$0xff]
    %v110 = vld [vmem:[%s6 + $0x60] sm:$0xff]
    %v111 = vld [vmem:[%s6 + $0x68] sm:$0xff]
    %v112 = vld [vmem:[%s6 + $0x70] sm:$0xff]
    %v113 = vld [vmem:[%s6 + $0x78] sm:$0xff]
    %v114 = vld [vmem:[%s6 + $0x80] sm:$0xff]
    %v115 = vld [vmem:[%s6 + $0x88] sm:$0xff]
    %v116 = vld [vmem:[%s6 + $0x90] sm:$0xff]
    %v117 = vld [vmem:[%s6 + $0x98] sm:$0xff]
    %v118 = vld [vmem:[%s6 + $0xa0] sm:$0xff]
    %v119 = vld [vmem:[%s6 + $0xa8] sm:$0xff]
    %v120 = vld [vmem:[%s6 + $0xb0] sm:$0xff]
    %v121 = vld [vmem:[%s6 + $0xb8] sm:$0xff]
    %v122 = vld [vmem:[%s6 + $0xc0] sm:$0xff]
    %v123 = vld [vmem:[%s6 + $0xc8] sm:$0xff]
    %v124 = vld [vmem:[%s6 + $0xd0] sm:$0xff]
    %v125 = vld [vmem:[%s6 + $0xd8] sm:$0xff]
    %v126 = vld [vmem:[%s6 + $0xe0] sm:$0xff]
    %v127 = vld [vmem:[%s6 + $0xe8] sm:$0xff]
    %v128 = vld [vmem:[%s6 + $0xf0] sm:$0xff]
    %v129 = vld [vmem:[%s6 + $0xf8] sm:$0xff]
    %v130 = vld [vmem:[%s7] sm:$0x1]
    %v131 = vld [vmem:[%s7 + $0x1] sm:$0x1]
    %v132 = vld [vmem:[%s7 + $0x2] sm:$0x1]
    %v133 = vld [vmem:[%s7 + $0x3] sm:$0x1]
    %v134 = vld [vmem:[%s7 + $0x4] sm:$0x1]
    %v135 = vld [vmem:[%s7 + $0x5] sm:$0x1]
    %v136 = vld [vmem:[%s7 + $0x6] sm:$0x1]
    %v137 = vld [vmem:[%s7 + $0x7] sm:$0x1]
    %vm138 = vcmask 523264
    %v139 = vsel %vm138, %v83, 0.0
    %140 = vadd.xlane.f32.xlu0 %v139
    %v141 = vpop.xlane.xlu0 %140
    %v142 = vsel %vm138, %v84, 0.0
    %143 = vadd.xlane.f32.xlu0 %v142
    %v144 = vpop.xlane.xlu0 %143
    %v145 = vsel %vm138, %v85, 0.0
    %146 = vadd.xlane.f32.xlu0 %v145
    %v147 = vpop.xlane.xlu0 %146
    %v148 = vsel %vm138, %v86, 0.0
    %149 = vadd.xlane.f32.xlu0 %v148
    %v150 = vpop.xlane.xlu0 %149
    %v151 = vsel %vm138, %v87, 0.0
    %152 = vadd.xlane.f32.xlu0 %v151
    %v153 = vpop.xlane.xlu0 %152
    %v154 = vsel %vm138, %v88, 0.0
    %155 = vadd.xlane.f32.xlu0 %v154
    %v156 = vpop.xlane.xlu0 %155
    %v157 = vrcp.pop 64.0
    %v158 = vmul.f32 %v141, %v157
    %v159 = vmul.f32 %v144, %v157
    %v160 = vmul.f32 %v147, %v157
    %v161 = vmul.f32 %v150, %v157
    %v162 = vmul.f32 %v153, %v157
    %v163 = vmul.f32 %v156, %v157
    %v164 = vsub.f32 %v83, %v158
    %v165 = vsub.f32 %v84, %v159
    %v166 = vsub.f32 %v85, %v160
    %v167 = vsub.f32 %v86, %v161
    %v168 = vsub.f32 %v87, %v162
    %v169 = vsub.f32 %v88, %v163
    %v170 = vmul.f32 %v164, %v164
    %v171 = vmul.f32 %v165, %v165
    %v172 = vmul.f32 %v166, %v166
    %v173 = vmul.f32 %v167, %v167
    %v174 = vmul.f32 %v168, %v168
    %v175 = vmul.f32 %v169, %v169
    %v176 = vsel %vm138, %v170, 0.0
    %177 = vadd.xlane.f32.xlu0 %v176
    %v178 = vpop.xlane.xlu0 %177
    %v179 = vsel %vm138, %v171, 0.0
    %180 = vadd.xlane.f32.xlu0 %v179
    %v181 = vpop.xlane.xlu0 %180
    %v182 = vsel %vm138, %v172, 0.0
    %183 = vadd.xlane.f32.xlu0 %v182
    %v184 = vpop.xlane.xlu0 %183
    %v185 = vsel %vm138, %v173, 0.0
    %186 = vadd.xlane.f32.xlu0 %v185
    %v187 = vpop.xlane.xlu0 %186
    %v188 = vsel %vm138, %v174, 0.0
    %189 = vadd.xlane.f32.xlu0 %v188
    %v190 = vpop.xlane.xlu0 %189
    %v191 = vsel %vm138, %v175, 0.0
    %192 = vadd.xlane.f32.xlu0 %v191
    %v193 = vpop.xlane.xlu0 %192
    %v194 = vmul.f32 %v178, %v157
    %v195 = vmul.f32 %v181, %v157
    %v196 = vmul.f32 %v184, %v157
    %v197 = vmul.f32 %v187, %v157
    %v198 = vmul.f32 %v190, %v157
    %v199 = vmul.f32 %v193, %v157
    %v200 = vadd.f32 %v194, 1e-05
    %v201 = vadd.f32 %v195, 1e-05
    %v202 = vadd.f32 %v196, 1e-05
    %v203 = vadd.f32 %v197, 1e-05
    %v204 = vadd.f32 %v198, 1e-05
    %v205 = vadd.f32 %v199, 1e-05
    %v206 = vrsqrt.pop %v200
    %v207 = vrsqrt.pop %v201
    %v208 = vrsqrt.pop %v202
    %v209 = vrsqrt.pop %v203
    %v210 = vrsqrt.pop %v204
    %v211 = vrsqrt.pop %v205
    %v212 = vmul.f32 %v164, %v206
    %v213 = vmul.f32 %v165, %v207
    %v214 = vmul.f32 %v166, %v208
    %v215 = vmul.f32 %v167, %v209
    %v216 = vmul.f32 %v168, %v210
    %v217 = vmul.f32 %v169, %v211
    %v218 = vlaneseq
    %v219 = vshrl.u32 %v218, 7
    %v220 = vsub.s32 0, %v219
    %v221 = vrot.slane %v131, %v220
    %v222 = vmul.f32 %v212, %v221
    %v223 = vmul.f32 %v213, %v221
    %v224 = vmul.f32 %v214, %v221
    %v225 = vmul.f32 %v215, %v221
    %v226 = vmul.f32 %v216, %v221
    %v227 = vmul.f32 %v217, %v221
    %v228 = vlaneseq
    %v229 = vshrl.u32 %v228, 7
    %v230 = vsub.s32 0, %v229
    %v231 = vrot.slane %v132, %v230
    %v232 = vadd.f32 %v222, %v231
    %v233 = vadd.f32 %v223, %v231
    %v234 = vadd.f32 %v224, %v231
    %v235 = vadd.f32 %v225, %v231
    %v236 = vadd.f32 %v226, %v231
    %v237 = vadd.f32 %v227, %v231
    %v238 = vlaneseq
    %v239 = vshrl.u32 %v238, 7
    %v240 = vsub.s32 0, %v239
    %v241 = vrot.slane %v130, %v240
    %v243 = vsel %vm138, %v232, 0
    %v246 = vsel %vm138, %v233, 0
    %v249 = vsel %vm138, %v234, 0
    %v252 = vsel %vm138, %v235, 0
    %v255 = vsel %vm138, %v236, 0
    %v258 = vsel %vm138, %v237, 0
    %260 = vmatprep.subr.mxu0 0.0
    %261 = vmatpush1.msra.mxu0 0.0
    %262 = vmatprep.subr.mxu0 0.0
    %263 = vmatpush1.msra.mxu0 0.0
    %264 = vmatprep.subr.mxu0 0.0
    %265 = vmatpush1.msra.mxu0 0.0
    %266 = vmatprep.subr.mxu0 0.0
    %267 = vmatpush1.msra.mxu0 0.0
    %268 = vmatprep.subr.mxu0 0.0
    %269 = vmatpush1.msra.mxu0 0.0
    %270 = vmatprep.subr.mxu0 0.0
    %271 = vmatpush1.msra.mxu0 0.0
    %272 = vmatprep.subr.mxu0 0.0
    %273 = vmatpush1.msra.mxu0 0.0
    %274 = vmatprep.subr.mxu0 0.0
    %275 = vmatpush1.msra.mxu0 0.0
    %276 = vmatprep.subr.mxu0 0.0
    %277 = vmatpush1.msra.mxu0 %v105
    %278 = vmatprep.subr.mxu0 0.0
    %279 = vmatpush1.msra.mxu0 %v104
    %280 = vmatprep.subr.mxu0 0.0
    %281 = vmatpush1.msra.mxu0 %v103
    %282 = vmatprep.subr.mxu0 0.0
    %283 = vmatpush1.msra.mxu0 %v102
    %284 = vmatprep.subr.mxu0 0.0
    %285 = vmatpush1.msra.mxu0 %v101
    %286 = vmatprep.subr.mxu0 0.0
    %287 = vmatpush1.msra.mxu0 %v100
    %288 = vmatprep.subr.mxu0 0.0
    %289 = vmatpush1.msra.mxu0 %v99
    %290 = vmatprep.subr.mxu0 0.0
    %291 = vmatpush1.msra.mxu0 %v98
    %292 = vmatprep.subr.mxu0 0.0
    %293 = vmatpush2.msra.mxu0 0.0
    %294 = vmatprep.subr.mxu0 0.0
    %295 = vmatpush2.msra.mxu0 0.0
    %296 = vmatprep.subr.mxu0 0.0
    %297 = vmatpush2.msra.mxu0 0.0
    %298 = vmatprep.subr.mxu0 0.0
    %299 = vmatpush2.msra.mxu0 0.0
    %300 = vmatprep.subr.mxu0 0.0
    %301 = vmatpush2.msra.mxu0 0.0
    %302 = vmatprep.subr.mxu0 0.0
    %303 = vmatpush2.msra.mxu0 0.0
    %304 = vmatprep.subr.mxu0 0.0
    %305 = vmatpush2.msra.mxu0 0.0
    %306 = vmatprep.subr.mxu0 0.0
    %307 = vmatpush2.msra.mxu0 0.0
    %308 = vmatprep.subr.mxu0 0.0
    %309 = vmatpush2.msra.mxu0 0.0
    %310 = vmatprep.subr.mxu0 0.0
    %311 = vmatpush2.msra.mxu0 0.0
    %312 = vmatprep.subr.mxu0 0.0
    %313 = vmatpush2.msra.mxu0 0.0
    %314 = vmatprep.subr.mxu0 0.0
    %315 = vmatpush2.msra.mxu0 0.0
    %316 = vmatprep.subr.mxu0 0.0
    %317 = vmatpush2.msra.mxu0 0.0
    %318 = vmatprep.subr.mxu0 0.0
    %319 = vmatpush2.msra.mxu0 0.0
    %320 = vmatprep.subr.mxu0 0.0
    %321 = vmatpush2.msra.mxu0 0.0
    %322 = vmatprep.subr.mxu0 0.0
    %323 = vmatpush2.msra.mxu0 0.0
    %324 = vmatprep.mubr.f32.mxu0 0.0
    %325 = vmatmul.mubr.f32.gmra.mxu0 %v243
    %v326 = vpop.f32.mrf.mxu0
    %v327 = vadd.f32 %v241, %v326
    %v328 = vpop.f32.mrf.mxu0
    %329 = vmatprep.mubr.f32.mxu0 0.0
    %330 = vmatmul.mubr.f32.gmra.mxu0 %v246
    %v331 = vpop.f32.mrf.mxu0
    %v332 = vadd.f32 %v241, %v331
    %v333 = vpop.f32.mrf.mxu0
    %334 = vmatprep.mubr.f32.mxu0 0.0
    %335 = vmatmul.mubr.f32.gmra.mxu0 %v249
    %v336 = vpop.f32.mrf.mxu0
    %v337 = vadd.f32 %v241, %v336
    %v338 = vpop.f32.mrf.mxu0
    %339 = vmatprep.mubr.f32.mxu0 0.0
    %340 = vmatmul.mubr.f32.gmra.mxu0 %v252
    %v341 = vpop.f32.mrf.mxu0
    %v342 = vadd.f32 %v241, %v341
    %v343 = vpop.f32.mrf.mxu0
    %344 = vmatprep.mubr.f32.mxu0 0.0
    %345 = vmatmul.mubr.f32.gmra.mxu0 %v255
    %v346 = vpop.f32.mrf.mxu0
    %v347 = vadd.f32 %v241, %v346
    %v348 = vpop.f32.mrf.mxu0
    %349 = vmatprep.mubr.f32.mxu0 0.0
    %350 = vmatmul.mubr.f32.gmra.mxu0 %v258
    %v351 = vpop.f32.mrf.mxu0
    %v352 = vadd.f32 %v241, %v351
    %v353 = vpop.f32.mrf.mxu0
    %354 = vdwg.mxu0
    %v356 = vlaneseq
    %v357 = vshrl.u32 %v356, 7
    %v358 = vsub.s32 0, %v357
    %v359 = vrot.slane %v97, %v358
    %v362 = vsel %vm138, %v30, 0
    %v365 = vsel %vm138, %v31, 0
    %v368 = vsel %vm138, %v32, 0
    %v371 = vsel %vm138, %v33, 0
    %v374 = vsel %vm138, %v34, 0
    %v377 = vsel %vm138, %v35, 0
    %v380 = vsel %vm138, %v36, 0
    %v383 = vsel %vm138, %v37, 0
    %v386 = vsel %vm138, %v38, 0
    %v389 = vsel %vm138, %v39, 0
    %v392 = vsel %vm138, %v40, 0
    %v395 = vsel %vm138, %v41, 0
    %v398 = vsel %vm138, %v42, 0
    %v401 = vsel %vm138, %v43, 0
    %v404 = vsel %vm138, %v44, 0
    %406 = vmatprep.subr.mxu0 0.0
    %407 = vmatpush1.msra.mxu0 0.0
    %408 = vmatprep.subr.mxu0 0.0
    %409 = vmatpush1.msra.mxu0 0.0
    %410 = vmatprep.subr.mxu0 0.0
    %411 = vmatpush1.msra.mxu0 0.0
    %412 = vmatprep.subr.mxu0 0.0
    %413 = vmatpush1.msra.mxu0 0.0
    %414 = vmatprep.subr.mxu0 0.0
    %415 = vmatpush1.msra.mxu0 0.0
    %416 = vmatprep.subr.mxu0 0.0
    %417 = vmatpush1.msra.mxu0 0.0
    %418 = vmatprep.subr.mxu0 0.0
    %419 = vmatpush1.msra.mxu0 0.0
    %420 = vmatprep.subr.mxu0 0.0
    %421 = vmatpush1.msra.mxu0 0.0
    %422 = vmatprep.subr.mxu0 0.0
    %423 = vmatpush1.msra.mxu0 %v96
    %424 = vmatprep.subr.mxu0 0.0
    %425 = vmatpush1.msra.mxu0 %v95
    %426 = vmatprep.subr.mxu0 0.0
    %427 = vmatpush1.msra.mxu0 %v94
    %428 = vmatprep.subr.mxu0 0.0
    %429 = vmatpush1.msra.mxu0 %v93
    %430 = vmatprep.subr.mxu0 0.0
    %431 = vmatpush1.msra.mxu0 %v92
    %432 = vmatprep.subr.mxu0 0.0
    %433 = vmatpush1.msra.mxu0 %v91
    %434 = vmatprep.subr.mxu0 0.0
    %435 = vmatpush1.msra.mxu0 %v90
    %436 = vmatprep.subr.mxu0 0.0
    %437 = vmatpush1.msra.mxu0 %v89
    %438 = vmatprep.subr.mxu0 0.0
    %439 = vmatpush2.msra.mxu0 0.0
    %440 = vmatprep.subr.mxu0 0.0
    %441 = vmatpush2.msra.mxu0 0.0
    %442 = vmatprep.subr.mxu0 0.0
    %443 = vmatpush2.msra.mxu0 0.0
    %444 = vmatprep.subr.mxu0 0.0
    %445 = vmatpush2.msra.mxu0 0.0
    %446 = vmatprep.subr.mxu0 0.0
    %447 = vmatpush2.msra.mxu0 0.0
    %448 = vmatprep.subr.mxu0 0.0
    %449 = vmatpush2.msra.mxu0 0.0
    %450 = vmatprep.subr.mxu0 0.0
    %451 = vmatpush2.msra.mxu0 0.0
    %452 = vmatprep.subr.mxu0 0.0
    %453 = vmatpush2.msra.mxu0 0.0
    %454 = vmatprep.subr.mxu0 0.0
    %455 = vmatpush2.msra.mxu0 0.0
    %456 = vmatprep.subr.mxu0 0.0
    %457 = vmatpush2.msra.mxu0 0.0
    %458 = vmatprep.subr.mxu0 0.0
    %459 = vmatpush2.msra.mxu0 0.0
    %460 = vmatprep.subr.mxu0 0.0
    %461 = vmatpush2.msra.mxu0 0.0
    %462 = vmatprep.subr.mxu0 0.0
    %463 = vmatpush2.msra.mxu0 0.0
    %464 = vmatprep.subr.mxu0 0.0
    %465 = vmatpush2.msra.mxu0 0.0
    %466 = vmatprep.subr.mxu0 0.0
    %467 = vmatpush2.msra.mxu0 0.0
    %468 = vmatprep.subr.mxu0 0.0
    %469 = vmatpush2.msra.mxu0 0.0
    %470 = vmatprep.mubr.f32.mxu0 0.0
    %471 = vmatmul.mubr.f32.gmra.mxu0 %v362
    %v472 = vpop.f32.mrf.mxu0
    %v473 = vadd.f32 %v359, %v472
    %v474 = vpop.f32.mrf.mxu0
    %475 = vmatprep.mubr.f32.mxu0 0.0
    %476 = vmatmul.mubr.f32.gmra.mxu0 %v365
    %v477 = vpop.f32.mrf.mxu0
    %v478 = vadd.f32 %v359, %v477
    %v479 = vpop.f32.mrf.mxu0
    %480 = vmatprep.mubr.f32.mxu0 0.0
    %481 = vmatmul.mubr.f32.gmra.mxu0 %v368
    %v482 = vpop.f32.mrf.mxu0
    %v483 = vadd.f32 %v359, %v482
    %v484 = vpop.f32.mrf.mxu0
    %485 = vmatprep.mubr.f32.mxu0 0.0
    %486 = vmatmul.mubr.f32.gmra.mxu0 %v371
    %v487 = vpop.f32.mrf.mxu0
    %v488 = vadd.f32 %v359, %v487
    %v489 = vpop.f32.mrf.mxu0
    %490 = vmatprep.mubr.f32.mxu0 0.0
    %491 = vmatmul.mubr.f32.gmra.mxu0 %v374
    %v492 = vpop.f32.mrf.mxu0
    %v493 = vadd.f32 %v359, %v492
    %v494 = vpop.f32.mrf.mxu0
    %495 = vmatprep.mubr.f32.mxu0 0.0
    %496 = vmatmul.mubr.f32.gmra.mxu0 %v377
    %v497 = vpop.f32.mrf.mxu0
    %v498 = vadd.f32 %v359, %v497
    %v499 = vpop.f32.mrf.mxu0
    %500 = vmatprep.mubr.f32.mxu0 0.0
    %501 = vmatmul.mubr.f32.gmra.mxu0 %v380
    %v502 = vpop.f32.mrf.mxu0
    %v503 = vadd.f32 %v359, %v502
    %v504 = vpop.f32.mrf.mxu0
    %505 = vmatprep.mubr.f32.mxu0 0.0
    %506 = vmatmul.mubr.f32.gmra.mxu0 %v383
    %v507 = vpop.f32.mrf.mxu0
    %v508 = vadd.f32 %v359, %v507
    %v509 = vpop.f32.mrf.mxu0
    %510 = vmatprep.mubr.f32.mxu0 0.0
    %511 = vmatmul.mubr.f32.gmra.mxu0 %v386
    %v512 = vpop.f32.mrf.mxu0
    %v513 = vadd.f32 %v359, %v512
    %v514 = vpop.f32.mrf.mxu0
    %515 = vmatprep.mubr.f32.mxu0 0.0
    %516 = vmatmul.mubr.f32.gmra.mxu0 %v389
    %v517 = vpop.f32.mrf.mxu0
    %v518 = vadd.f32 %v359, %v517
    %v519 = vpop.f32.mrf.mxu0
    %520 = vmatprep.mubr.f32.mxu0 0.0
    %521 = vmatmul.mubr.f32.gmra.mxu0 %v392
    %v522 = vpop.f32.mrf.mxu0
    %v523 = vadd.f32 %v359, %v522
    %v524 = vpop.f32.mrf.mxu0
    %525 = vmatprep.mubr.f32.mxu0 0.0
    %526 = vmatmul.mubr.f32.gmra.mxu0 %v395
    %v527 = vpop.f32.mrf.mxu0
    %v528 = vadd.f32 %v359, %v527
    %v529 = vpop.f32.mrf.mxu0
    %530 = vmatprep.mubr.f32.mxu0 0.0
    %531 = vmatmul.mubr.f32.gmra.mxu0 %v398
    %v532 = vpop.f32.mrf.mxu0
    %v533 = vadd.f32 %v359, %v532
    %v534 = vpop.f32.mrf.mxu0
    %535 = vmatprep.mubr.f32.mxu0 0.0
    %536 = vmatmul.mubr.f32.gmra.mxu0 %v401
    %v537 = vpop.f32.mrf.mxu0
    %v538 = vadd.f32 %v359, %v537
    %v539 = vpop.f32.mrf.mxu0
    %540 = vmatprep.mubr.f32.mxu0 0.0
    %541 = vmatmul.mubr.f32.gmra.mxu0 %v404
    %v542 = vpop.f32.mrf.mxu0
    %v543 = vadd.f32 %v359, %v542
    %v544 = vpop.f32.mrf.mxu0
    %545 = vdwg.mxu0
    %vm546 = vcmask 392192
    %v548 = vsel %vm546, %v60, 0
    %v551 = vsel %vm546, %v61, 0
    %v554 = vsel %vm546, %v62, 0
    %v557 = vsel %vm546, %v63, 0
    %v560 = vsel %vm546, %v64, 0
    %v563 = vsel %vm546, %v65, 0
    %v566 = vsel %vm546, %v66, 0
    %v569 = vsel %vm546, %v67, 0
    %v572 = vsel %vm546, %v68, 0
    %v575 = vsel %vm546, %v69, 0
    %v578 = vsel %vm546, %v70, 0
    %v581 = vsel %vm546, %v71, 0
    %v584 = vsel %vm546, %v72, 0
    %v587 = vsel %vm546, %v73, 0
    %v590 = vsel %vm546, %v74, 0
    %592 = vmatprep.subr.mxu0 0.0
    %593 = vmatpush1.msra.mxu0 0.0
    %594 = vmatprep.subr.mxu0 0.0
    %595 = vmatpush1.msra.mxu0 0.0
    %596 = vmatprep.subr.mxu0 0.0
    %597 = vmatpush1.msra.mxu0 0.0
    %598 = vmatprep.subr.mxu0 0.0
    %599 = vmatpush1.msra.mxu0 0.0
    %600 = vmatprep.subr.mxu0 0.0
    %601 = vmatpush1.msra.mxu0 0.0
    %602 = vmatprep.subr.mxu0 0.0
    %603 = vmatpush1.msra.mxu0 0.0
    %604 = vmatprep.subr.mxu0 0.0
    %605 = vmatpush1.msra.mxu0 0.0
    %606 = vmatprep.subr.mxu0 0.0
    %607 = vmatpush1.msra.mxu0 0.0
    %608 = vmatprep.subr.mxu0 0.0
    %609 = vmatpush1.msra.mxu0 0.0
    %610 = vmatprep.subr.mxu0 0.0
    %611 = vmatpush1.msra.mxu0 0.0
    %612 = vmatprep.subr.mxu0 0.0
    %613 = vmatpush1.msra.mxu0 %v352
    %614 = vmatprep.subr.mxu0 0.0
    %615 = vmatpush1.msra.mxu0 %v347
    %616 = vmatprep.subr.mxu0 0.0
    %617 = vmatpush1.msra.mxu0 %v342
    %618 = vmatprep.subr.mxu0 0.0
    %619 = vmatpush1.msra.mxu0 %v337
    %620 = vmatprep.subr.mxu0 0.0
    %621 = vmatpush1.msra.mxu0 %v332
    %622 = vmatprep.subr.mxu0 0.0
    %623 = vmatpush1.msra.mxu0 %v327
    %624 = vmatprep.subr.mxu0 0.0
    %625 = vmatpush2.msra.mxu0 0.0
    %626 = vmatprep.subr.mxu0 0.0
    %627 = vmatpush2.msra.mxu0 0.0
    %628 = vmatprep.subr.mxu0 0.0
    %629 = vmatpush2.msra.mxu0 0.0
    %630 = vmatprep.subr.mxu0 0.0
    %631 = vmatpush2.msra.mxu0 0.0
    %632 = vmatprep.subr.mxu0 0.0
    %633 = vmatpush2.msra.mxu0 0.0
    %634 = vmatprep.subr.mxu0 0.0
    %635 = vmatpush2.msra.mxu0 0.0
    %636 = vmatprep.subr.mxu0 0.0
    %637 = vmatpush2.msra.mxu0 0.0
    %638 = vmatprep.subr.mxu0 0.0
    %639 = vmatpush2.msra.mxu0 0.0
    %640 = vmatprep.subr.mxu0 0.0
    %641 = vmatpush2.msra.mxu0 0.0
    %642 = vmatprep.subr.mxu0 0.0
    %643 = vmatpush2.msra.mxu0 0.0
    %644 = vmatprep.subr.mxu0 0.0
    %645 = vmatpush2.msra.mxu0 0.0
    %646 = vmatprep.subr.mxu0 0.0
    %647 = vmatpush2.msra.mxu0 0.0
    %648 = vmatprep.subr.mxu0 0.0
    %649 = vmatpush2.msra.mxu0 0.0
    %650 = vmatprep.subr.mxu0 0.0
    %651 = vmatpush2.msra.mxu0 0.0
    %652 = vmatprep.subr.mxu0 0.0
    %653 = vmatpush2.msra.mxu0 0.0
    %654 = vmatprep.subr.mxu0 0.0
    %655 = vmatpush2.msra.mxu0 0.0
    %656 = vmatprep.mubr.f32.mxu0 0.0
    %657 = vmatmul.mubr.f32.gmra.mxu0 %v548
    %v658 = vpop.f32.mrf.mxu0
    %v659 = vadd.f32 0.0, %v658
    %v660 = vpop.f32.mrf.mxu0
    %661 = vmatprep.mubr.f32.mxu0 0.0
    %662 = vmatmul.mubr.f32.gmra.mxu0 %v551
    %v663 = vpop.f32.mrf.mxu0
    %v664 = vadd.f32 0.0, %v663
    %v665 = vpop.f32.mrf.mxu0
    %666 = vmatprep.mubr.f32.mxu0 0.0
    %667 = vmatmul.mubr.f32.gmra.mxu0 %v554
    %v668 = vpop.f32.mrf.mxu0
    %v669 = vadd.f32 0.0, %v668
    %v670 = vpop.f32.mrf.mxu0
    %671 = vmatprep.mubr.f32.mxu0 0.0
    %672 = vmatmul.mubr.f32.gmra.mxu0 %v557
    %v673 = vpop.f32.mrf.mxu0
    %v674 = vadd.f32 0.0, %v673
    %v675 = vpop.f32.mrf.mxu0
    %676 = vmatprep.mubr.f32.mxu0 0.0
    %677 = vmatmul.mubr.f32.gmra.mxu0 %v560
    %v678 = vpop.f32.mrf.mxu0
    %v679 = vadd.f32 0.0, %v678
    %v680 = vpop.f32.mrf.mxu0
    %681 = vmatprep.mubr.f32.mxu0 0.0
    %682 = vmatmul.mubr.f32.gmra.mxu0 %v563
    %v683 = vpop.f32.mrf.mxu0
    %v684 = vadd.f32 0.0, %v683
    %v685 = vpop.f32.mrf.mxu0
    %686 = vmatprep.mubr.f32.mxu0 0.0
    %687 = vmatmul.mubr.f32.gmra.mxu0 %v566
    %v688 = vpop.f32.mrf.mxu0
    %v689 = vadd.f32 0.0, %v688
    %v690 = vpop.f32.mrf.mxu0
    %691 = vmatprep.mubr.f32.mxu0 0.0
    %692 = vmatmul.mubr.f32.gmra.mxu0 %v569
    %v693 = vpop.f32.mrf.mxu0
    %v694 = vadd.f32 0.0, %v693
    %v695 = vpop.f32.mrf.mxu0
    %696 = vmatprep.mubr.f32.mxu0 0.0
    %697 = vmatmul.mubr.f32.gmra.mxu0 %v572
    %v698 = vpop.f32.mrf.mxu0
    %v699 = vadd.f32 0.0, %v698
    %v700 = vpop.f32.mrf.mxu0
    %701 = vmatprep.mubr.f32.mxu0 0.0
    %702 = vmatmul.mubr.f32.gmra.mxu0 %v575
    %v703 = vpop.f32.mrf.mxu0
    %v704 = vadd.f32 0.0, %v703
    %v705 = vpop.f32.mrf.mxu0
    %706 = vmatprep.mubr.f32.mxu0 0.0
    %707 = vmatmul.mubr.f32.gmra.mxu0 %v578
    %v708 = vpop.f32.mrf.mxu0
    %v709 = vadd.f32 0.0, %v708
    %v710 = vpop.f32.mrf.mxu0
    %711 = vmatprep.mubr.f32.mxu0 0.0
    %712 = vmatmul.mubr.f32.gmra.mxu0 %v581
    %v713 = vpop.f32.mrf.mxu0
    %v714 = vadd.f32 0.0, %v713
    %v715 = vpop.f32.mrf.mxu0
    %716 = vmatprep.mubr.f32.mxu0 0.0
    %717 = vmatmul.mubr.f32.gmra.mxu0 %v584
    %v718 = vpop.f32.mrf.mxu0
    %v719 = vadd.f32 0.0, %v718
    %v720 = vpop.f32.mrf.mxu0
    %721 = vmatprep.mubr.f32.mxu0 0.0
    %722 = vmatmul.mubr.f32.gmra.mxu0 %v587
    %v723 = vpop.f32.mrf.mxu0
    %v724 = vadd.f32 0.0, %v723
    %v725 = vpop.f32.mrf.mxu0
    %726 = vmatprep.mubr.f32.mxu0 0.0
    %727 = vmatmul.mubr.f32.gmra.mxu0 %v590
    %v728 = vpop.f32.mrf.mxu0
    %v729 = vadd.f32 0.0, %v728
    %v730 = vpop.f32.mrf.mxu0
    %731 = vdwg.mxu0
    %v732 = vmul.f32 %v473, %v659
    %v733 = vmul.f32 %v478, %v664
    %v734 = vmul.f32 %v483, %v669
    %v735 = vmul.f32 %v488, %v674
    %v736 = vmul.f32 %v493, %v679
    %v737 = vmul.f32 %v498, %v684
    %v738 = vmul.f32 %v503, %v689
    %v739 = vmul.f32 %v508, %v694
    %v740 = vmul.f32 %v513, %v699
    %v741 = vmul.f32 %v518, %v704
    %v742 = vmul.f32 %v523, %v709
    %v743 = vmul.f32 %v528, %v714
    %v744 = vmul.f32 %v533, %v719
    %v745 = vmul.f32 %v538, %v724
    %v746 = vmul.f32 %v543, %v729
    %v748 = vsel %vm138, %v732, 0
    %v751 = vsel %vm138, %v733, 0
    %v754 = vsel %vm138, %v734, 0
    %v757 = vsel %vm138, %v735, 0
    %v760 = vsel %vm138, %v736, 0
    %v763 = vsel %vm138, %v737, 0
    %v766 = vsel %vm138, %v738, 0
    %v769 = vsel %vm138, %v739, 0
    %v772 = vsel %vm138, %v740, 0
    %v775 = vsel %vm138, %v741, 0
    %v778 = vsel %vm138, %v742, 0
    %v781 = vsel %vm138, %v743, 0
    %v784 = vsel %vm138, %v744, 0
    %v787 = vsel %vm138, %v745, 0
    %v790 = vsel %vm138, %v746, 0
    %792 = vmatprep.subr.mxu0 0.0
    %793 = vmatpush1.msra.mxu0 0.0
    %794 = vmatprep.subr.mxu0 0.0
    %795 = vmatpush1.msra.mxu0 0.0
    %796 = vmatprep.subr.mxu0 0.0
    %797 = vmatpush1.msra.mxu0 0.0
    %798 = vmatprep.subr.mxu0 0.0
    %799 = vmatpush1.msra.mxu0 0.0
    %800 = vmatprep.subr.mxu0 0.0
    %801 = vmatpush1.msra.mxu0 0.0
    %802 = vmatprep.subr.mxu0 0.0
    %803 = vmatpush1.msra.mxu0 0.0
    %804 = vmatprep.subr.mxu0 0.0
    %805 = vmatpush1.msra.mxu0 0.0
    %806 = vmatprep.subr.mxu0 0.0
    %807 = vmatpush1.msra.mxu0 0.0
    %808 = vmatprep.subr.mxu0 0.0
    %809 = vmatpush1.msra.mxu0 %v82
    %810 = vmatprep.subr.mxu0 0.0
    %811 = vmatpush1.msra.mxu0 %v81
    %812 = vmatprep.subr.mxu0 0.0
    %813 = vmatpush1.msra.mxu0 %v80
    %814 = vmatprep.subr.mxu0 0.0
    %815 = vmatpush1.msra.mxu0 %v79
    %816 = vmatprep.subr.mxu0 0.0
    %817 = vmatpush1.msra.mxu0 %v78
    %818 = vmatprep.subr.mxu0 0.0
    %819 = vmatpush1.msra.mxu0 %v77
    %820 = vmatprep.subr.mxu0 0.0
    %821 = vmatpush1.msra.mxu0 %v76
    %822 = vmatprep.subr.mxu0 0.0
    %823 = vmatpush1.msra.mxu0 %v75
    %824 = vmatprep.subr.mxu0 0.0
    %825 = vmatpush2.msra.mxu0 0.0
    %826 = vmatprep.subr.mxu0 0.0
    %827 = vmatpush2.msra.mxu0 0.0
    %828 = vmatprep.subr.mxu0 0.0
    %829 = vmatpush2.msra.mxu0 0.0
    %830 = vmatprep.subr.mxu0 0.0
    %831 = vmatpush2.msra.mxu0 0.0
    %832 = vmatprep.subr.mxu0 0.0
    %833 = vmatpush2.msra.mxu0 0.0
    %834 = vmatprep.subr.mxu0 0.0
    %835 = vmatpush2.msra.mxu0 0.0
    %836 = vmatprep.subr.mxu0 0.0
    %837 = vmatpush2.msra.mxu0 0.0
    %838 = vmatprep.subr.mxu0 0.0
    %839 = vmatpush2.msra.mxu0 0.0
    %840 = vmatprep.subr.mxu0 0.0
    %841 = vmatpush2.msra.mxu0 0.0
    %842 = vmatprep.subr.mxu0 0.0
    %843 = vmatpush2.msra.mxu0 0.0
    %844 = vmatprep.subr.mxu0 0.0
    %845 = vmatpush2.msra.mxu0 0.0
    %846 = vmatprep.subr.mxu0 0.0
    %847 = vmatpush2.msra.mxu0 0.0
    %848 = vmatprep.subr.mxu0 0.0
    %849 = vmatpush2.msra.mxu0 0.0
    %850 = vmatprep.subr.mxu0 0.0
    %851 = vmatpush2.msra.mxu0 0.0
    %852 = vmatprep.subr.mxu0 0.0
    %853 = vmatpush2.msra.mxu0 0.0
    %854 = vmatprep.subr.mxu0 0.0
    %855 = vmatpush2.msra.mxu0 0.0
    %856 = vmatprep.mubr.f32.mxu0 0.0
    %857 = vmatmul.mubr.f32.gmra.mxu0 %v748
    %v858 = vpop.f32.mrf.mxu0
    %v859 = vadd.f32 0.0, %v858
    %v860 = vpop.f32.mrf.mxu0
    %861 = vmatprep.mubr.f32.mxu0 0.0
    %862 = vmatmul.mubr.f32.gmra.mxu0 %v751
    %v863 = vpop.f32.mrf.mxu0
    %v864 = vadd.f32 0.0, %v863
    %v865 = vpop.f32.mrf.mxu0
    %866 = vmatprep.mubr.f32.mxu0 0.0
    %867 = vmatmul.mubr.f32.gmra.mxu0 %v754
    %v868 = vpop.f32.mrf.mxu0
    %v869 = vadd.f32 0.0, %v868
    %v870 = vpop.f32.mrf.mxu0
    %871 = vmatprep.mubr.f32.mxu0 0.0
    %872 = vmatmul.mubr.f32.gmra.mxu0 %v757
    %v873 = vpop.f32.mrf.mxu0
    %v874 = vadd.f32 0.0, %v873
    %v875 = vpop.f32.mrf.mxu0
    %876 = vmatprep.mubr.f32.mxu0 0.0
    %877 = vmatmul.mubr.f32.gmra.mxu0 %v760
    %v878 = vpop.f32.mrf.mxu0
    %v879 = vadd.f32 0.0, %v878
    %v880 = vpop.f32.mrf.mxu0
    %881 = vmatprep.mubr.f32.mxu0 0.0
    %882 = vmatmul.mubr.f32.gmra.mxu0 %v763
    %v883 = vpop.f32.mrf.mxu0
    %v884 = vadd.f32 0.0, %v883
    %v885 = vpop.f32.mrf.mxu0
    %886 = vmatprep.mubr.f32.mxu0 0.0
    %887 = vmatmul.mubr.f32.gmra.mxu0 %v766
    %v888 = vpop.f32.mrf.mxu0
    %v889 = vadd.f32 0.0, %v888
    %v890 = vpop.f32.mrf.mxu0
    %891 = vmatprep.mubr.f32.mxu0 0.0
    %892 = vmatmul.mubr.f32.gmra.mxu0 %v769
    %v893 = vpop.f32.mrf.mxu0
    %v894 = vadd.f32 0.0, %v893
    %v895 = vpop.f32.mrf.mxu0
    %896 = vmatprep.mubr.f32.mxu0 0.0
    %897 = vmatmul.mubr.f32.gmra.mxu0 %v772
    %v898 = vpop.f32.mrf.mxu0
    %v899 = vadd.f32 0.0, %v898
    %v900 = vpop.f32.mrf.mxu0
    %901 = vmatprep.mubr.f32.mxu0 0.0
    %902 = vmatmul.mubr.f32.gmra.mxu0 %v775
    %v903 = vpop.f32.mrf.mxu0
    %v904 = vadd.f32 0.0, %v903
    %v905 = vpop.f32.mrf.mxu0
    %906 = vmatprep.mubr.f32.mxu0 0.0
    %907 = vmatmul.mubr.f32.gmra.mxu0 %v778
    %v908 = vpop.f32.mrf.mxu0
    %v909 = vadd.f32 0.0, %v908
    %v910 = vpop.f32.mrf.mxu0
    %911 = vmatprep.mubr.f32.mxu0 0.0
    %912 = vmatmul.mubr.f32.gmra.mxu0 %v781
    %v913 = vpop.f32.mrf.mxu0
    %v914 = vadd.f32 0.0, %v913
    %v915 = vpop.f32.mrf.mxu0
    %916 = vmatprep.mubr.f32.mxu0 0.0
    %917 = vmatmul.mubr.f32.gmra.mxu0 %v784
    %v918 = vpop.f32.mrf.mxu0
    %v919 = vadd.f32 0.0, %v918
    %v920 = vpop.f32.mrf.mxu0
    %921 = vmatprep.mubr.f32.mxu0 0.0
    %922 = vmatmul.mubr.f32.gmra.mxu0 %v787
    %v923 = vpop.f32.mrf.mxu0
    %v924 = vadd.f32 0.0, %v923
    %v925 = vpop.f32.mrf.mxu0
    %926 = vmatprep.mubr.f32.mxu0 0.0
    %927 = vmatmul.mubr.f32.gmra.mxu0 %v790
    %v928 = vpop.f32.mrf.mxu0
    %v929 = vadd.f32 0.0, %v928
    %v930 = vpop.f32.mrf.mxu0
    %931 = vdwg.mxu0
    %v932 = vsel %vm138, %v859, -inf
    %v933 = vsel %vm138, %v864, -inf
    %v934 = vsel %vm138, %v869, -inf
    %v935 = vsel %vm138, %v874, -inf
    %v936 = vsel %vm138, %v879, -inf
    %v937 = vmax.f32 %v932, %v936
    %v938 = vsel %vm138, %v884, -inf
    %v939 = vmax.f32 %v933, %v938
    %v940 = vsel %vm138, %v889, -inf
    %v941 = vmax.f32 %v934, %v940
    %v942 = vsel %vm138, %v894, -inf
    %v943 = vmax.f32 %v935, %v942
    %v944 = vsel %vm138, %v899, -inf
    %v945 = vmax.f32 %v937, %v944
    %v946 = vsel %vm138, %v904, -inf
    %v947 = vmax.f32 %v939, %v946
    %v948 = vsel %vm138, %v909, -inf
    %v949 = vmax.f32 %v941, %v948
    %v950 = vsel %vm138, %v914, -inf
    %v951 = vmax.f32 %v943, %v950
    %v952 = vsel %vm138, %v919, -inf
    %v953 = vmax.f32 %v945, %v952
    %v954 = vsel %vm138, %v924, -inf
    %v955 = vmax.f32 %v947, %v954
    %v956 = vsel %vm138, %v929, -inf
    %v957 = vmax.f32 %v949, %v956
    %v958 = vmax.f32 %v953, %v955
    %v959 = vmax.f32 %v957, %v951
    %v960 = vmax.f32 %v958, %v959
    %961 = vmax.xlane.f32.xlu0 %v960
    %v962 = vpop.xlane.xlu0 %961
    %v963 = vrot.slane %v962, 4
    %v964 = vmax.f32 %v962, %v963
    %v965 = vrot.slane %v964, 2
    %v966 = vmax.f32 %v964, %v965
    %v967 = vrot.slane %v966, 1
    %v968 = vmax.f32 %v966, %v967
    %s969 = vtos %v968
    %v970 = vstv %s969
    %v971 = vsub.f32 %v859, %v970
    %v972 = vsub.f32 %v864, %v970
    %v973 = vsub.f32 %v869, %v970
    %v974 = vsub.f32 %v874, %v970
    %v975 = vsub.f32 %v879, %v970
    %v976 = vsub.f32 %v884, %v970
    %v977 = vsub.f32 %v889, %v970
    %v978 = vsub.f32 %v894, %v970
    %v979 = vsub.f32 %v899, %v970
    %v980 = vsub.f32 %v904, %v970
    %v981 = vsub.f32 %v909, %v970
    %v982 = vsub.f32 %v914, %v970
    %v983 = vsub.f32 %v919, %v970
    %v984 = vsub.f32 %v924, %v970
    %v985 = vsub.f32 %v929, %v970
    %v986 = vmul.f32 %v971, 1.442695
    %v987 = vpow.pop %v986
    %v988 = vmul.f32 %v972, 1.442695
    %v989 = vpow.pop %v988
    %v990 = vmul.f32 %v973, 1.442695
    %v991 = vpow.pop %v990
    %v992 = vmul.f32 %v974, 1.442695
    %v993 = vpow.pop %v992
    %v994 = vmul.f32 %v975, 1.442695
    %v995 = vpow.pop %v994
    %v996 = vmul.f32 %v976, 1.442695
    %v997 = vpow.pop %v996
    %v998 = vmul.f32 %v977, 1.442695
    %v999 = vpow.pop %v998
    %v1000 = vmul.f32 %v978, 1.442695
    %v1001 = vpow.pop %v1000
    %v1002 = vmul.f32 %v979, 1.442695
    %v1003 = vpow.pop %v1002
    %v1004 = vmul.f32 %v980, 1.442695
    %v1005 = vpow.pop %v1004
    %v1006 = vmul.f32 %v981, 1.442695
    %v1007 = vpow.pop %v1006
    %v1008 = vmul.f32 %v982, 1.442695
    %v1009 = vpow.pop %v1008
    %v1010 = vmul.f32 %v983, 1.442695
    %v1011 = vpow.pop %v1010
    %v1012 = vmul.f32 %v984, 1.442695
    %v1013 = vpow.pop %v1012
    %v1014 = vmul.f32 %v985, 1.442695
    %v1015 = vpow.pop %v1014
    %1016 = vxpose.xlu0.b32.start [1/16] %v60, 128
    %1017 = vxpose.xlu0.b32.cont [2/16] %v61, 128
    %1018 = vxpose.xlu0.b32.cont [3/16] %v62, 128
    %1019 = vxpose.xlu0.b32.cont [4/16] %v63, 128
    %1020 = vxpose.xlu0.b32.cont [5/16] %v64, 128
    %1021 = vxpose.xlu0.b32.cont [6/16] %v65, 128
    %1022 = vxpose.xlu0.b32.cont [7/16] %v66, 128
    %1023 = vxpose.xlu0.b32.cont [8/16] %v67, 128
    %1024 = vxpose.xlu0.b32.cont [9/16] %v68, 128
    %1025 = vxpose.xlu0.b32.cont [10/16] %v69, 128
    %1026 = vxpose.xlu0.b32.cont [11/16] %v70, 128
    %1027 = vxpose.xlu0.b32.cont [12/16] %v71, 128
    %1028 = vxpose.xlu0.b32.cont [13/16] %v72, 128
    %1029 = vxpose.xlu0.b32.cont [14/16] %v73, 128
    %1030 = vxpose.xlu0.b32.cont [15/16] %v74, 128
    %1031 = vxpose.xlu0.b32.end [16/16] 0.0, 128
    %v1032 = vpop.trf.xlu0
    %v1033 = vpop.trf.xlu0
    %v1034 = vpop.trf.xlu0
    %v1035 = vpop.trf.xlu0
    %v1036 = vpop.trf.xlu0
    %v1037 = vpop.trf.xlu0
    %v1038 = vpop.trf.xlu0
    %v1039 = vpop.trf.xlu0
    %v1040 = vpop.trf.xlu0
    %v1041 = vpop.trf.xlu0
    %v1042 = vpop.trf.xlu0
    %v1043 = vpop.trf.xlu0
    %v1044 = vpop.trf.xlu0
    %v1045 = vpop.trf.xlu0
    %v1046 = vpop.trf.xlu0
    %v1047 = vpop.trf.xlu0
    %vm1048 = vcmask 982016
    %v1050 = vsel %vm1048, %v1032, 0
    %v1053 = vsel %vm1048, %v1033, 0
    %v1056 = vsel %vm1048, %v1034, 0
    %v1059 = vsel %vm1048, %v1035, 0
    %v1062 = vsel %vm1048, %v1036, 0
    %v1065 = vsel %vm1048, %v1037, 0
    %1067 = vmatprep.subr.mxu0 0.0
    %1068 = vmatpush1.msra.mxu0 0.0
    %1069 = vmatprep.subr.mxu0 0.0
    %1070 = vmatpush1.msra.mxu0 %v1015
    %1071 = vmatprep.subr.mxu0 0.0
    %1072 = vmatpush1.msra.mxu0 %v1013
    %1073 = vmatprep.subr.mxu0 0.0
    %1074 = vmatpush1.msra.mxu0 %v1011
    %1075 = vmatprep.subr.mxu0 0.0
    %1076 = vmatpush1.msra.mxu0 %v1009
    %1077 = vmatprep.subr.mxu0 0.0
    %1078 = vmatpush1.msra.mxu0 %v1007
    %1079 = vmatprep.subr.mxu0 0.0
    %1080 = vmatpush1.msra.mxu0 %v1005
    %1081 = vmatprep.subr.mxu0 0.0
    %1082 = vmatpush1.msra.mxu0 %v1003
    %1083 = vmatprep.subr.mxu0 0.0
    %1084 = vmatpush1.msra.mxu0 %v1001
    %1085 = vmatprep.subr.mxu0 0.0
    %1086 = vmatpush1.msra.mxu0 %v999
    %1087 = vmatprep.subr.mxu0 0.0
    %1088 = vmatpush1.msra.mxu0 %v997
    %1089 = vmatprep.subr.mxu0 0.0
    %1090 = vmatpush1.msra.mxu0 %v995
    %1091 = vmatprep.subr.mxu0 0.0
    %1092 = vmatpush1.msra.mxu0 %v993
    %1093 = vmatprep.subr.mxu0 0.0
    %1094 = vmatpush1.msra.mxu0 %v991
    %1095 = vmatprep.subr.mxu0 0.0
    %1096 = vmatpush1.msra.mxu0 %v989
    %1097 = vmatprep.subr.mxu0 0.0
    %1098 = vmatpush1.msra.mxu0 %v987
    %1099 = vmatprep.subr.mxu0 0.0
    %1100 = vmatpush2.msra.mxu0 0.0
    %1101 = vmatprep.subr.mxu0 0.0
    %1102 = vmatpush2.msra.mxu0 0.0
    %1103 = vmatprep.subr.mxu0 0.0
    %1104 = vmatpush2.msra.mxu0 0.0
    %1105 = vmatprep.subr.mxu0 0.0
    %1106 = vmatpush2.msra.mxu0 0.0
    %1107 = vmatprep.subr.mxu0 0.0
    %1108 = vmatpush2.msra.mxu0 0.0
    %1109 = vmatprep.subr.mxu0 0.0
    %1110 = vmatpush2.msra.mxu0 0.0
    %1111 = vmatprep.subr.mxu0 0.0
    %1112 = vmatpush2.msra.mxu0 0.0
    %1113 = vmatprep.subr.mxu0 0.0
    %1114 = vmatpush2.msra.mxu0 0.0
    %1115 = vmatprep.subr.mxu0 0.0
    %1116 = vmatpush2.msra.mxu0 0.0
    %1117 = vmatprep.subr.mxu0 0.0
    %1118 = vmatpush2.msra.mxu0 0.0
    %1119 = vmatprep.subr.mxu0 0.0
    %1120 = vmatpush2.msra.mxu0 0.0
    %1121 = vmatprep.subr.mxu0 0.0
    %1122 = vmatpush2.msra.mxu0 0.0
    %1123 = vmatprep.subr.mxu0 0.0
    %1124 = vmatpush2.msra.mxu0 0.0
    %1125 = vmatprep.subr.mxu0 0.0
    %1126 = vmatpush2.msra.mxu0 0.0
    %1127 = vmatprep.subr.mxu0 0.0
    %1128 = vmatpush2.msra.mxu0 0.0
    %1129 = vmatprep.subr.mxu0 0.0
    %1130 = vmatpush2.msra.mxu0 0.0
    %1131 = vmatprep.mubr.f32.mxu0 0.0
    %1132 = vmatmul.mubr.f32.gmra.mxu0 %v1050
    %v1133 = vpop.f32.mrf.mxu0
    %v1134 = vadd.f32 0.0, %v1133
    %v1135 = vpop.f32.mrf.mxu0
    %1136 = vmatprep.mubr.f32.mxu0 0.0
    %1137 = vmatmul.mubr.f32.gmra.mxu0 %v1053
    %v1138 = vpop.f32.mrf.mxu0
    %v1139 = vadd.f32 0.0, %v1138
    %v1140 = vpop.f32.mrf.mxu0
    %1141 = vmatprep.mubr.f32.mxu0 0.0
    %1142 = vmatmul.mubr.f32.gmra.mxu0 %v1056
    %v1143 = vpop.f32.mrf.mxu0
    %v1144 = vadd.f32 0.0, %v1143
    %v1145 = vpop.f32.mrf.mxu0
    %1146 = vmatprep.mubr.f32.mxu0 0.0
    %1147 = vmatmul.mubr.f32.gmra.mxu0 %v1059
    %v1148 = vpop.f32.mrf.mxu0
    %v1149 = vadd.f32 0.0, %v1148
    %v1150 = vpop.f32.mrf.mxu0
    %1151 = vmatprep.mubr.f32.mxu0 0.0
    %1152 = vmatmul.mubr.f32.gmra.mxu0 %v1062
    %v1153 = vpop.f32.mrf.mxu0
    %v1154 = vadd.f32 0.0, %v1153
    %v1155 = vpop.f32.mrf.mxu0
    %1156 = vmatprep.mubr.f32.mxu0 0.0
    %1157 = vmatmul.mubr.f32.gmra.mxu0 %v1065
    %v1158 = vpop.f32.mrf.mxu0
    %v1159 = vadd.f32 0.0, %v1158
    %v1160 = vpop.f32.mrf.mxu0
    %1161 = vdwg.mxu0
    %v1162 = vmax.f32 %v1134, 1.1754944e-38
    %v1163 = vmax.f32 %v1139, 1.1754944e-38
    %v1164 = vmax.f32 %v1144, 1.1754944e-38
    %v1165 = vmax.f32 %v1149, 1.1754944e-38
    %v1166 = vmax.f32 %v1154, 1.1754944e-38
    %v1167 = vmax.f32 %v1159, 1.1754944e-38
    %v1168 = vrcp.pop %v1162
    %v1169 = vrcp.pop %v1163
    %v1170 = vrcp.pop %v1164
    %v1171 = vrcp.pop %v1165
    %v1172 = vrcp.pop %v1166
    %v1173 = vrcp.pop %v1167
    %1174 = vmatprep.subr.mxu0 0.0
    %1175 = vmatpush1.msra.mxu0 0.0
    %1176 = vmatprep.subr.mxu0 0.0
    %1177 = vmatpush1.msra.mxu0 0.0
    %1178 = vmatprep.subr.mxu0 0.0
    %1179 = vmatpush1.msra.mxu0 0.0
    %1180 = vmatprep.subr.mxu0 0.0
    %1181 = vmatpush1.msra.mxu0 0.0
    %1182 = vmatprep.subr.mxu0 0.0
    %1183 = vmatpush1.msra.mxu0 0.0
    %1184 = vmatprep.subr.mxu0 0.0
    %1185 = vmatpush1.msra.mxu0 0.0
    %1186 = vmatprep.subr.mxu0 0.0
    %1187 = vmatpush1.msra.mxu0 0.0
    %1188 = vmatprep.subr.mxu0 0.0
    %1189 = vmatpush1.msra.mxu0 0.0
    %1190 = vmatprep.subr.mxu0 0.0
    %1191 = vmatpush1.msra.mxu0 0.0
    %1192 = vmatprep.subr.mxu0 0.0
    %1193 = vmatpush1.msra.mxu0 0.0
    %1194 = vmatprep.subr.mxu0 0.0
    %1195 = vmatpush1.msra.mxu0 %v1173
    %1196 = vmatprep.subr.mxu0 0.0
    %1197 = vmatpush1.msra.mxu0 %v1172
    %1198 = vmatprep.subr.mxu0 0.0
    %1199 = vmatpush1.msra.mxu0 %v1171
    %1200 = vmatprep.subr.mxu0 0.0
    %1201 = vmatpush1.msra.mxu0 %v1170
    %1202 = vmatprep.subr.mxu0 0.0
    %1203 = vmatpush1.msra.mxu0 %v1169
    %1204 = vmatprep.subr.mxu0 0.0
    %1205 = vmatpush1.msra.mxu0 %v1168
    %1206 = vmatprep.subr.mxu0 0.0
    %1207 = vmatpush2.msra.mxu0 0.0
    %1208 = vmatprep.subr.mxu0 0.0
    %1209 = vmatpush2.msra.mxu0 0.0
    %1210 = vmatprep.subr.mxu0 0.0
    %1211 = vmatpush2.msra.mxu0 0.0
    %1212 = vmatprep.subr.mxu0 0.0
    %1213 = vmatpush2.msra.mxu0 0.0
    %1214 = vmatprep.subr.mxu0 0.0
    %1215 = vmatpush2.msra.mxu0 0.0
    %1216 = vmatprep.subr.mxu0 0.0
    %1217 = vmatpush2.msra.mxu0 0.0
    %1218 = vmatprep.subr.mxu0 0.0
    %1219 = vmatpush2.msra.mxu0 0.0
    %1220 = vmatprep.subr.mxu0 0.0
    %1221 = vmatpush2.msra.mxu0 0.0
    %1222 = vmatprep.subr.mxu0 0.0
    %1223 = vmatpush2.msra.mxu0 0.0
    %1224 = vmatprep.subr.mxu0 0.0
    %1225 = vmatpush2.msra.mxu0 0.0
    %1226 = vmatprep.subr.mxu0 0.0
    %1227 = vmatpush2.msra.mxu0 0.0
    %1228 = vmatprep.subr.mxu0 0.0
    %1229 = vmatpush2.msra.mxu0 0.0
    %1230 = vmatprep.subr.mxu0 0.0
    %1231 = vmatpush2.msra.mxu0 0.0
    %1232 = vmatprep.subr.mxu0 0.0
    %1233 = vmatpush2.msra.mxu0 0.0
    %1234 = vmatprep.subr.mxu0 0.0
    %1235 = vmatpush2.msra.mxu0 0.0
    %1236 = vmatprep.subr.mxu0 0.0
    %1237 = vmatpush2.msra.mxu0 0.0
    %1238 = vmatprep.mubr.f32.mxu0 0.0
    %1239 = vmatmul.mubr.f32.gmra.mxu0 %v548
    %v1240 = vpop.f32.mrf.mxu0
    %v1241 = vadd.f32 0.0, %v1240
    %v1242 = vpop.f32.mrf.mxu0
    %1243 = vmatprep.mubr.f32.mxu0 0.0
    %1244 = vmatmul.mubr.f32.gmra.mxu0 %v551
    %v1245 = vpop.f32.mrf.mxu0
    %v1246 = vadd.f32 0.0, %v1245
    %v1247 = vpop.f32.mrf.mxu0
    %1248 = vmatprep.mubr.f32.mxu0 0.0
    %1249 = vmatmul.mubr.f32.gmra.mxu0 %v554
    %v1250 = vpop.f32.mrf.mxu0
    %v1251 = vadd.f32 0.0, %v1250
    %v1252 = vpop.f32.mrf.mxu0
    %1253 = vmatprep.mubr.f32.mxu0 0.0
    %1254 = vmatmul.mubr.f32.gmra.mxu0 %v557
    %v1255 = vpop.f32.mrf.mxu0
    %v1256 = vadd.f32 0.0, %v1255
    %v1257 = vpop.f32.mrf.mxu0
    %1258 = vmatprep.mubr.f32.mxu0 0.0
    %1259 = vmatmul.mubr.f32.gmra.mxu0 %v560
    %v1260 = vpop.f32.mrf.mxu0
    %v1261 = vadd.f32 0.0, %v1260
    %v1262 = vpop.f32.mrf.mxu0
    %1263 = vmatprep.mubr.f32.mxu0 0.0
    %1264 = vmatmul.mubr.f32.gmra.mxu0 %v563
    %v1265 = vpop.f32.mrf.mxu0
    %v1266 = vadd.f32 0.0, %v1265
    %v1267 = vpop.f32.mrf.mxu0
    %1268 = vmatprep.mubr.f32.mxu0 0.0
    %1269 = vmatmul.mubr.f32.gmra.mxu0 %v566
    %v1270 = vpop.f32.mrf.mxu0
    %v1271 = vadd.f32 0.0, %v1270
    %v1272 = vpop.f32.mrf.mxu0
    %1273 = vmatprep.mubr.f32.mxu0 0.0
    %1274 = vmatmul.mubr.f32.gmra.mxu0 %v569
    %v1275 = vpop.f32.mrf.mxu0
    %v1276 = vadd.f32 0.0, %v1275
    %v1277 = vpop.f32.mrf.mxu0
    %1278 = vmatprep.mubr.f32.mxu0 0.0
    %1279 = vmatmul.mubr.f32.gmra.mxu0 %v572
    %v1280 = vpop.f32.mrf.mxu0
    %v1281 = vadd.f32 0.0, %v1280
    %v1282 = vpop.f32.mrf.mxu0
    %1283 = vmatprep.mubr.f32.mxu0 0.0
    %1284 = vmatmul.mubr.f32.gmra.mxu0 %v575
    %v1285 = vpop.f32.mrf.mxu0
    %v1286 = vadd.f32 0.0, %v1285
    %v1287 = vpop.f32.mrf.mxu0
    %1288 = vmatprep.mubr.f32.mxu0 0.0
    %1289 = vmatmul.mubr.f32.gmra.mxu0 %v578
    %v1290 = vpop.f32.mrf.mxu0
    %v1291 = vadd.f32 0.0, %v1290
    %v1292 = vpop.f32.mrf.mxu0
    %1293 = vmatprep.mubr.f32.mxu0 0.0
    %1294 = vmatmul.mubr.f32.gmra.mxu0 %v581
    %v1295 = vpop.f32.mrf.mxu0
    %v1296 = vadd.f32 0.0, %v1295
    %v1297 = vpop.f32.mrf.mxu0
    %1298 = vmatprep.mubr.f32.mxu0 0.0
    %1299 = vmatmul.mubr.f32.gmra.mxu0 %v584
    %v1300 = vpop.f32.mrf.mxu0
    %v1301 = vadd.f32 0.0, %v1300
    %v1302 = vpop.f32.mrf.mxu0
    %1303 = vmatprep.mubr.f32.mxu0 0.0
    %1304 = vmatmul.mubr.f32.gmra.mxu0 %v587
    %v1305 = vpop.f32.mrf.mxu0
    %v1306 = vadd.f32 0.0, %v1305
    %v1307 = vpop.f32.mrf.mxu0
    %1308 = vmatprep.mubr.f32.mxu0 0.0
    %1309 = vmatmul.mubr.f32.gmra.mxu0 %v590
    %v1310 = vpop.f32.mrf.mxu0
    %v1311 = vadd.f32 0.0, %v1310
    %v1312 = vpop.f32.mrf.mxu0
    %1313 = vdwg.mxu0
    %v1314 = vmul.f32 %v987, %v1241
    %v1315 = vmul.f32 %v989, %v1246
    %v1316 = vmul.f32 %v991, %v1251
    %v1317 = vmul.f32 %v993, %v1256
    %v1318 = vmul.f32 %v995, %v1261
    %v1319 = vmul.f32 %v997, %v1266
    %v1320 = vmul.f32 %v999, %v1271
    %v1321 = vmul.f32 %v1001, %v1276
    %v1322 = vmul.f32 %v1003, %v1281
    %v1323 = vmul.f32 %v1005, %v1286
    %v1324 = vmul.f32 %v1007, %v1291
    %v1325 = vmul.f32 %v1009, %v1296
    %v1326 = vmul.f32 %v1011, %v1301
    %v1327 = vmul.f32 %v1013, %v1306
    %v1328 = vmul.f32 %v1015, %v1311
    %1344 = vrot.lane.b32.xlu0 %v1314, 64
    %v1345 = vpop.permute.xlu0 %1344
    %1346 = vrot.lane.b32.xlu0 %v1315, 64
    %v1347 = vpop.permute.xlu0 %1346
    %1348 = vrot.lane.b32.xlu0 %v1316, 64
    %v1349 = vpop.permute.xlu0 %1348
    %1350 = vrot.lane.b32.xlu0 %v1317, 64
    %v1351 = vpop.permute.xlu0 %1350
    %1352 = vrot.lane.b32.xlu0 %v1318, 64
    %v1353 = vpop.permute.xlu0 %1352
    %1354 = vrot.lane.b32.xlu0 %v1319, 64
    %v1355 = vpop.permute.xlu0 %1354
    %1356 = vrot.lane.b32.xlu0 %v1320, 64
    %v1357 = vpop.permute.xlu0 %1356
    %1358 = vrot.lane.b32.xlu0 %v1321, 64
    %v1359 = vpop.permute.xlu0 %1358
    %1360 = vrot.lane.b32.xlu0 %v1322, 64
    %v1361 = vpop.permute.xlu0 %1360
    %1362 = vrot.lane.b32.xlu0 %v1323, 64
    %v1363 = vpop.permute.xlu0 %1362
    %1364 = vrot.lane.b32.xlu0 %v1324, 64
    %v1365 = vpop.permute.xlu0 %1364
    %1366 = vrot.lane.b32.xlu0 %v1325, 64
    %v1367 = vpop.permute.xlu0 %1366
    %1368 = vrot.lane.b32.xlu0 %v1326, 64
    %v1369 = vpop.permute.xlu0 %1368
    %1370 = vrot.lane.b32.xlu0 %v1327, 64
    %v1371 = vpop.permute.xlu0 %1370
    %1372 = vrot.lane.b32.xlu0 %v1328, 64
    %v1373 = vpop.permute.xlu0 %1372
    %v1389 = vmul.f32 %v473, %v1345
    %v1390 = vmul.f32 %v478, %v1347
    %v1391 = vmul.f32 %v483, %v1349
    %v1392 = vmul.f32 %v488, %v1351
    %v1393 = vmul.f32 %v493, %v1353
    %v1394 = vmul.f32 %v498, %v1355
    %v1395 = vmul.f32 %v503, %v1357
    %v1396 = vmul.f32 %v508, %v1359
    %v1397 = vmul.f32 %v513, %v1361
    %v1398 = vmul.f32 %v518, %v1363
    %v1399 = vmul.f32 %v523, %v1365
    %v1400 = vmul.f32 %v528, %v1367
    %v1401 = vmul.f32 %v533, %v1369
    %v1402 = vmul.f32 %v538, %v1371
    %v1403 = vmul.f32 %v543, %v1373
    %1419 = vrot.lane.b32.xlu0 %v1389, 64
    %v1420 = vpop.permute.xlu0 %1419
    %1421 = vrot.lane.b32.xlu0 %v1390, 64
    %v1422 = vpop.permute.xlu0 %1421
    %1423 = vrot.lane.b32.xlu0 %v1391, 64
    %v1424 = vpop.permute.xlu0 %1423
    %1425 = vrot.lane.b32.xlu0 %v1392, 64
    %v1426 = vpop.permute.xlu0 %1425
    %1427 = vrot.lane.b32.xlu0 %v1393, 64
    %v1428 = vpop.permute.xlu0 %1427
    %1429 = vrot.lane.b32.xlu0 %v1394, 64
    %v1430 = vpop.permute.xlu0 %1429
    %1431 = vrot.lane.b32.xlu0 %v1395, 64
    %v1432 = vpop.permute.xlu0 %1431
    %1433 = vrot.lane.b32.xlu0 %v1396, 64
    %v1434 = vpop.permute.xlu0 %1433
    %1435 = vrot.lane.b32.xlu0 %v1397, 64
    %v1436 = vpop.permute.xlu0 %1435
    %1437 = vrot.lane.b32.xlu0 %v1398, 64
    %v1438 = vpop.permute.xlu0 %1437
    %1439 = vrot.lane.b32.xlu0 %v1399, 64
    %v1440 = vpop.permute.xlu0 %1439
    %1441 = vrot.lane.b32.xlu0 %v1400, 64
    %v1442 = vpop.permute.xlu0 %1441
    %1443 = vrot.lane.b32.xlu0 %v1401, 64
    %v1444 = vpop.permute.xlu0 %1443
    %1445 = vrot.lane.b32.xlu0 %v1402, 64
    %v1446 = vpop.permute.xlu0 %1445
    %1447 = vrot.lane.b32.xlu0 %v1403, 64
    %v1448 = vpop.permute.xlu0 %1447
    %1464 = vmatprep.subr.mxu0 0.0
    %1465 = vmatpush1.msra.mxu0 0.0
    %1466 = vmatprep.subr.mxu0 0.0
    %1467 = vmatpush1.msra.mxu0 %v1448
    %1468 = vmatprep.subr.mxu0 0.0
    %1469 = vmatpush1.msra.mxu0 %v1446
    %1470 = vmatprep.subr.mxu0 0.0
    %1471 = vmatpush1.msra.mxu0 %v1444
    %1472 = vmatprep.subr.mxu0 0.0
    %1473 = vmatpush1.msra.mxu0 %v1442
    %1474 = vmatprep.subr.mxu0 0.0
    %1475 = vmatpush1.msra.mxu0 %v1440
    %1476 = vmatprep.subr.mxu0 0.0
    %1477 = vmatpush1.msra.mxu0 %v1438
    %1478 = vmatprep.subr.mxu0 0.0
    %1479 = vmatpush1.msra.mxu0 %v1436
    %1480 = vmatprep.subr.mxu0 0.0
    %1481 = vmatpush1.msra.mxu0 %v1434
    %1482 = vmatprep.subr.mxu0 0.0
    %1483 = vmatpush1.msra.mxu0 %v1432
    %1484 = vmatprep.subr.mxu0 0.0
    %1485 = vmatpush1.msra.mxu0 %v1430
    %1486 = vmatprep.subr.mxu0 0.0
    %1487 = vmatpush1.msra.mxu0 %v1428
    %1488 = vmatprep.subr.mxu0 0.0
    %1489 = vmatpush1.msra.mxu0 %v1426
    %1490 = vmatprep.subr.mxu0 0.0
    %1491 = vmatpush1.msra.mxu0 %v1424
    %1492 = vmatprep.subr.mxu0 0.0
    %1493 = vmatpush1.msra.mxu0 %v1422
    %1494 = vmatprep.subr.mxu0 0.0
    %1495 = vmatpush1.msra.mxu0 %v1420
    %1496 = vmatprep.subr.mxu0 0.0
    %1497 = vmatpush2.msra.mxu0 0.0
    %1498 = vmatprep.subr.mxu0 0.0
    %1499 = vmatpush2.msra.mxu0 0.0
    %1500 = vmatprep.subr.mxu0 0.0
    %1501 = vmatpush2.msra.mxu0 0.0
    %1502 = vmatprep.subr.mxu0 0.0
    %1503 = vmatpush2.msra.mxu0 0.0
    %1504 = vmatprep.subr.mxu0 0.0
    %1505 = vmatpush2.msra.mxu0 0.0
    %1506 = vmatprep.subr.mxu0 0.0
    %1507 = vmatpush2.msra.mxu0 0.0
    %1508 = vmatprep.subr.mxu0 0.0
    %1509 = vmatpush2.msra.mxu0 0.0
    %1510 = vmatprep.subr.mxu0 0.0
    %1511 = vmatpush2.msra.mxu0 0.0
    %1512 = vmatprep.subr.mxu0 0.0
    %1513 = vmatpush2.msra.mxu0 0.0
    %1514 = vmatprep.subr.mxu0 0.0
    %1515 = vmatpush2.msra.mxu0 0.0
    %1516 = vmatprep.subr.mxu0 0.0
    %1517 = vmatpush2.msra.mxu0 0.0
    %1518 = vmatprep.subr.mxu0 0.0
    %1519 = vmatpush2.msra.mxu0 0.0
    %1520 = vmatprep.subr.mxu0 0.0
    %1521 = vmatpush2.msra.mxu0 0.0
    %1522 = vmatprep.subr.mxu0 0.0
    %1523 = vmatpush2.msra.mxu0 0.0
    %1524 = vmatprep.subr.mxu0 0.0
    %1525 = vmatpush2.msra.mxu0 0.0
    %1526 = vmatprep.subr.mxu0 0.0
    %1527 = vmatpush2.msra.mxu0 0.0
    %1528 = vmatprep.mubr.f32.mxu0 0.0
    %1529 = vmatmul.mubr.f32.gmra.mxu0 %v1050
    %v1530 = vpop.f32.mrf.mxu0
    %v1531 = vadd.f32 0.0, %v1530
    %v1532 = vpop.f32.mrf.mxu0
    %1533 = vmatprep.mubr.f32.mxu0 0.0
    %1534 = vmatmul.mubr.f32.gmra.mxu0 %v1053
    %v1535 = vpop.f32.mrf.mxu0
    %v1536 = vadd.f32 0.0, %v1535
    %v1537 = vpop.f32.mrf.mxu0
    %1538 = vmatprep.mubr.f32.mxu0 0.0
    %1539 = vmatmul.mubr.f32.gmra.mxu0 %v1056
    %v1540 = vpop.f32.mrf.mxu0
    %v1541 = vadd.f32 0.0, %v1540
    %v1542 = vpop.f32.mrf.mxu0
    %1543 = vmatprep.mubr.f32.mxu0 0.0
    %1544 = vmatmul.mubr.f32.gmra.mxu0 %v1059
    %v1545 = vpop.f32.mrf.mxu0
    %v1546 = vadd.f32 0.0, %v1545
    %v1547 = vpop.f32.mrf.mxu0
    %1548 = vmatprep.mubr.f32.mxu0 0.0
    %1549 = vmatmul.mubr.f32.gmra.mxu0 %v1062
    %v1550 = vpop.f32.mrf.mxu0
    %v1551 = vadd.f32 0.0, %v1550
    %v1552 = vpop.f32.mrf.mxu0
    %1553 = vmatprep.mubr.f32.mxu0 0.0
    %1554 = vmatmul.mubr.f32.gmra.mxu0 %v1065
    %v1555 = vpop.f32.mrf.mxu0
    %v1556 = vadd.f32 0.0, %v1555
    %v1557 = vpop.f32.mrf.mxu0
    %1558 = vdwg.mxu0
    %v1559 = vadd.f32 %v83, %v1531
    %v1560 = vadd.f32 %v84, %v1536
    %v1561 = vadd.f32 %v85, %v1541
    %v1562 = vadd.f32 %v86, %v1546
    %v1563 = vadd.f32 %v87, %v1551
    %v1564 = vadd.f32 %v88, %v1556
    %v1565 = vsel %vm138, %v1559, 0.0
    %1566 = vadd.xlane.f32.xlu0 %v1565
    %v1567 = vpop.xlane.xlu0 %1566
    %v1568 = vsel %vm138, %v1560, 0.0
    %1569 = vadd.xlane.f32.xlu0 %v1568
    %v1570 = vpop.xlane.xlu0 %1569
    %v1571 = vsel %vm138, %v1561, 0.0
    %1572 = vadd.xlane.f32.xlu0 %v1571
    %v1573 = vpop.xlane.xlu0 %1572
    %v1574 = vsel %vm138, %v1562, 0.0
    %1575 = vadd.xlane.f32.xlu0 %v1574
    %v1576 = vpop.xlane.xlu0 %1575
    %v1577 = vsel %vm138, %v1563, 0.0
    %1578 = vadd.xlane.f32.xlu0 %v1577
    %v1579 = vpop.xlane.xlu0 %1578
    %v1580 = vsel %vm138, %v1564, 0.0
    %1581 = vadd.xlane.f32.xlu0 %v1580
    %v1582 = vpop.xlane.xlu0 %1581
    %v1583 = vmul.f32 %v1567, %v157
    %v1584 = vmul.f32 %v1570, %v157
    %v1585 = vmul.f32 %v1573, %v157
    %v1586 = vmul.f32 %v1576, %v157
    %v1587 = vmul.f32 %v1579, %v157
    %v1588 = vmul.f32 %v1582, %v157
    %v1589 = vsub.f32 %v1559, %v1583
    %v1590 = vsub.f32 %v1560, %v1584
    %v1591 = vsub.f32 %v1561, %v1585
    %v1592 = vsub.f32 %v1562, %v1586
    %v1593 = vsub.f32 %v1563, %v1587
    %v1594 = vsub.f32 %v1564, %v1588
    %v1595 = vmul.f32 %v1589, %v1589
    %v1596 = vmul.f32 %v1590, %v1590
    %v1597 = vmul.f32 %v1591, %v1591
    %v1598 = vmul.f32 %v1592, %v1592
    %v1599 = vmul.f32 %v1593, %v1593
    %v1600 = vmul.f32 %v1594, %v1594
    %v1601 = vsel %vm138, %v1595, 0.0
    %1602 = vadd.xlane.f32.xlu0 %v1601
    %v1603 = vpop.xlane.xlu0 %1602
    %v1604 = vsel %vm138, %v1596, 0.0
    %1605 = vadd.xlane.f32.xlu0 %v1604
    %v1606 = vpop.xlane.xlu0 %1605
    %v1607 = vsel %vm138, %v1597, 0.0
    %1608 = vadd.xlane.f32.xlu0 %v1607
    %v1609 = vpop.xlane.xlu0 %1608
    %v1610 = vsel %vm138, %v1598, 0.0
    %1611 = vadd.xlane.f32.xlu0 %v1610
    %v1612 = vpop.xlane.xlu0 %1611
    %v1613 = vsel %vm138, %v1599, 0.0
    %1614 = vadd.xlane.f32.xlu0 %v1613
    %v1615 = vpop.xlane.xlu0 %1614
    %v1616 = vsel %vm138, %v1600, 0.0
    %1617 = vadd.xlane.f32.xlu0 %v1616
    %v1618 = vpop.xlane.xlu0 %1617
    %v1619 = vmul.f32 %v1603, %v157
    %v1620 = vmul.f32 %v1606, %v157
    %v1621 = vmul.f32 %v1609, %v157
    %v1622 = vmul.f32 %v1612, %v157
    %v1623 = vmul.f32 %v1615, %v157
    %v1624 = vmul.f32 %v1618, %v157
    %v1625 = vadd.f32 %v1619, 1e-05
    %v1626 = vadd.f32 %v1620, 1e-05
    %v1627 = vadd.f32 %v1621, 1e-05
    %v1628 = vadd.f32 %v1622, 1e-05
    %v1629 = vadd.f32 %v1623, 1e-05
    %v1630 = vadd.f32 %v1624, 1e-05
    %v1631 = vrsqrt.pop %v1625
    %v1632 = vrsqrt.pop %v1626
    %v1633 = vrsqrt.pop %v1627
    %v1634 = vrsqrt.pop %v1628
    %v1635 = vrsqrt.pop %v1629
    %v1636 = vrsqrt.pop %v1630
    %v1637 = vmul.f32 %v1589, %v1631
    %v1638 = vmul.f32 %v1590, %v1632
    %v1639 = vmul.f32 %v1591, %v1633
    %v1640 = vmul.f32 %v1592, %v1634
    %v1641 = vmul.f32 %v1593, %v1635
    %v1642 = vmul.f32 %v1594, %v1636
    %v1643 = vlaneseq
    %v1644 = vshrl.u32 %v1643, 7
    %v1645 = vsub.s32 0, %v1644
    %v1646 = vrot.slane %v133, %v1645
    %v1647 = vmul.f32 %v1637, %v1646
    %v1648 = vmul.f32 %v1638, %v1646
    %v1649 = vmul.f32 %v1639, %v1646
    %v1650 = vmul.f32 %v1640, %v1646
    %v1651 = vmul.f32 %v1641, %v1646
    %v1652 = vmul.f32 %v1642, %v1646
    %v1653 = vlaneseq
    %v1654 = vshrl.u32 %v1653, 7
    %v1655 = vsub.s32 0, %v1654
    %v1656 = vrot.slane %v134, %v1655
    %v1657 = vadd.f32 %v1647, %v1656
    %v1658 = vadd.f32 %v1648, %v1656
    %v1659 = vadd.f32 %v1649, %v1656
    %v1660 = vadd.f32 %v1650, %v1656
    %v1661 = vadd.f32 %v1651, %v1656
    %v1662 = vadd.f32 %v1652, %v1656
    %v1663 = vlaneseq
    %v1664 = vshrl.u32 %v1663, 7
    %v1665 = vsub.s32 0, %v1664
    %v1666 = vrot.slane %v135, %v1665
    %v1668 = vsel %vm138, %v1657, 0
    %v1671 = vsel %vm138, %v1658, 0
    %v1674 = vsel %vm138, %v1659, 0
    %v1677 = vsel %vm138, %v1660, 0
    %v1680 = vsel %vm138, %v1661, 0
    %v1683 = vsel %vm138, %v1662, 0
    %1685 = vmatprep.subr.mxu0 0.0
    %1686 = vmatpush1.msra.mxu0 0.0
    %1687 = vmatprep.subr.mxu0 0.0
    %1688 = vmatpush1.msra.mxu0 0.0
    %1689 = vmatprep.subr.mxu0 0.0
    %1690 = vmatpush1.msra.mxu0 0.0
    %1691 = vmatprep.subr.mxu0 0.0
    %1692 = vmatpush1.msra.mxu0 0.0
    %1693 = vmatprep.subr.mxu0 0.0
    %1694 = vmatpush1.msra.mxu0 0.0
    %1695 = vmatprep.subr.mxu0 0.0
    %1696 = vmatpush1.msra.mxu0 0.0
    %1697 = vmatprep.subr.mxu0 0.0
    %1698 = vmatpush1.msra.mxu0 0.0
    %1699 = vmatprep.subr.mxu0 0.0
    %1700 = vmatpush1.msra.mxu0 0.0
    %1701 = vmatprep.subr.mxu0 0.0
    %1702 = vmatpush1.msra.mxu0 %v113
    %1703 = vmatprep.subr.mxu0 0.0
    %1704 = vmatpush1.msra.mxu0 %v112
    %1705 = vmatprep.subr.mxu0 0.0
    %1706 = vmatpush1.msra.mxu0 %v111
    %1707 = vmatprep.subr.mxu0 0.0
    %1708 = vmatpush1.msra.mxu0 %v110
    %1709 = vmatprep.subr.mxu0 0.0
    %1710 = vmatpush1.msra.mxu0 %v109
    %1711 = vmatprep.subr.mxu0 0.0
    %1712 = vmatpush1.msra.mxu0 %v108
    %1713 = vmatprep.subr.mxu0 0.0
    %1714 = vmatpush1.msra.mxu0 %v107
    %1715 = vmatprep.subr.mxu0 0.0
    %1716 = vmatpush1.msra.mxu0 %v106
    %1717 = vmatprep.subr.mxu0 0.0
    %1718 = vmatpush2.msra.mxu0 0.0
    %1719 = vmatprep.subr.mxu0 0.0
    %1720 = vmatpush2.msra.mxu0 0.0
    %1721 = vmatprep.subr.mxu0 0.0
    %1722 = vmatpush2.msra.mxu0 0.0
    %1723 = vmatprep.subr.mxu0 0.0
    %1724 = vmatpush2.msra.mxu0 0.0
    %1725 = vmatprep.subr.mxu0 0.0
    %1726 = vmatpush2.msra.mxu0 0.0
    %1727 = vmatprep.subr.mxu0 0.0
    %1728 = vmatpush2.msra.mxu0 0.0
    %1729 = vmatprep.subr.mxu0 0.0
    %1730 = vmatpush2.msra.mxu0 0.0
    %1731 = vmatprep.subr.mxu0 0.0
    %1732 = vmatpush2.msra.mxu0 0.0
    %1733 = vmatprep.subr.mxu0 0.0
    %1734 = vmatpush2.msra.mxu0 0.0
    %1735 = vmatprep.subr.mxu0 0.0
    %1736 = vmatpush2.msra.mxu0 0.0
    %1737 = vmatprep.subr.mxu0 0.0
    %1738 = vmatpush2.msra.mxu0 0.0
    %1739 = vmatprep.subr.mxu0 0.0
    %1740 = vmatpush2.msra.mxu0 0.0
    %1741 = vmatprep.subr.mxu0 0.0
    %1742 = vmatpush2.msra.mxu0 0.0
    %1743 = vmatprep.subr.mxu0 0.0
    %1744 = vmatpush2.msra.mxu0 0.0
    %1745 = vmatprep.subr.mxu0 0.0
    %1746 = vmatpush2.msra.mxu0 0.0
    %1747 = vmatprep.subr.mxu0 0.0
    %1748 = vmatpush2.msra.mxu0 0.0
    %1749 = vmatprep.mubr.f32.mxu0 0.0
    %1750 = vmatmul.mubr.f32.gmra.mxu0 %v1668
    %v1751 = vpop.f32.mrf.mxu0
    %v1752 = vadd.f32 %v1666, %v1751
    %v1753 = vpop.f32.mrf.mxu0
    %1754 = vmatprep.mubr.f32.mxu0 0.0
    %1755 = vmatmul.mubr.f32.gmra.mxu0 %v1671
    %v1756 = vpop.f32.mrf.mxu0
    %v1757 = vadd.f32 %v1666, %v1756
    %v1758 = vpop.f32.mrf.mxu0
    %1759 = vmatprep.mubr.f32.mxu0 0.0
    %1760 = vmatmul.mubr.f32.gmra.mxu0 %v1674
    %v1761 = vpop.f32.mrf.mxu0
    %v1762 = vadd.f32 %v1666, %v1761
    %v1763 = vpop.f32.mrf.mxu0
    %1764 = vmatprep.mubr.f32.mxu0 0.0
    %1765 = vmatmul.mubr.f32.gmra.mxu0 %v1677
    %v1766 = vpop.f32.mrf.mxu0
    %v1767 = vadd.f32 %v1666, %v1766
    %v1768 = vpop.f32.mrf.mxu0
    %1769 = vmatprep.mubr.f32.mxu0 0.0
    %1770 = vmatmul.mubr.f32.gmra.mxu0 %v1680
    %v1771 = vpop.f32.mrf.mxu0
    %v1772 = vadd.f32 %v1666, %v1771
    %v1773 = vpop.f32.mrf.mxu0
    %1774 = vmatprep.mubr.f32.mxu0 0.0
    %1775 = vmatmul.mubr.f32.gmra.mxu0 %v1683
    %v1776 = vpop.f32.mrf.mxu0
    %v1777 = vadd.f32 %v1666, %v1776
    %v1778 = vpop.f32.mrf.mxu0
    %1779 = vdwg.mxu0
    %v1780 = vmax.f32 %v1752, 0.0
    %v1781 = vmax.f32 %v1757, 0.0
    %v1782 = vmax.f32 %v1762, 0.0
    %v1783 = vmax.f32 %v1767, 0.0
    %v1784 = vmax.f32 %v1772, 0.0
    %v1785 = vmax.f32 %v1777, 0.0
    %v1786 = vlaneseq
    %v1787 = vshrl.u32 %v1786, 7
    %v1788 = vsub.s32 0, %v1787
    %v1789 = vrot.slane %v136, %v1788
    %v1791 = vsel %vm138, %v1780, 0
    %v1794 = vsel %vm138, %v1781, 0
    %v1797 = vsel %vm138, %v1782, 0
    %v1800 = vsel %vm138, %v1783, 0
    %v1803 = vsel %vm138, %v1784, 0
    %v1806 = vsel %vm138, %v1785, 0
    %1808 = vmatprep.subr.mxu0 0.0
    %1809 = vmatpush1.msra.mxu0 0.0
    %1810 = vmatprep.subr.mxu0 0.0
    %1811 = vmatpush1.msra.mxu0 0.0
    %1812 = vmatprep.subr.mxu0 0.0
    %1813 = vmatpush1.msra.mxu0 0.0
    %1814 = vmatprep.subr.mxu0 0.0
    %1815 = vmatpush1.msra.mxu0 0.0
    %1816 = vmatprep.subr.mxu0 0.0
    %1817 = vmatpush1.msra.mxu0 0.0
    %1818 = vmatprep.subr.mxu0 0.0
    %1819 = vmatpush1.msra.mxu0 0.0
    %1820 = vmatprep.subr.mxu0 0.0
    %1821 = vmatpush1.msra.mxu0 0.0
    %1822 = vmatprep.subr.mxu0 0.0
    %1823 = vmatpush1.msra.mxu0 0.0
    %1824 = vmatprep.subr.mxu0 0.0
    %1825 = vmatpush1.msra.mxu0 %v121
    %1826 = vmatprep.subr.mxu0 0.0
    %1827 = vmatpush1.msra.mxu0 %v120
    %1828 = vmatprep.subr.mxu0 0.0
    %1829 = vmatpush1.msra.mxu0 %v119
    %1830 = vmatprep.subr.mxu0 0.0
    %1831 = vmatpush1.msra.mxu0 %v118
    %1832 = vmatprep.subr.mxu0 0.0
    %1833 = vmatpush1.msra.mxu0 %v117
    %1834 = vmatprep.subr.mxu0 0.0
    %1835 = vmatpush1.msra.mxu0 %v116
    %1836 = vmatprep.subr.mxu0 0.0
    %1837 = vmatpush1.msra.mxu0 %v115
    %1838 = vmatprep.subr.mxu0 0.0
    %1839 = vmatpush1.msra.mxu0 %v114
    %1840 = vmatprep.subr.mxu0 0.0
    %1841 = vmatpush2.msra.mxu0 0.0
    %1842 = vmatprep.subr.mxu0 0.0
    %1843 = vmatpush2.msra.mxu0 0.0
    %1844 = vmatprep.subr.mxu0 0.0
    %1845 = vmatpush2.msra.mxu0 0.0
    %1846 = vmatprep.subr.mxu0 0.0
    %1847 = vmatpush2.msra.mxu0 0.0
    %1848 = vmatprep.subr.mxu0 0.0
    %1849 = vmatpush2.msra.mxu0 0.0
    %1850 = vmatprep.subr.mxu0 0.0
    %1851 = vmatpush2.msra.mxu0 0.0
    %1852 = vmatprep.subr.mxu0 0.0
    %1853 = vmatpush2.msra.mxu0 0.0
    %1854 = vmatprep.subr.mxu0 0.0
    %1855 = vmatpush2.msra.mxu0 0.0
    %1856 = vmatprep.subr.mxu0 0.0
    %1857 = vmatpush2.msra.mxu0 0.0
    %1858 = vmatprep.subr.mxu0 0.0
    %1859 = vmatpush2.msra.mxu0 0.0
    %1860 = vmatprep.subr.mxu0 0.0
    %1861 = vmatpush2.msra.mxu0 0.0
    %1862 = vmatprep.subr.mxu0 0.0
    %1863 = vmatpush2.msra.mxu0 0.0
    %1864 = vmatprep.subr.mxu0 0.0
    %1865 = vmatpush2.msra.mxu0 0.0
    %1866 = vmatprep.subr.mxu0 0.0
    %1867 = vmatpush2.msra.mxu0 0.0
    %1868 = vmatprep.subr.mxu0 0.0
    %1869 = vmatpush2.msra.mxu0 0.0
    %1870 = vmatprep.subr.mxu0 0.0
    %1871 = vmatpush2.msra.mxu0 0.0
    %1872 = vmatprep.mubr.f32.mxu0 0.0
    %1873 = vmatmul.mubr.f32.gmra.mxu0 %v1791
    %v1874 = vpop.f32.mrf.mxu0
    %v1875 = vadd.f32 %v1789, %v1874
    %v1876 = vpop.f32.mrf.mxu0
    %1877 = vmatprep.mubr.f32.mxu0 0.0
    %1878 = vmatmul.mubr.f32.gmra.mxu0 %v1794
    %v1879 = vpop.f32.mrf.mxu0
    %v1880 = vadd.f32 %v1789, %v1879
    %v1881 = vpop.f32.mrf.mxu0
    %1882 = vmatprep.mubr.f32.mxu0 0.0
    %1883 = vmatmul.mubr.f32.gmra.mxu0 %v1797
    %v1884 = vpop.f32.mrf.mxu0
    %v1885 = vadd.f32 %v1789, %v1884
    %v1886 = vpop.f32.mrf.mxu0
    %1887 = vmatprep.mubr.f32.mxu0 0.0
    %1888 = vmatmul.mubr.f32.gmra.mxu0 %v1800
    %v1889 = vpop.f32.mrf.mxu0
    %v1890 = vadd.f32 %v1789, %v1889
    %v1891 = vpop.f32.mrf.mxu0
    %1892 = vmatprep.mubr.f32.mxu0 0.0
    %1893 = vmatmul.mubr.f32.gmra.mxu0 %v1803
    %v1894 = vpop.f32.mrf.mxu0
    %v1895 = vadd.f32 %v1789, %v1894
    %v1896 = vpop.f32.mrf.mxu0
    %1897 = vmatprep.mubr.f32.mxu0 0.0
    %1898 = vmatmul.mubr.f32.gmra.mxu0 %v1806
    %v1899 = vpop.f32.mrf.mxu0
    %v1900 = vadd.f32 %v1789, %v1899
    %v1901 = vpop.f32.mrf.mxu0
    %1902 = vdwg.mxu0
    %v1903 = vlaneseq
    %v1904 = vshrl.u32 %v1903, 7
    %v1905 = vsub.s32 0, %v1904
    %v1906 = vrot.slane %v137, %v1905
    %v1908 = vsel %vm138, %v1875, 0
    %v1911 = vsel %vm138, %v1880, 0
    %v1914 = vsel %vm138, %v1885, 0
    %v1917 = vsel %vm138, %v1890, 0
    %v1920 = vsel %vm138, %v1895, 0
    %v1923 = vsel %vm138, %v1900, 0
    %1925 = vmatprep.subr.mxu0 0.0
    %1926 = vmatpush1.msra.mxu0 0.0
    %1927 = vmatprep.subr.mxu0 0.0
    %1928 = vmatpush1.msra.mxu0 0.0
    %1929 = vmatprep.subr.mxu0 0.0
    %1930 = vmatpush1.msra.mxu0 0.0
    %1931 = vmatprep.subr.mxu0 0.0
    %1932 = vmatpush1.msra.mxu0 0.0
    %1933 = vmatprep.subr.mxu0 0.0
    %1934 = vmatpush1.msra.mxu0 0.0
    %1935 = vmatprep.subr.mxu0 0.0
    %1936 = vmatpush1.msra.mxu0 0.0
    %1937 = vmatprep.subr.mxu0 0.0
    %1938 = vmatpush1.msra.mxu0 0.0
    %1939 = vmatprep.subr.mxu0 0.0
    %1940 = vmatpush1.msra.mxu0 0.0
    %1941 = vmatprep.subr.mxu0 0.0
    %1942 = vmatpush1.msra.mxu0 %v129
    %1943 = vmatprep.subr.mxu0 0.0
    %1944 = vmatpush1.msra.mxu0 %v128
    %1945 = vmatprep.subr.mxu0 0.0
    %1946 = vmatpush1.msra.mxu0 %v127
    %1947 = vmatprep.subr.mxu0 0.0
    %1948 = vmatpush1.msra.mxu0 %v126
    %1949 = vmatprep.subr.mxu0 0.0
    %1950 = vmatpush1.msra.mxu0 %v125
    %1951 = vmatprep.subr.mxu0 0.0
    %1952 = vmatpush1.msra.mxu0 %v124
    %1953 = vmatprep.subr.mxu0 0.0
    %1954 = vmatpush1.msra.mxu0 %v123
    %1955 = vmatprep.subr.mxu0 0.0
    %1956 = vmatpush1.msra.mxu0 %v122
    %1957 = vmatprep.subr.mxu0 0.0
    %1958 = vmatpush2.msra.mxu0 0.0
    %1959 = vmatprep.subr.mxu0 0.0
    %1960 = vmatpush2.msra.mxu0 0.0
    %1961 = vmatprep.subr.mxu0 0.0
    %1962 = vmatpush2.msra.mxu0 0.0
    %1963 = vmatprep.subr.mxu0 0.0
    %1964 = vmatpush2.msra.mxu0 0.0
    %1965 = vmatprep.subr.mxu0 0.0
    %1966 = vmatpush2.msra.mxu0 0.0
    %1967 = vmatprep.subr.mxu0 0.0
    %1968 = vmatpush2.msra.mxu0 0.0
    %1969 = vmatprep.subr.mxu0 0.0
    %1970 = vmatpush2.msra.mxu0 0.0
    %1971 = vmatprep.subr.mxu0 0.0
    %1972 = vmatpush2.msra.mxu0 0.0
    %1973 = vmatprep.subr.mxu0 0.0
    %1974 = vmatpush2.msra.mxu0 0.0
    %1975 = vmatprep.subr.mxu0 0.0
    %1976 = vmatpush2.msra.mxu0 0.0
    %1977 = vmatprep.subr.mxu0 0.0
    %1978 = vmatpush2.msra.mxu0 0.0
    %1979 = vmatprep.subr.mxu0 0.0
    %1980 = vmatpush2.msra.mxu0 0.0
    %1981 = vmatprep.subr.mxu0 0.0
    %1982 = vmatpush2.msra.mxu0 0.0
    %1983 = vmatprep.subr.mxu0 0.0
    %1984 = vmatpush2.msra.mxu0 0.0
    %1985 = vmatprep.subr.mxu0 0.0
    %1986 = vmatpush2.msra.mxu0 0.0
    %1987 = vmatprep.subr.mxu0 0.0
    %1988 = vmatpush2.msra.mxu0 0.0
    %1989 = vmatprep.mubr.f32.mxu0 0.0
    %1990 = vmatmul.mubr.f32.gmra.mxu0 %v1908
    %v1991 = vpop.f32.mrf.mxu0
    %v1992 = vadd.f32 %v1906, %v1991
    %v1993 = vpop.f32.mrf.mxu0
    %1994 = vmatprep.mubr.f32.mxu0 0.0
    %1995 = vmatmul.mubr.f32.gmra.mxu0 %v1911
    %v1996 = vpop.f32.mrf.mxu0
    %v1997 = vadd.f32 %v1906, %v1996
    %v1998 = vpop.f32.mrf.mxu0
    %1999 = vmatprep.mubr.f32.mxu0 0.0
    %2000 = vmatmul.mubr.f32.gmra.mxu0 %v1914
    %v2001 = vpop.f32.mrf.mxu0
    %v2002 = vadd.f32 %v1906, %v2001
    %v2003 = vpop.f32.mrf.mxu0
    %2004 = vmatprep.mubr.f32.mxu0 0.0
    %2005 = vmatmul.mubr.f32.gmra.mxu0 %v1917
    %v2006 = vpop.f32.mrf.mxu0
    %v2007 = vadd.f32 %v1906, %v2006
    %v2008 = vpop.f32.mrf.mxu0
    %2009 = vmatprep.mubr.f32.mxu0 0.0
    %2010 = vmatmul.mubr.f32.gmra.mxu0 %v1920
    %v2011 = vpop.f32.mrf.mxu0
    %v2012 = vadd.f32 %v1906, %v2011
    %v2013 = vpop.f32.mrf.mxu0
    %2014 = vmatprep.mubr.f32.mxu0 0.0
    %2015 = vmatmul.mubr.f32.gmra.mxu0 %v1923
    %v2016 = vpop.f32.mrf.mxu0
    %v2017 = vadd.f32 %v1906, %v2016
    %v2018 = vpop.f32.mrf.mxu0
    %2019 = vdwg.mxu0
    %v2020 = vadd.f32 %v1559, %v1992
    %v2021 = vadd.f32 %v1560, %v1997
    %v2022 = vadd.f32 %v1561, %v2002
    %v2023 = vadd.f32 %v1562, %v2007
    %v2024 = vadd.f32 %v1563, %v2012
    %v2025 = vadd.f32 %v1564, %v2017
    %s2026 = scalar_lea.vmem %s4, 64
    %v2027 = vld [vmem:[%s2026] sm:$0xff]
    %v2028 = vld [vmem:[%s2026 + $0x8] sm:$0xff]
    %v2029 = vld [vmem:[%s2026 + $0x10] sm:$0xff]
    %v2030 = vld [vmem:[%s2026 + $0x18] sm:$0xff]
    %v2031 = vld [vmem:[%s2026 + $0x20] sm:$0xff]
    %v2032 = vld [vmem:[%s2026 + $0x28] sm:$0xff]
    %v2033 = vld [vmem:[%s2026 + $0x30] sm:$0xff]
    %v2034 = vld [vmem:[%s2026 + $0x38] sm:$0xff]
    %s2035 = scalar_lea.vmem %s5, 1
    %v2036 = vld [vmem:[%s2035] sm:$0x1]
    %s2037 = scalar_lea.vmem %s6, 256
    %v2038 = vld [vmem:[%s2037] sm:$0xff]
    %v2039 = vld [vmem:[%s2037 + $0x8] sm:$0xff]
    %v2040 = vld [vmem:[%s2037 + $0x10] sm:$0xff]
    %v2041 = vld [vmem:[%s2037 + $0x18] sm:$0xff]
    %v2042 = vld [vmem:[%s2037 + $0x20] sm:$0xff]
    %v2043 = vld [vmem:[%s2037 + $0x28] sm:$0xff]
    %v2044 = vld [vmem:[%s2037 + $0x30] sm:$0xff]
    %v2045 = vld [vmem:[%s2037 + $0x38] sm:$0xff]
    %v2046 = vld [vmem:[%s2037 + $0x40] sm:$0xff]
    %v2047 = vld [vmem:[%s2037 + $0x48] sm:$0xff]
    %v2048 = vld [vmem:[%s2037 + $0x50] sm:$0xff]
    %v2049 = vld [vmem:[%s2037 + $0x58] sm:$0xff]
    %v2050 = vld [vmem:[%s2037 + $0x60] sm:$0xff]
    %v2051 = vld [vmem:[%s2037 + $0x68] sm:$0xff]
    %v2052 = vld [vmem:[%s2037 + $0x70] sm:$0xff]
    %v2053 = vld [vmem:[%s2037 + $0x78] sm:$0xff]
    %v2054 = vld [vmem:[%s2037 + $0x80] sm:$0xff]
    %v2055 = vld [vmem:[%s2037 + $0x88] sm:$0xff]
    %v2056 = vld [vmem:[%s2037 + $0x90] sm:$0xff]
    %v2057 = vld [vmem:[%s2037 + $0x98] sm:$0xff]
    %v2058 = vld [vmem:[%s2037 + $0xa0] sm:$0xff]
    %v2059 = vld [vmem:[%s2037 + $0xa8] sm:$0xff]
    %v2060 = vld [vmem:[%s2037 + $0xb0] sm:$0xff]
    %v2061 = vld [vmem:[%s2037 + $0xb8] sm:$0xff]
    %v2062 = vld [vmem:[%s2037 + $0xc0] sm:$0xff]
    %v2063 = vld [vmem:[%s2037 + $0xc8] sm:$0xff]
    %v2064 = vld [vmem:[%s2037 + $0xd0] sm:$0xff]
    %v2065 = vld [vmem:[%s2037 + $0xd8] sm:$0xff]
    %v2066 = vld [vmem:[%s2037 + $0xe0] sm:$0xff]
    %v2067 = vld [vmem:[%s2037 + $0xe8] sm:$0xff]
    %v2068 = vld [vmem:[%s2037 + $0xf0] sm:$0xff]
    %v2069 = vld [vmem:[%s2037 + $0xf8] sm:$0xff]
    %s2070 = scalar_lea.vmem %s7, 8
    %v2071 = vld [vmem:[%s2070] sm:$0x1]
    %v2072 = vld [vmem:[%s2070 + $0x1] sm:$0x1]
    %v2073 = vld [vmem:[%s2070 + $0x2] sm:$0x1]
    %v2074 = vld [vmem:[%s2070 + $0x3] sm:$0x1]
    %v2075 = vld [vmem:[%s2070 + $0x4] sm:$0x1]
    %v2076 = vld [vmem:[%s2070 + $0x5] sm:$0x1]
    %v2077 = vld [vmem:[%s2070 + $0x6] sm:$0x1]
    %v2078 = vld [vmem:[%s2070 + $0x7] sm:$0x1]
    %v2079 = vsel %vm138, %v2020, 0.0
    %2080 = vadd.xlane.f32.xlu0 %v2079
    %v2081 = vpop.xlane.xlu0 %2080
    %v2082 = vsel %vm138, %v2021, 0.0
    %2083 = vadd.xlane.f32.xlu0 %v2082
    %v2084 = vpop.xlane.xlu0 %2083
    %v2085 = vsel %vm138, %v2022, 0.0
    %2086 = vadd.xlane.f32.xlu0 %v2085
    %v2087 = vpop.xlane.xlu0 %2086
    %v2088 = vsel %vm138, %v2023, 0.0
    %2089 = vadd.xlane.f32.xlu0 %v2088
    %v2090 = vpop.xlane.xlu0 %2089
    %v2091 = vsel %vm138, %v2024, 0.0
    %2092 = vadd.xlane.f32.xlu0 %v2091
    %v2093 = vpop.xlane.xlu0 %2092
    %v2094 = vsel %vm138, %v2025, 0.0
    %2095 = vadd.xlane.f32.xlu0 %v2094
    %v2096 = vpop.xlane.xlu0 %2095
    %v2097 = vmul.f32 %v2081, %v157
    %v2098 = vmul.f32 %v2084, %v157
    %v2099 = vmul.f32 %v2087, %v157
    %v2100 = vmul.f32 %v2090, %v157
    %v2101 = vmul.f32 %v2093, %v157
    %v2102 = vmul.f32 %v2096, %v157
    %v2103 = vsub.f32 %v2020, %v2097
    %v2104 = vsub.f32 %v2021, %v2098
    %v2105 = vsub.f32 %v2022, %v2099
    %v2106 = vsub.f32 %v2023, %v2100
    %v2107 = vsub.f32 %v2024, %v2101
    %v2108 = vsub.f32 %v2025, %v2102
    %v2109 = vmul.f32 %v2103, %v2103
    %v2110 = vmul.f32 %v2104, %v2104
    %v2111 = vmul.f32 %v2105, %v2105
    %v2112 = vmul.f32 %v2106, %v2106
    %v2113 = vmul.f32 %v2107, %v2107
    %v2114 = vmul.f32 %v2108, %v2108
    %v2115 = vsel %vm138, %v2109, 0.0
    %2116 = vadd.xlane.f32.xlu0 %v2115
    %v2117 = vpop.xlane.xlu0 %2116
    %v2118 = vsel %vm138, %v2110, 0.0
    %2119 = vadd.xlane.f32.xlu0 %v2118
    %v2120 = vpop.xlane.xlu0 %2119
    %v2121 = vsel %vm138, %v2111, 0.0
    %2122 = vadd.xlane.f32.xlu0 %v2121
    %v2123 = vpop.xlane.xlu0 %2122
    %v2124 = vsel %vm138, %v2112, 0.0
    %2125 = vadd.xlane.f32.xlu0 %v2124
    %v2126 = vpop.xlane.xlu0 %2125
    %v2127 = vsel %vm138, %v2113, 0.0
    %2128 = vadd.xlane.f32.xlu0 %v2127
    %v2129 = vpop.xlane.xlu0 %2128
    %v2130 = vsel %vm138, %v2114, 0.0
    %2131 = vadd.xlane.f32.xlu0 %v2130
    %v2132 = vpop.xlane.xlu0 %2131
    %v2133 = vmul.f32 %v2117, %v157
    %v2134 = vmul.f32 %v2120, %v157
    %v2135 = vmul.f32 %v2123, %v157
    %v2136 = vmul.f32 %v2126, %v157
    %v2137 = vmul.f32 %v2129, %v157
    %v2138 = vmul.f32 %v2132, %v157
    %v2139 = vadd.f32 %v2133, 1e-05
    %v2140 = vadd.f32 %v2134, 1e-05
    %v2141 = vadd.f32 %v2135, 1e-05
    %v2142 = vadd.f32 %v2136, 1e-05
    %v2143 = vadd.f32 %v2137, 1e-05
    %v2144 = vadd.f32 %v2138, 1e-05
    %v2145 = vrsqrt.pop %v2139
    %v2146 = vrsqrt.pop %v2140
    %v2147 = vrsqrt.pop %v2141
    %v2148 = vrsqrt.pop %v2142
    %v2149 = vrsqrt.pop %v2143
    %v2150 = vrsqrt.pop %v2144
    %v2151 = vmul.f32 %v2103, %v2145
    %v2152 = vmul.f32 %v2104, %v2146
    %v2153 = vmul.f32 %v2105, %v2147
    %v2154 = vmul.f32 %v2106, %v2148
    %v2155 = vmul.f32 %v2107, %v2149
    %v2156 = vmul.f32 %v2108, %v2150
    %v2157 = vlaneseq
    %v2158 = vshrl.u32 %v2157, 7
    %v2159 = vsub.s32 0, %v2158
    %v2160 = vrot.slane %v2072, %v2159
    %v2161 = vmul.f32 %v2151, %v2160
    %v2162 = vmul.f32 %v2152, %v2160
    %v2163 = vmul.f32 %v2153, %v2160
    %v2164 = vmul.f32 %v2154, %v2160
    %v2165 = vmul.f32 %v2155, %v2160
    %v2166 = vmul.f32 %v2156, %v2160
    %v2167 = vlaneseq
    %v2168 = vshrl.u32 %v2167, 7
    %v2169 = vsub.s32 0, %v2168
    %v2170 = vrot.slane %v2073, %v2169
    %v2171 = vadd.f32 %v2161, %v2170
    %v2172 = vadd.f32 %v2162, %v2170
    %v2173 = vadd.f32 %v2163, %v2170
    %v2174 = vadd.f32 %v2164, %v2170
    %v2175 = vadd.f32 %v2165, %v2170
    %v2176 = vadd.f32 %v2166, %v2170
    %v2177 = vlaneseq
    %v2178 = vshrl.u32 %v2177, 7
    %v2179 = vsub.s32 0, %v2178
    %v2180 = vrot.slane %v2071, %v2179
    %v2182 = vsel %vm138, %v2171, 0
    %v2185 = vsel %vm138, %v2172, 0
    %v2188 = vsel %vm138, %v2173, 0
    %v2191 = vsel %vm138, %v2174, 0
    %v2194 = vsel %vm138, %v2175, 0
    %v2197 = vsel %vm138, %v2176, 0
    %2199 = vmatprep.subr.mxu0 0.0
    %2200 = vmatpush1.msra.mxu0 0.0
    %2201 = vmatprep.subr.mxu0 0.0
    %2202 = vmatpush1.msra.mxu0 0.0
    %2203 = vmatprep.subr.mxu0 0.0
    %2204 = vmatpush1.msra.mxu0 0.0
    %2205 = vmatprep.subr.mxu0 0.0
    %2206 = vmatpush1.msra.mxu0 0.0
    %2207 = vmatprep.subr.mxu0 0.0
    %2208 = vmatpush1.msra.mxu0 0.0
    %2209 = vmatprep.subr.mxu0 0.0
    %2210 = vmatpush1.msra.mxu0 0.0
    %2211 = vmatprep.subr.mxu0 0.0
    %2212 = vmatpush1.msra.mxu0 0.0
    %2213 = vmatprep.subr.mxu0 0.0
    %2214 = vmatpush1.msra.mxu0 0.0
    %2215 = vmatprep.subr.mxu0 0.0
    %2216 = vmatpush1.msra.mxu0 %v2045
    %2217 = vmatprep.subr.mxu0 0.0
    %2218 = vmatpush1.msra.mxu0 %v2044
    %2219 = vmatprep.subr.mxu0 0.0
    %2220 = vmatpush1.msra.mxu0 %v2043
    %2221 = vmatprep.subr.mxu0 0.0
    %2222 = vmatpush1.msra.mxu0 %v2042
    %2223 = vmatprep.subr.mxu0 0.0
    %2224 = vmatpush1.msra.mxu0 %v2041
    %2225 = vmatprep.subr.mxu0 0.0
    %2226 = vmatpush1.msra.mxu0 %v2040
    %2227 = vmatprep.subr.mxu0 0.0
    %2228 = vmatpush1.msra.mxu0 %v2039
    %2229 = vmatprep.subr.mxu0 0.0
    %2230 = vmatpush1.msra.mxu0 %v2038
    %2231 = vmatprep.subr.mxu0 0.0
    %2232 = vmatpush2.msra.mxu0 0.0
    %2233 = vmatprep.subr.mxu0 0.0
    %2234 = vmatpush2.msra.mxu0 0.0
    %2235 = vmatprep.subr.mxu0 0.0
    %2236 = vmatpush2.msra.mxu0 0.0
    %2237 = vmatprep.subr.mxu0 0.0
    %2238 = vmatpush2.msra.mxu0 0.0
    %2239 = vmatprep.subr.mxu0 0.0
    %2240 = vmatpush2.msra.mxu0 0.0
    %2241 = vmatprep.subr.mxu0 0.0
    %2242 = vmatpush2.msra.mxu0 0.0
    %2243 = vmatprep.subr.mxu0 0.0
    %2244 = vmatpush2.msra.mxu0 0.0
    %2245 = vmatprep.subr.mxu0 0.0
    %2246 = vmatpush2.msra.mxu0 0.0
    %2247 = vmatprep.subr.mxu0 0.0
    %2248 = vmatpush2.msra.mxu0 0.0
    %2249 = vmatprep.subr.mxu0 0.0
    %2250 = vmatpush2.msra.mxu0 0.0
    %2251 = vmatprep.subr.mxu0 0.0
    %2252 = vmatpush2.msra.mxu0 0.0
    %2253 = vmatprep.subr.mxu0 0.0
    %2254 = vmatpush2.msra.mxu0 0.0
    %2255 = vmatprep.subr.mxu0 0.0
    %2256 = vmatpush2.msra.mxu0 0.0
    %2257 = vmatprep.subr.mxu0 0.0
    %2258 = vmatpush2.msra.mxu0 0.0
    %2259 = vmatprep.subr.mxu0 0.0
    %2260 = vmatpush2.msra.mxu0 0.0
    %2261 = vmatprep.subr.mxu0 0.0
    %2262 = vmatpush2.msra.mxu0 0.0
    %2263 = vmatprep.mubr.f32.mxu0 0.0
    %2264 = vmatmul.mubr.f32.gmra.mxu0 %v2182
    %v2265 = vpop.f32.mrf.mxu0
    %v2266 = vadd.f32 %v2180, %v2265
    %v2267 = vpop.f32.mrf.mxu0
    %2268 = vmatprep.mubr.f32.mxu0 0.0
    %2269 = vmatmul.mubr.f32.gmra.mxu0 %v2185
    %v2270 = vpop.f32.mrf.mxu0
    %v2271 = vadd.f32 %v2180, %v2270
    %v2272 = vpop.f32.mrf.mxu0
    %2273 = vmatprep.mubr.f32.mxu0 0.0
    %2274 = vmatmul.mubr.f32.gmra.mxu0 %v2188
    %v2275 = vpop.f32.mrf.mxu0
    %v2276 = vadd.f32 %v2180, %v2275
    %v2277 = vpop.f32.mrf.mxu0
    %2278 = vmatprep.mubr.f32.mxu0 0.0
    %2279 = vmatmul.mubr.f32.gmra.mxu0 %v2191
    %v2280 = vpop.f32.mrf.mxu0
    %v2281 = vadd.f32 %v2180, %v2280
    %v2282 = vpop.f32.mrf.mxu0
    %2283 = vmatprep.mubr.f32.mxu0 0.0
    %2284 = vmatmul.mubr.f32.gmra.mxu0 %v2194
    %v2285 = vpop.f32.mrf.mxu0
    %v2286 = vadd.f32 %v2180, %v2285
    %v2287 = vpop.f32.mrf.mxu0
    %2288 = vmatprep.mubr.f32.mxu0 0.0
    %2289 = vmatmul.mubr.f32.gmra.mxu0 %v2197
    %v2290 = vpop.f32.mrf.mxu0
    %v2291 = vadd.f32 %v2180, %v2290
    %v2292 = vpop.f32.mrf.mxu0
    %2293 = vdwg.mxu0
    %v2295 = vlaneseq
    %v2296 = vshrl.u32 %v2295, 7
    %v2297 = vsub.s32 0, %v2296
    %v2298 = vrot.slane %v2036, %v2297
    %2300 = vmatprep.subr.mxu0 0.0
    %2301 = vmatpush1.msra.mxu0 0.0
    %2302 = vmatprep.subr.mxu0 0.0
    %2303 = vmatpush1.msra.mxu0 0.0
    %2304 = vmatprep.subr.mxu0 0.0
    %2305 = vmatpush1.msra.mxu0 0.0
    %2306 = vmatprep.subr.mxu0 0.0
    %2307 = vmatpush1.msra.mxu0 0.0
    %2308 = vmatprep.subr.mxu0 0.0
    %2309 = vmatpush1.msra.mxu0 0.0
    %2310 = vmatprep.subr.mxu0 0.0
    %2311 = vmatpush1.msra.mxu0 0.0
    %2312 = vmatprep.subr.mxu0 0.0
    %2313 = vmatpush1.msra.mxu0 0.0
    %2314 = vmatprep.subr.mxu0 0.0
    %2315 = vmatpush1.msra.mxu0 0.0
    %2316 = vmatprep.subr.mxu0 0.0
    %2317 = vmatpush1.msra.mxu0 %v2034
    %2318 = vmatprep.subr.mxu0 0.0
    %2319 = vmatpush1.msra.mxu0 %v2033
    %2320 = vmatprep.subr.mxu0 0.0
    %2321 = vmatpush1.msra.mxu0 %v2032
    %2322 = vmatprep.subr.mxu0 0.0
    %2323 = vmatpush1.msra.mxu0 %v2031
    %2324 = vmatprep.subr.mxu0 0.0
    %2325 = vmatpush1.msra.mxu0 %v2030
    %2326 = vmatprep.subr.mxu0 0.0
    %2327 = vmatpush1.msra.mxu0 %v2029
    %2328 = vmatprep.subr.mxu0 0.0
    %2329 = vmatpush1.msra.mxu0 %v2028
    %2330 = vmatprep.subr.mxu0 0.0
    %2331 = vmatpush1.msra.mxu0 %v2027
    %2332 = vmatprep.subr.mxu0 0.0
    %2333 = vmatpush2.msra.mxu0 0.0
    %2334 = vmatprep.subr.mxu0 0.0
    %2335 = vmatpush2.msra.mxu0 0.0
    %2336 = vmatprep.subr.mxu0 0.0
    %2337 = vmatpush2.msra.mxu0 0.0
    %2338 = vmatprep.subr.mxu0 0.0
    %2339 = vmatpush2.msra.mxu0 0.0
    %2340 = vmatprep.subr.mxu0 0.0
    %2341 = vmatpush2.msra.mxu0 0.0
    %2342 = vmatprep.subr.mxu0 0.0
    %2343 = vmatpush2.msra.mxu0 0.0
    %2344 = vmatprep.subr.mxu0 0.0
    %2345 = vmatpush2.msra.mxu0 0.0
    %2346 = vmatprep.subr.mxu0 0.0
    %2347 = vmatpush2.msra.mxu0 0.0
    %2348 = vmatprep.subr.mxu0 0.0
    %2349 = vmatpush2.msra.mxu0 0.0
    %2350 = vmatprep.subr.mxu0 0.0
    %2351 = vmatpush2.msra.mxu0 0.0
    %2352 = vmatprep.subr.mxu0 0.0
    %2353 = vmatpush2.msra.mxu0 0.0
    %2354 = vmatprep.subr.mxu0 0.0
    %2355 = vmatpush2.msra.mxu0 0.0
    %2356 = vmatprep.subr.mxu0 0.0
    %2357 = vmatpush2.msra.mxu0 0.0
    %2358 = vmatprep.subr.mxu0 0.0
    %2359 = vmatpush2.msra.mxu0 0.0
    %2360 = vmatprep.subr.mxu0 0.0
    %2361 = vmatpush2.msra.mxu0 0.0
    %2362 = vmatprep.subr.mxu0 0.0
    %2363 = vmatpush2.msra.mxu0 0.0
    %2364 = vmatprep.mubr.f32.mxu0 0.0
    %2365 = vmatmul.mubr.f32.gmra.mxu0 %v362
    %v2366 = vpop.f32.mrf.mxu0
    %v2367 = vadd.f32 %v2298, %v2366
    %v2368 = vpop.f32.mrf.mxu0
    %2369 = vmatprep.mubr.f32.mxu0 0.0
    %2370 = vmatmul.mubr.f32.gmra.mxu0 %v365
    %v2371 = vpop.f32.mrf.mxu0
    %v2372 = vadd.f32 %v2298, %v2371
    %v2373 = vpop.f32.mrf.mxu0
    %2374 = vmatprep.mubr.f32.mxu0 0.0
    %2375 = vmatmul.mubr.f32.gmra.mxu0 %v368
    %v2376 = vpop.f32.mrf.mxu0
    %v2377 = vadd.f32 %v2298, %v2376
    %v2378 = vpop.f32.mrf.mxu0
    %2379 = vmatprep.mubr.f32.mxu0 0.0
    %2380 = vmatmul.mubr.f32.gmra.mxu0 %v371
    %v2381 = vpop.f32.mrf.mxu0
    %v2382 = vadd.f32 %v2298, %v2381
    %v2383 = vpop.f32.mrf.mxu0
    %2384 = vmatprep.mubr.f32.mxu0 0.0
    %2385 = vmatmul.mubr.f32.gmra.mxu0 %v374
    %v2386 = vpop.f32.mrf.mxu0
    %v2387 = vadd.f32 %v2298, %v2386
    %v2388 = vpop.f32.mrf.mxu0
    %2389 = vmatprep.mubr.f32.mxu0 0.0
    %2390 = vmatmul.mubr.f32.gmra.mxu0 %v377
    %v2391 = vpop.f32.mrf.mxu0
    %v2392 = vadd.f32 %v2298, %v2391
    %v2393 = vpop.f32.mrf.mxu0
    %2394 = vmatprep.mubr.f32.mxu0 0.0
    %2395 = vmatmul.mubr.f32.gmra.mxu0 %v380
    %v2396 = vpop.f32.mrf.mxu0
    %v2397 = vadd.f32 %v2298, %v2396
    %v2398 = vpop.f32.mrf.mxu0
    %2399 = vmatprep.mubr.f32.mxu0 0.0
    %2400 = vmatmul.mubr.f32.gmra.mxu0 %v383
    %v2401 = vpop.f32.mrf.mxu0
    %v2402 = vadd.f32 %v2298, %v2401
    %v2403 = vpop.f32.mrf.mxu0
    %2404 = vmatprep.mubr.f32.mxu0 0.0
    %2405 = vmatmul.mubr.f32.gmra.mxu0 %v386
    %v2406 = vpop.f32.mrf.mxu0
    %v2407 = vadd.f32 %v2298, %v2406
    %v2408 = vpop.f32.mrf.mxu0
    %2409 = vmatprep.mubr.f32.mxu0 0.0
    %2410 = vmatmul.mubr.f32.gmra.mxu0 %v389
    %v2411 = vpop.f32.mrf.mxu0
    %v2412 = vadd.f32 %v2298, %v2411
    %v2413 = vpop.f32.mrf.mxu0
    %2414 = vmatprep.mubr.f32.mxu0 0.0
    %2415 = vmatmul.mubr.f32.gmra.mxu0 %v392
    %v2416 = vpop.f32.mrf.mxu0
    %v2417 = vadd.f32 %v2298, %v2416
    %v2418 = vpop.f32.mrf.mxu0
    %2419 = vmatprep.mubr.f32.mxu0 0.0
    %2420 = vmatmul.mubr.f32.gmra.mxu0 %v395
    %v2421 = vpop.f32.mrf.mxu0
    %v2422 = vadd.f32 %v2298, %v2421
    %v2423 = vpop.f32.mrf.mxu0
    %2424 = vmatprep.mubr.f32.mxu0 0.0
    %2425 = vmatmul.mubr.f32.gmra.mxu0 %v398
    %v2426 = vpop.f32.mrf.mxu0
    %v2427 = vadd.f32 %v2298, %v2426
    %v2428 = vpop.f32.mrf.mxu0
    %2429 = vmatprep.mubr.f32.mxu0 0.0
    %2430 = vmatmul.mubr.f32.gmra.mxu0 %v401
    %v2431 = vpop.f32.mrf.mxu0
    %v2432 = vadd.f32 %v2298, %v2431
    %v2433 = vpop.f32.mrf.mxu0
    %2434 = vmatprep.mubr.f32.mxu0 0.0
    %2435 = vmatmul.mubr.f32.gmra.mxu0 %v404
    %v2436 = vpop.f32.mrf.mxu0
    %v2437 = vadd.f32 %v2298, %v2436
    %v2438 = vpop.f32.mrf.mxu0
    %2439 = vdwg.mxu0
    %2440 = vmatprep.subr.mxu0 0.0
    %2441 = vmatpush1.msra.mxu0 0.0
    %2442 = vmatprep.subr.mxu0 0.0
    %2443 = vmatpush1.msra.mxu0 0.0
    %2444 = vmatprep.subr.mxu0 0.0
    %2445 = vmatpush1.msra.mxu0 0.0
    %2446 = vmatprep.subr.mxu0 0.0
    %2447 = vmatpush1.msra.mxu0 0.0
    %2448 = vmatprep.subr.mxu0 0.0
    %2449 = vmatpush1.msra.mxu0 0.0
    %2450 = vmatprep.subr.mxu0 0.0
    %2451 = vmatpush1.msra.mxu0 0.0
    %2452 = vmatprep.subr.mxu0 0.0
    %2453 = vmatpush1.msra.mxu0 0.0
    %2454 = vmatprep.subr.mxu0 0.0
    %2455 = vmatpush1.msra.mxu0 0.0
    %2456 = vmatprep.subr.mxu0 0.0
    %2457 = vmatpush1.msra.mxu0 0.0
    %2458 = vmatprep.subr.mxu0 0.0
    %2459 = vmatpush1.msra.mxu0 0.0
    %2460 = vmatprep.subr.mxu0 0.0
    %2461 = vmatpush1.msra.mxu0 %v2291
    %2462 = vmatprep.subr.mxu0 0.0
    %2463 = vmatpush1.msra.mxu0 %v2286
    %2464 = vmatprep.subr.mxu0 0.0
    %2465 = vmatpush1.msra.mxu0 %v2281
    %2466 = vmatprep.subr.mxu0 0.0
    %2467 = vmatpush1.msra.mxu0 %v2276
    %2468 = vmatprep.subr.mxu0 0.0
    %2469 = vmatpush1.msra.mxu0 %v2271
    %2470 = vmatprep.subr.mxu0 0.0
    %2471 = vmatpush1.msra.mxu0 %v2266
    %2472 = vmatprep.subr.mxu0 0.0
    %2473 = vmatpush2.msra.mxu0 0.0
    %2474 = vmatprep.subr.mxu0 0.0
    %2475 = vmatpush2.msra.mxu0 0.0
    %2476 = vmatprep.subr.mxu0 0.0
    %2477 = vmatpush2.msra.mxu0 0.0
    %2478 = vmatprep.subr.mxu0 0.0
    %2479 = vmatpush2.msra.mxu0 0.0
    %2480 = vmatprep.subr.mxu0 0.0
    %2481 = vmatpush2.msra.mxu0 0.0
    %2482 = vmatprep.subr.mxu0 0.0
    %2483 = vmatpush2.msra.mxu0 0.0
    %2484 = vmatprep.subr.mxu0 0.0
    %2485 = vmatpush2.msra.mxu0 0.0
    %2486 = vmatprep.subr.mxu0 0.0
    %2487 = vmatpush2.msra.mxu0 0.0
    %2488 = vmatprep.subr.mxu0 0.0
    %2489 = vmatpush2.msra.mxu0 0.0
    %2490 = vmatprep.subr.mxu0 0.0
    %2491 = vmatpush2.msra.mxu0 0.0
    %2492 = vmatprep.subr.mxu0 0.0
    %2493 = vmatpush2.msra.mxu0 0.0
    %2494 = vmatprep.subr.mxu0 0.0
    %2495 = vmatpush2.msra.mxu0 0.0
    %2496 = vmatprep.subr.mxu0 0.0
    %2497 = vmatpush2.msra.mxu0 0.0
    %2498 = vmatprep.subr.mxu0 0.0
    %2499 = vmatpush2.msra.mxu0 0.0
    %2500 = vmatprep.subr.mxu0 0.0
    %2501 = vmatpush2.msra.mxu0 0.0
    %2502 = vmatprep.subr.mxu0 0.0
    %2503 = vmatpush2.msra.mxu0 0.0
    %2504 = vmatprep.mubr.f32.mxu0 0.0
    %2505 = vmatmul.mubr.f32.gmra.mxu0 %v548
    %v2506 = vpop.f32.mrf.mxu0
    %v2507 = vadd.f32 0.0, %v2506
    %v2508 = vpop.f32.mrf.mxu0
    %2509 = vmatprep.mubr.f32.mxu0 0.0
    %2510 = vmatmul.mubr.f32.gmra.mxu0 %v551
    %v2511 = vpop.f32.mrf.mxu0
    %v2512 = vadd.f32 0.0, %v2511
    %v2513 = vpop.f32.mrf.mxu0
    %2514 = vmatprep.mubr.f32.mxu0 0.0
    %2515 = vmatmul.mubr.f32.gmra.mxu0 %v554
    %v2516 = vpop.f32.mrf.mxu0
    %v2517 = vadd.f32 0.0, %v2516
    %v2518 = vpop.f32.mrf.mxu0
    %2519 = vmatprep.mubr.f32.mxu0 0.0
    %2520 = vmatmul.mubr.f32.gmra.mxu0 %v557
    %v2521 = vpop.f32.mrf.mxu0
    %v2522 = vadd.f32 0.0, %v2521
    %v2523 = vpop.f32.mrf.mxu0
    %2524 = vmatprep.mubr.f32.mxu0 0.0
    %2525 = vmatmul.mubr.f32.gmra.mxu0 %v560
    %v2526 = vpop.f32.mrf.mxu0
    %v2527 = vadd.f32 0.0, %v2526
    %v2528 = vpop.f32.mrf.mxu0
    %2529 = vmatprep.mubr.f32.mxu0 0.0
    %2530 = vmatmul.mubr.f32.gmra.mxu0 %v563
    %v2531 = vpop.f32.mrf.mxu0
    %v2532 = vadd.f32 0.0, %v2531
    %v2533 = vpop.f32.mrf.mxu0
    %2534 = vmatprep.mubr.f32.mxu0 0.0
    %2535 = vmatmul.mubr.f32.gmra.mxu0 %v566
    %v2536 = vpop.f32.mrf.mxu0
    %v2537 = vadd.f32 0.0, %v2536
    %v2538 = vpop.f32.mrf.mxu0
    %2539 = vmatprep.mubr.f32.mxu0 0.0
    %2540 = vmatmul.mubr.f32.gmra.mxu0 %v569
    %v2541 = vpop.f32.mrf.mxu0
    %v2542 = vadd.f32 0.0, %v2541
    %v2543 = vpop.f32.mrf.mxu0
    %2544 = vmatprep.mubr.f32.mxu0 0.0
    %2545 = vmatmul.mubr.f32.gmra.mxu0 %v572
    %v2546 = vpop.f32.mrf.mxu0
    %v2547 = vadd.f32 0.0, %v2546
    %v2548 = vpop.f32.mrf.mxu0
    %2549 = vmatprep.mubr.f32.mxu0 0.0
    %2550 = vmatmul.mubr.f32.gmra.mxu0 %v575
    %v2551 = vpop.f32.mrf.mxu0
    %v2552 = vadd.f32 0.0, %v2551
    %v2553 = vpop.f32.mrf.mxu0
    %2554 = vmatprep.mubr.f32.mxu0 0.0
    %2555 = vmatmul.mubr.f32.gmra.mxu0 %v578
    %v2556 = vpop.f32.mrf.mxu0
    %v2557 = vadd.f32 0.0, %v2556
    %v2558 = vpop.f32.mrf.mxu0
    %2559 = vmatprep.mubr.f32.mxu0 0.0
    %2560 = vmatmul.mubr.f32.gmra.mxu0 %v581
    %v2561 = vpop.f32.mrf.mxu0
    %v2562 = vadd.f32 0.0, %v2561
    %v2563 = vpop.f32.mrf.mxu0
    %2564 = vmatprep.mubr.f32.mxu0 0.0
    %2565 = vmatmul.mubr.f32.gmra.mxu0 %v584
    %v2566 = vpop.f32.mrf.mxu0
    %v2567 = vadd.f32 0.0, %v2566
    %v2568 = vpop.f32.mrf.mxu0
    %2569 = vmatprep.mubr.f32.mxu0 0.0
    %2570 = vmatmul.mubr.f32.gmra.mxu0 %v587
    %v2571 = vpop.f32.mrf.mxu0
    %v2572 = vadd.f32 0.0, %v2571
    %v2573 = vpop.f32.mrf.mxu0
    %2574 = vmatprep.mubr.f32.mxu0 0.0
    %2575 = vmatmul.mubr.f32.gmra.mxu0 %v590
    %v2576 = vpop.f32.mrf.mxu0
    %v2577 = vadd.f32 0.0, %v2576
    %v2578 = vpop.f32.mrf.mxu0
    %2579 = vdwg.mxu0
    %v2580 = vmul.f32 %v2367, %v2507
    %v2581 = vmul.f32 %v2372, %v2512
    %v2582 = vmul.f32 %v2377, %v2517
    %v2583 = vmul.f32 %v2382, %v2522
    %v2584 = vmul.f32 %v2387, %v2527
    %v2585 = vmul.f32 %v2392, %v2532
    %v2586 = vmul.f32 %v2397, %v2537
    %v2587 = vmul.f32 %v2402, %v2542
    %v2588 = vmul.f32 %v2407, %v2547
    %v2589 = vmul.f32 %v2412, %v2552
    %v2590 = vmul.f32 %v2417, %v2557
    %v2591 = vmul.f32 %v2422, %v2562
    %v2592 = vmul.f32 %v2427, %v2567
    %v2593 = vmul.f32 %v2432, %v2572
    %v2594 = vmul.f32 %v2437, %v2577
    %v2596 = vsel %vm138, %v2580, 0
    %v2599 = vsel %vm138, %v2581, 0
    %v2602 = vsel %vm138, %v2582, 0
    %v2605 = vsel %vm138, %v2583, 0
    %v2608 = vsel %vm138, %v2584, 0
    %v2611 = vsel %vm138, %v2585, 0
    %v2614 = vsel %vm138, %v2586, 0
    %v2617 = vsel %vm138, %v2587, 0
    %v2620 = vsel %vm138, %v2588, 0
    %v2623 = vsel %vm138, %v2589, 0
    %v2626 = vsel %vm138, %v2590, 0
    %v2629 = vsel %vm138, %v2591, 0
    %v2632 = vsel %vm138, %v2592, 0
    %v2635 = vsel %vm138, %v2593, 0
    %v2638 = vsel %vm138, %v2594, 0
    %2640 = vmatprep.subr.mxu0 0.0
    %2641 = vmatpush1.msra.mxu0 0.0
    %2642 = vmatprep.subr.mxu0 0.0
    %2643 = vmatpush1.msra.mxu0 0.0
    %2644 = vmatprep.subr.mxu0 0.0
    %2645 = vmatpush1.msra.mxu0 0.0
    %2646 = vmatprep.subr.mxu0 0.0
    %2647 = vmatpush1.msra.mxu0 0.0
    %2648 = vmatprep.subr.mxu0 0.0
    %2649 = vmatpush1.msra.mxu0 0.0
    %2650 = vmatprep.subr.mxu0 0.0
    %2651 = vmatpush1.msra.mxu0 0.0
    %2652 = vmatprep.subr.mxu0 0.0
    %2653 = vmatpush1.msra.mxu0 0.0
    %2654 = vmatprep.subr.mxu0 0.0
    %2655 = vmatpush1.msra.mxu0 0.0
    %2656 = vmatprep.subr.mxu0 0.0
    %2657 = vmatpush1.msra.mxu0 %v82
    %2658 = vmatprep.subr.mxu0 0.0
    %2659 = vmatpush1.msra.mxu0 %v81
    %2660 = vmatprep.subr.mxu0 0.0
    %2661 = vmatpush1.msra.mxu0 %v80
    %2662 = vmatprep.subr.mxu0 0.0
    %2663 = vmatpush1.msra.mxu0 %v79
    %2664 = vmatprep.subr.mxu0 0.0
    %2665 = vmatpush1.msra.mxu0 %v78
    %2666 = vmatprep.subr.mxu0 0.0
    %2667 = vmatpush1.msra.mxu0 %v77
    %2668 = vmatprep.subr.mxu0 0.0
    %2669 = vmatpush1.msra.mxu0 %v76
    %2670 = vmatprep.subr.mxu0 0.0
    %2671 = vmatpush1.msra.mxu0 %v75
    %2672 = vmatprep.subr.mxu0 0.0
    %2673 = vmatpush2.msra.mxu0 0.0
    %2674 = vmatprep.subr.mxu0 0.0
    %2675 = vmatpush2.msra.mxu0 0.0
    %2676 = vmatprep.subr.mxu0 0.0
    %2677 = vmatpush2.msra.mxu0 0.0
    %2678 = vmatprep.subr.mxu0 0.0
    %2679 = vmatpush2.msra.mxu0 0.0
    %2680 = vmatprep.subr.mxu0 0.0
    %2681 = vmatpush2.msra.mxu0 0.0
    %2682 = vmatprep.subr.mxu0 0.0
    %2683 = vmatpush2.msra.mxu0 0.0
    %2684 = vmatprep.subr.mxu0 0.0
    %2685 = vmatpush2.msra.mxu0 0.0
    %2686 = vmatprep.subr.mxu0 0.0
    %2687 = vmatpush2.msra.mxu0 0.0
    %2688 = vmatprep.subr.mxu0 0.0
    %2689 = vmatpush2.msra.mxu0 0.0
    %2690 = vmatprep.subr.mxu0 0.0
    %2691 = vmatpush2.msra.mxu0 0.0
    %2692 = vmatprep.subr.mxu0 0.0
    %2693 = vmatpush2.msra.mxu0 0.0
    %2694 = vmatprep.subr.mxu0 0.0
    %2695 = vmatpush2.msra.mxu0 0.0
    %2696 = vmatprep.subr.mxu0 0.0
    %2697 = vmatpush2.msra.mxu0 0.0
    %2698 = vmatprep.subr.mxu0 0.0
    %2699 = vmatpush2.msra.mxu0 0.0
    %2700 = vmatprep.subr.mxu0 0.0
    %2701 = vmatpush2.msra.mxu0 0.0
    %2702 = vmatprep.subr.mxu0 0.0
    %2703 = vmatpush2.msra.mxu0 0.0
    %2704 = vmatprep.mubr.f32.mxu0 0.0
    %2705 = vmatmul.mubr.f32.gmra.mxu0 %v2596
    %v2706 = vpop.f32.mrf.mxu0
    %v2707 = vadd.f32 0.0, %v2706
    %v2708 = vpop.f32.mrf.mxu0
    %2709 = vmatprep.mubr.f32.mxu0 0.0
    %2710 = vmatmul.mubr.f32.gmra.mxu0 %v2599
    %v2711 = vpop.f32.mrf.mxu0
    %v2712 = vadd.f32 0.0, %v2711
    %v2713 = vpop.f32.mrf.mxu0
    %2714 = vmatprep.mubr.f32.mxu0 0.0
    %2715 = vmatmul.mubr.f32.gmra.mxu0 %v2602
    %v2716 = vpop.f32.mrf.mxu0
    %v2717 = vadd.f32 0.0, %v2716
    %v2718 = vpop.f32.mrf.mxu0
    %2719 = vmatprep.mubr.f32.mxu0 0.0
    %2720 = vmatmul.mubr.f32.gmra.mxu0 %v2605
    %v2721 = vpop.f32.mrf.mxu0
    %v2722 = vadd.f32 0.0, %v2721
    %v2723 = vpop.f32.mrf.mxu0
    %2724 = vmatprep.mubr.f32.mxu0 0.0
    %2725 = vmatmul.mubr.f32.gmra.mxu0 %v2608
    %v2726 = vpop.f32.mrf.mxu0
    %v2727 = vadd.f32 0.0, %v2726
    %v2728 = vpop.f32.mrf.mxu0
    %2729 = vmatprep.mubr.f32.mxu0 0.0
    %2730 = vmatmul.mubr.f32.gmra.mxu0 %v2611
    %v2731 = vpop.f32.mrf.mxu0
    %v2732 = vadd.f32 0.0, %v2731
    %v2733 = vpop.f32.mrf.mxu0
    %2734 = vmatprep.mubr.f32.mxu0 0.0
    %2735 = vmatmul.mubr.f32.gmra.mxu0 %v2614
    %v2736 = vpop.f32.mrf.mxu0
    %v2737 = vadd.f32 0.0, %v2736
    %v2738 = vpop.f32.mrf.mxu0
    %2739 = vmatprep.mubr.f32.mxu0 0.0
    %2740 = vmatmul.mubr.f32.gmra.mxu0 %v2617
    %v2741 = vpop.f32.mrf.mxu0
    %v2742 = vadd.f32 0.0, %v2741
    %v2743 = vpop.f32.mrf.mxu0
    %2744 = vmatprep.mubr.f32.mxu0 0.0
    %2745 = vmatmul.mubr.f32.gmra.mxu0 %v2620
    %v2746 = vpop.f32.mrf.mxu0
    %v2747 = vadd.f32 0.0, %v2746
    %v2748 = vpop.f32.mrf.mxu0
    %2749 = vmatprep.mubr.f32.mxu0 0.0
    %2750 = vmatmul.mubr.f32.gmra.mxu0 %v2623
    %v2751 = vpop.f32.mrf.mxu0
    %v2752 = vadd.f32 0.0, %v2751
    %v2753 = vpop.f32.mrf.mxu0
    %2754 = vmatprep.mubr.f32.mxu0 0.0
    %2755 = vmatmul.mubr.f32.gmra.mxu0 %v2626
    %v2756 = vpop.f32.mrf.mxu0
    %v2757 = vadd.f32 0.0, %v2756
    %v2758 = vpop.f32.mrf.mxu0
    %2759 = vmatprep.mubr.f32.mxu0 0.0
    %2760 = vmatmul.mubr.f32.gmra.mxu0 %v2629
    %v2761 = vpop.f32.mrf.mxu0
    %v2762 = vadd.f32 0.0, %v2761
    %v2763 = vpop.f32.mrf.mxu0
    %2764 = vmatprep.mubr.f32.mxu0 0.0
    %2765 = vmatmul.mubr.f32.gmra.mxu0 %v2632
    %v2766 = vpop.f32.mrf.mxu0
    %v2767 = vadd.f32 0.0, %v2766
    %v2768 = vpop.f32.mrf.mxu0
    %2769 = vmatprep.mubr.f32.mxu0 0.0
    %2770 = vmatmul.mubr.f32.gmra.mxu0 %v2635
    %v2771 = vpop.f32.mrf.mxu0
    %v2772 = vadd.f32 0.0, %v2771
    %v2773 = vpop.f32.mrf.mxu0
    %2774 = vmatprep.mubr.f32.mxu0 0.0
    %2775 = vmatmul.mubr.f32.gmra.mxu0 %v2638
    %v2776 = vpop.f32.mrf.mxu0
    %v2777 = vadd.f32 0.0, %v2776
    %v2778 = vpop.f32.mrf.mxu0
    %2779 = vdwg.mxu0
    %v2780 = vsel %vm138, %v2707, -inf
    %v2781 = vsel %vm138, %v2712, -inf
    %v2782 = vsel %vm138, %v2717, -inf
    %v2783 = vsel %vm138, %v2722, -inf
    %v2784 = vsel %vm138, %v2727, -inf
    %v2785 = vmax.f32 %v2780, %v2784
    %v2786 = vsel %vm138, %v2732, -inf
    %v2787 = vmax.f32 %v2781, %v2786
    %v2788 = vsel %vm138, %v2737, -inf
    %v2789 = vmax.f32 %v2782, %v2788
    %v2790 = vsel %vm138, %v2742, -inf
    %v2791 = vmax.f32 %v2783, %v2790
    %v2792 = vsel %vm138, %v2747, -inf
    %v2793 = vmax.f32 %v2785, %v2792
    %v2794 = vsel %vm138, %v2752, -inf
    %v2795 = vmax.f32 %v2787, %v2794
    %v2796 = vsel %vm138, %v2757, -inf
    %v2797 = vmax.f32 %v2789, %v2796
    %v2798 = vsel %vm138, %v2762, -inf
    %v2799 = vmax.f32 %v2791, %v2798
    %v2800 = vsel %vm138, %v2767, -inf
    %v2801 = vmax.f32 %v2793, %v2800
    %v2802 = vsel %vm138, %v2772, -inf
    %v2803 = vmax.f32 %v2795, %v2802
    %v2804 = vsel %vm138, %v2777, -inf
    %v2805 = vmax.f32 %v2797, %v2804
    %v2806 = vmax.f32 %v2801, %v2803
    %v2807 = vmax.f32 %v2805, %v2799
    %v2808 = vmax.f32 %v2806, %v2807
    %2809 = vmax.xlane.f32.xlu0 %v2808
    %v2810 = vpop.xlane.xlu0 %2809
    %v2811 = vrot.slane %v2810, 4
    %v2812 = vmax.f32 %v2810, %v2811
    %v2813 = vrot.slane %v2812, 2
    %v2814 = vmax.f32 %v2812, %v2813
    %v2815 = vrot.slane %v2814, 1
    %v2816 = vmax.f32 %v2814, %v2815
    %s2817 = vtos %v2816
    %v2818 = vstv %s2817
    %v2819 = vsub.f32 %v2707, %v2818
    %v2820 = vsub.f32 %v2712, %v2818
    %v2821 = vsub.f32 %v2717, %v2818
    %v2822 = vsub.f32 %v2722, %v2818
    %v2823 = vsub.f32 %v2727, %v2818
    %v2824 = vsub.f32 %v2732, %v2818
    %v2825 = vsub.f32 %v2737, %v2818
    %v2826 = vsub.f32 %v2742, %v2818
    %v2827 = vsub.f32 %v2747, %v2818
    %v2828 = vsub.f32 %v2752, %v2818
    %v2829 = vsub.f32 %v2757, %v2818
    %v2830 = vsub.f32 %v2762, %v2818
    %v2831 = vsub.f32 %v2767, %v2818
    %v2832 = vsub.f32 %v2772, %v2818
    %v2833 = vsub.f32 %v2777, %v2818
    %v2834 = vmul.f32 %v2819, 1.442695
    %v2835 = vpow.pop %v2834
    %v2836 = vmul.f32 %v2820, 1.442695
    %v2837 = vpow.pop %v2836
    %v2838 = vmul.f32 %v2821, 1.442695
    %v2839 = vpow.pop %v2838
    %v2840 = vmul.f32 %v2822, 1.442695
    %v2841 = vpow.pop %v2840
    %v2842 = vmul.f32 %v2823, 1.442695
    %v2843 = vpow.pop %v2842
    %v2844 = vmul.f32 %v2824, 1.442695
    %v2845 = vpow.pop %v2844
    %v2846 = vmul.f32 %v2825, 1.442695
    %v2847 = vpow.pop %v2846
    %v2848 = vmul.f32 %v2826, 1.442695
    %v2849 = vpow.pop %v2848
    %v2850 = vmul.f32 %v2827, 1.442695
    %v2851 = vpow.pop %v2850
    %v2852 = vmul.f32 %v2828, 1.442695
    %v2853 = vpow.pop %v2852
    %v2854 = vmul.f32 %v2829, 1.442695
    %v2855 = vpow.pop %v2854
    %v2856 = vmul.f32 %v2830, 1.442695
    %v2857 = vpow.pop %v2856
    %v2858 = vmul.f32 %v2831, 1.442695
    %v2859 = vpow.pop %v2858
    %v2860 = vmul.f32 %v2832, 1.442695
    %v2861 = vpow.pop %v2860
    %v2862 = vmul.f32 %v2833, 1.442695
    %v2863 = vpow.pop %v2862
    %2864 = vmatprep.subr.mxu0 0.0
    %2865 = vmatpush1.msra.mxu0 0.0
    %2866 = vmatprep.subr.mxu0 0.0
    %2867 = vmatpush1.msra.mxu0 %v2863
    %2868 = vmatprep.subr.mxu0 0.0
    %2869 = vmatpush1.msra.mxu0 %v2861
    %2870 = vmatprep.subr.mxu0 0.0
    %2871 = vmatpush1.msra.mxu0 %v2859
    %2872 = vmatprep.subr.mxu0 0.0
    %2873 = vmatpush1.msra.mxu0 %v2857
    %2874 = vmatprep.subr.mxu0 0.0
    %2875 = vmatpush1.msra.mxu0 %v2855
    %2876 = vmatprep.subr.mxu0 0.0
    %2877 = vmatpush1.msra.mxu0 %v2853
    %2878 = vmatprep.subr.mxu0 0.0
    %2879 = vmatpush1.msra.mxu0 %v2851
    %2880 = vmatprep.subr.mxu0 0.0
    %2881 = vmatpush1.msra.mxu0 %v2849
    %2882 = vmatprep.subr.mxu0 0.0
    %2883 = vmatpush1.msra.mxu0 %v2847
    %2884 = vmatprep.subr.mxu0 0.0
    %2885 = vmatpush1.msra.mxu0 %v2845
    %2886 = vmatprep.subr.mxu0 0.0
    %2887 = vmatpush1.msra.mxu0 %v2843
    %2888 = vmatprep.subr.mxu0 0.0
    %2889 = vmatpush1.msra.mxu0 %v2841
    %2890 = vmatprep.subr.mxu0 0.0
    %2891 = vmatpush1.msra.mxu0 %v2839
    %2892 = vmatprep.subr.mxu0 0.0
    %2893 = vmatpush1.msra.mxu0 %v2837
    %2894 = vmatprep.subr.mxu0 0.0
    %2895 = vmatpush1.msra.mxu0 %v2835
    %2896 = vmatprep.subr.mxu0 0.0
    %2897 = vmatpush2.msra.mxu0 0.0
    %2898 = vmatprep.subr.mxu0 0.0
    %2899 = vmatpush2.msra.mxu0 0.0
    %2900 = vmatprep.subr.mxu0 0.0
    %2901 = vmatpush2.msra.mxu0 0.0
    %2902 = vmatprep.subr.mxu0 0.0
    %2903 = vmatpush2.msra.mxu0 0.0
    %2904 = vmatprep.subr.mxu0 0.0
    %2905 = vmatpush2.msra.mxu0 0.0
    %2906 = vmatprep.subr.mxu0 0.0
    %2907 = vmatpush2.msra.mxu0 0.0
    %2908 = vmatprep.subr.mxu0 0.0
    %2909 = vmatpush2.msra.mxu0 0.0
    %2910 = vmatprep.subr.mxu0 0.0
    %2911 = vmatpush2.msra.mxu0 0.0
    %2912 = vmatprep.subr.mxu0 0.0
    %2913 = vmatpush2.msra.mxu0 0.0
    %2914 = vmatprep.subr.mxu0 0.0
    %2915 = vmatpush2.msra.mxu0 0.0
    %2916 = vmatprep.subr.mxu0 0.0
    %2917 = vmatpush2.msra.mxu0 0.0
    %2918 = vmatprep.subr.mxu0 0.0
    %2919 = vmatpush2.msra.mxu0 0.0
    %2920 = vmatprep.subr.mxu0 0.0
    %2921 = vmatpush2.msra.mxu0 0.0
    %2922 = vmatprep.subr.mxu0 0.0
    %2923 = vmatpush2.msra.mxu0 0.0
    %2924 = vmatprep.subr.mxu0 0.0
    %2925 = vmatpush2.msra.mxu0 0.0
    %2926 = vmatprep.subr.mxu0 0.0
    %2927 = vmatpush2.msra.mxu0 0.0
    %2928 = vmatprep.mubr.f32.mxu0 0.0
    %2929 = vmatmul.mubr.f32.gmra.mxu0 %v1050
    %v2930 = vpop.f32.mrf.mxu0
    %v2931 = vadd.f32 0.0, %v2930
    %v2932 = vpop.f32.mrf.mxu0
    %2933 = vmatprep.mubr.f32.mxu0 0.0
    %2934 = vmatmul.mubr.f32.gmra.mxu0 %v1053
    %v2935 = vpop.f32.mrf.mxu0
    %v2936 = vadd.f32 0.0, %v2935
    %v2937 = vpop.f32.mrf.mxu0
    %2938 = vmatprep.mubr.f32.mxu0 0.0
    %2939 = vmatmul.mubr.f32.gmra.mxu0 %v1056
    %v2940 = vpop.f32.mrf.mxu0
    %v2941 = vadd.f32 0.0, %v2940
    %v2942 = vpop.f32.mrf.mxu0
    %2943 = vmatprep.mubr.f32.mxu0 0.0
    %2944 = vmatmul.mubr.f32.gmra.mxu0 %v1059
    %v2945 = vpop.f32.mrf.mxu0
    %v2946 = vadd.f32 0.0, %v2945
    %v2947 = vpop.f32.mrf.mxu0
    %2948 = vmatprep.mubr.f32.mxu0 0.0
    %2949 = vmatmul.mubr.f32.gmra.mxu0 %v1062
    %v2950 = vpop.f32.mrf.mxu0
    %v2951 = vadd.f32 0.0, %v2950
    %v2952 = vpop.f32.mrf.mxu0
    %2953 = vmatprep.mubr.f32.mxu0 0.0
    %2954 = vmatmul.mubr.f32.gmra.mxu0 %v1065
    %v2955 = vpop.f32.mrf.mxu0
    %v2956 = vadd.f32 0.0, %v2955
    %v2957 = vpop.f32.mrf.mxu0
    %2958 = vdwg.mxu0
    %v2959 = vmax.f32 %v2931, 1.1754944e-38
    %v2960 = vmax.f32 %v2936, 1.1754944e-38
    %v2961 = vmax.f32 %v2941, 1.1754944e-38
    %v2962 = vmax.f32 %v2946, 1.1754944e-38
    %v2963 = vmax.f32 %v2951, 1.1754944e-38
    %v2964 = vmax.f32 %v2956, 1.1754944e-38
    %v2965 = vrcp.pop %v2959
    %v2966 = vrcp.pop %v2960
    %v2967 = vrcp.pop %v2961
    %v2968 = vrcp.pop %v2962
    %v2969 = vrcp.pop %v2963
    %v2970 = vrcp.pop %v2964
    %2971 = vmatprep.subr.mxu0 0.0
    %2972 = vmatpush1.msra.mxu0 0.0
    %2973 = vmatprep.subr.mxu0 0.0
    %2974 = vmatpush1.msra.mxu0 0.0
    %2975 = vmatprep.subr.mxu0 0.0
    %2976 = vmatpush1.msra.mxu0 0.0
    %2977 = vmatprep.subr.mxu0 0.0
    %2978 = vmatpush1.msra.mxu0 0.0
    %2979 = vmatprep.subr.mxu0 0.0
    %2980 = vmatpush1.msra.mxu0 0.0
    %2981 = vmatprep.subr.mxu0 0.0
    %2982 = vmatpush1.msra.mxu0 0.0
    %2983 = vmatprep.subr.mxu0 0.0
    %2984 = vmatpush1.msra.mxu0 0.0
    %2985 = vmatprep.subr.mxu0 0.0
    %2986 = vmatpush1.msra.mxu0 0.0
    %2987 = vmatprep.subr.mxu0 0.0
    %2988 = vmatpush1.msra.mxu0 0.0
    %2989 = vmatprep.subr.mxu0 0.0
    %2990 = vmatpush1.msra.mxu0 0.0
    %2991 = vmatprep.subr.mxu0 0.0
    %2992 = vmatpush1.msra.mxu0 %v2970
    %2993 = vmatprep.subr.mxu0 0.0
    %2994 = vmatpush1.msra.mxu0 %v2969
    %2995 = vmatprep.subr.mxu0 0.0
    %2996 = vmatpush1.msra.mxu0 %v2968
    %2997 = vmatprep.subr.mxu0 0.0
    %2998 = vmatpush1.msra.mxu0 %v2967
    %2999 = vmatprep.subr.mxu0 0.0
    %3000 = vmatpush1.msra.mxu0 %v2966
    %3001 = vmatprep.subr.mxu0 0.0
    %3002 = vmatpush1.msra.mxu0 %v2965
    %3003 = vmatprep.subr.mxu0 0.0
    %3004 = vmatpush2.msra.mxu0 0.0
    %3005 = vmatprep.subr.mxu0 0.0
    %3006 = vmatpush2.msra.mxu0 0.0
    %3007 = vmatprep.subr.mxu0 0.0
    %3008 = vmatpush2.msra.mxu0 0.0
    %3009 = vmatprep.subr.mxu0 0.0
    %3010 = vmatpush2.msra.mxu0 0.0
    %3011 = vmatprep.subr.mxu0 0.0
    %3012 = vmatpush2.msra.mxu0 0.0
    %3013 = vmatprep.subr.mxu0 0.0
    %3014 = vmatpush2.msra.mxu0 0.0
    %3015 = vmatprep.subr.mxu0 0.0
    %3016 = vmatpush2.msra.mxu0 0.0
    %3017 = vmatprep.subr.mxu0 0.0
    %3018 = vmatpush2.msra.mxu0 0.0
    %3019 = vmatprep.subr.mxu0 0.0
    %3020 = vmatpush2.msra.mxu0 0.0
    %3021 = vmatprep.subr.mxu0 0.0
    %3022 = vmatpush2.msra.mxu0 0.0
    %3023 = vmatprep.subr.mxu0 0.0
    %3024 = vmatpush2.msra.mxu0 0.0
    %3025 = vmatprep.subr.mxu0 0.0
    %3026 = vmatpush2.msra.mxu0 0.0
    %3027 = vmatprep.subr.mxu0 0.0
    %3028 = vmatpush2.msra.mxu0 0.0
    %3029 = vmatprep.subr.mxu0 0.0
    %3030 = vmatpush2.msra.mxu0 0.0
    %3031 = vmatprep.subr.mxu0 0.0
    %3032 = vmatpush2.msra.mxu0 0.0
    %3033 = vmatprep.subr.mxu0 0.0
    %3034 = vmatpush2.msra.mxu0 0.0
    %3035 = vmatprep.mubr.f32.mxu0 0.0
    %3036 = vmatmul.mubr.f32.gmra.mxu0 %v548
    %v3037 = vpop.f32.mrf.mxu0
    %v3038 = vadd.f32 0.0, %v3037
    %v3039 = vpop.f32.mrf.mxu0
    %3040 = vmatprep.mubr.f32.mxu0 0.0
    %3041 = vmatmul.mubr.f32.gmra.mxu0 %v551
    %v3042 = vpop.f32.mrf.mxu0
    %v3043 = vadd.f32 0.0, %v3042
    %v3044 = vpop.f32.mrf.mxu0
    %3045 = vmatprep.mubr.f32.mxu0 0.0
    %3046 = vmatmul.mubr.f32.gmra.mxu0 %v554
    %v3047 = vpop.f32.mrf.mxu0
    %v3048 = vadd.f32 0.0, %v3047
    %v3049 = vpop.f32.mrf.mxu0
    %3050 = vmatprep.mubr.f32.mxu0 0.0
    %3051 = vmatmul.mubr.f32.gmra.mxu0 %v557
    %v3052 = vpop.f32.mrf.mxu0
    %v3053 = vadd.f32 0.0, %v3052
    %v3054 = vpop.f32.mrf.mxu0
    %3055 = vmatprep.mubr.f32.mxu0 0.0
    %3056 = vmatmul.mubr.f32.gmra.mxu0 %v560
    %v3057 = vpop.f32.mrf.mxu0
    %v3058 = vadd.f32 0.0, %v3057
    %v3059 = vpop.f32.mrf.mxu0
    %3060 = vmatprep.mubr.f32.mxu0 0.0
    %3061 = vmatmul.mubr.f32.gmra.mxu0 %v563
    %v3062 = vpop.f32.mrf.mxu0
    %v3063 = vadd.f32 0.0, %v3062
    %v3064 = vpop.f32.mrf.mxu0
    %3065 = vmatprep.mubr.f32.mxu0 0.0
    %3066 = vmatmul.mubr.f32.gmra.mxu0 %v566
    %v3067 = vpop.f32.mrf.mxu0
    %v3068 = vadd.f32 0.0, %v3067
    %v3069 = vpop.f32.mrf.mxu0
    %3070 = vmatprep.mubr.f32.mxu0 0.0
    %3071 = vmatmul.mubr.f32.gmra.mxu0 %v569
    %v3072 = vpop.f32.mrf.mxu0
    %v3073 = vadd.f32 0.0, %v3072
    %v3074 = vpop.f32.mrf.mxu0
    %3075 = vmatprep.mubr.f32.mxu0 0.0
    %3076 = vmatmul.mubr.f32.gmra.mxu0 %v572
    %v3077 = vpop.f32.mrf.mxu0
    %v3078 = vadd.f32 0.0, %v3077
    %v3079 = vpop.f32.mrf.mxu0
    %3080 = vmatprep.mubr.f32.mxu0 0.0
    %3081 = vmatmul.mubr.f32.gmra.mxu0 %v575
    %v3082 = vpop.f32.mrf.mxu0
    %v3083 = vadd.f32 0.0, %v3082
    %v3084 = vpop.f32.mrf.mxu0
    %3085 = vmatprep.mubr.f32.mxu0 0.0
    %3086 = vmatmul.mubr.f32.gmra.mxu0 %v578
    %v3087 = vpop.f32.mrf.mxu0
    %v3088 = vadd.f32 0.0, %v3087
    %v3089 = vpop.f32.mrf.mxu0
    %3090 = vmatprep.mubr.f32.mxu0 0.0
    %3091 = vmatmul.mubr.f32.gmra.mxu0 %v581
    %v3092 = vpop.f32.mrf.mxu0
    %v3093 = vadd.f32 0.0, %v3092
    %v3094 = vpop.f32.mrf.mxu0
    %3095 = vmatprep.mubr.f32.mxu0 0.0
    %3096 = vmatmul.mubr.f32.gmra.mxu0 %v584
    %v3097 = vpop.f32.mrf.mxu0
    %v3098 = vadd.f32 0.0, %v3097
    %v3099 = vpop.f32.mrf.mxu0
    %3100 = vmatprep.mubr.f32.mxu0 0.0
    %3101 = vmatmul.mubr.f32.gmra.mxu0 %v587
    %v3102 = vpop.f32.mrf.mxu0
    %v3103 = vadd.f32 0.0, %v3102
    %v3104 = vpop.f32.mrf.mxu0
    %3105 = vmatprep.mubr.f32.mxu0 0.0
    %3106 = vmatmul.mubr.f32.gmra.mxu0 %v590
    %v3107 = vpop.f32.mrf.mxu0
    %v3108 = vadd.f32 0.0, %v3107
    %v3109 = vpop.f32.mrf.mxu0
    %3110 = vdwg.mxu0
    %v3111 = vmul.f32 %v2835, %v3038
    %v3112 = vmul.f32 %v2837, %v3043
    %v3113 = vmul.f32 %v2839, %v3048
    %v3114 = vmul.f32 %v2841, %v3053
    %v3115 = vmul.f32 %v2843, %v3058
    %v3116 = vmul.f32 %v2845, %v3063
    %v3117 = vmul.f32 %v2847, %v3068
    %v3118 = vmul.f32 %v2849, %v3073
    %v3119 = vmul.f32 %v2851, %v3078
    %v3120 = vmul.f32 %v2853, %v3083
    %v3121 = vmul.f32 %v2855, %v3088
    %v3122 = vmul.f32 %v2857, %v3093
    %v3123 = vmul.f32 %v2859, %v3098
    %v3124 = vmul.f32 %v2861, %v3103
    %v3125 = vmul.f32 %v2863, %v3108
    %3141 = vrot.lane.b32.xlu0 %v3111, 64
    %v3142 = vpop.permute.xlu0 %3141
    %3143 = vrot.lane.b32.xlu0 %v3112, 64
    %v3144 = vpop.permute.xlu0 %3143
    %3145 = vrot.lane.b32.xlu0 %v3113, 64
    %v3146 = vpop.permute.xlu0 %3145
    %3147 = vrot.lane.b32.xlu0 %v3114, 64
    %v3148 = vpop.permute.xlu0 %3147
    %3149 = vrot.lane.b32.xlu0 %v3115, 64
    %v3150 = vpop.permute.xlu0 %3149
    %3151 = vrot.lane.b32.xlu0 %v3116, 64
    %v3152 = vpop.permute.xlu0 %3151
    %3153 = vrot.lane.b32.xlu0 %v3117, 64
    %v3154 = vpop.permute.xlu0 %3153
    %3155 = vrot.lane.b32.xlu0 %v3118, 64
    %v3156 = vpop.permute.xlu0 %3155
    %3157 = vrot.lane.b32.xlu0 %v3119, 64
    %v3158 = vpop.permute.xlu0 %3157
    %3159 = vrot.lane.b32.xlu0 %v3120, 64
    %v3160 = vpop.permute.xlu0 %3159
    %3161 = vrot.lane.b32.xlu0 %v3121, 64
    %v3162 = vpop.permute.xlu0 %3161
    %3163 = vrot.lane.b32.xlu0 %v3122, 64
    %v3164 = vpop.permute.xlu0 %3163
    %3165 = vrot.lane.b32.xlu0 %v3123, 64
    %v3166 = vpop.permute.xlu0 %3165
    %3167 = vrot.lane.b32.xlu0 %v3124, 64
    %v3168 = vpop.permute.xlu0 %3167
    %3169 = vrot.lane.b32.xlu0 %v3125, 64
    %v3170 = vpop.permute.xlu0 %3169
    %v3186 = vmul.f32 %v2367, %v3142
    %v3187 = vmul.f32 %v2372, %v3144
    %v3188 = vmul.f32 %v2377, %v3146
    %v3189 = vmul.f32 %v2382, %v3148
    %v3190 = vmul.f32 %v2387, %v3150
    %v3191 = vmul.f32 %v2392, %v3152
    %v3192 = vmul.f32 %v2397, %v3154
    %v3193 = vmul.f32 %v2402, %v3156
    %v3194 = vmul.f32 %v2407, %v3158
    %v3195 = vmul.f32 %v2412, %v3160
    %v3196 = vmul.f32 %v2417, %v3162
    %v3197 = vmul.f32 %v2422, %v3164
    %v3198 = vmul.f32 %v2427, %v3166
    %v3199 = vmul.f32 %v2432, %v3168
    %v3200 = vmul.f32 %v2437, %v3170
    %3216 = vrot.lane.b32.xlu0 %v3186, 64
    %v3217 = vpop.permute.xlu0 %3216
    %3218 = vrot.lane.b32.xlu0 %v3187, 64
    %v3219 = vpop.permute.xlu0 %3218
    %3220 = vrot.lane.b32.xlu0 %v3188, 64
    %v3221 = vpop.permute.xlu0 %3220
    %3222 = vrot.lane.b32.xlu0 %v3189, 64
    %v3223 = vpop.permute.xlu0 %3222
    %3224 = vrot.lane.b32.xlu0 %v3190, 64
    %v3225 = vpop.permute.xlu0 %3224
    %3226 = vrot.lane.b32.xlu0 %v3191, 64
    %v3227 = vpop.permute.xlu0 %3226
    %3228 = vrot.lane.b32.xlu0 %v3192, 64
    %v3229 = vpop.permute.xlu0 %3228
    %3230 = vrot.lane.b32.xlu0 %v3193, 64
    %v3231 = vpop.permute.xlu0 %3230
    %3232 = vrot.lane.b32.xlu0 %v3194, 64
    %v3233 = vpop.permute.xlu0 %3232
    %3234 = vrot.lane.b32.xlu0 %v3195, 64
    %v3235 = vpop.permute.xlu0 %3234
    %3236 = vrot.lane.b32.xlu0 %v3196, 64
    %v3237 = vpop.permute.xlu0 %3236
    %3238 = vrot.lane.b32.xlu0 %v3197, 64
    %v3239 = vpop.permute.xlu0 %3238
    %3240 = vrot.lane.b32.xlu0 %v3198, 64
    %v3241 = vpop.permute.xlu0 %3240
    %3242 = vrot.lane.b32.xlu0 %v3199, 64
    %v3243 = vpop.permute.xlu0 %3242
    %3244 = vrot.lane.b32.xlu0 %v3200, 64
    %v3245 = vpop.permute.xlu0 %3244
    %3261 = vmatprep.subr.mxu0 0.0
    %3262 = vmatpush1.msra.mxu0 0.0
    %3263 = vmatprep.subr.mxu0 0.0
    %3264 = vmatpush1.msra.mxu0 %v3245
    %3265 = vmatprep.subr.mxu0 0.0
    %3266 = vmatpush1.msra.mxu0 %v3243
    %3267 = vmatprep.subr.mxu0 0.0
    %3268 = vmatpush1.msra.mxu0 %v3241
    %3269 = vmatprep.subr.mxu0 0.0
    %3270 = vmatpush1.msra.mxu0 %v3239
    %3271 = vmatprep.subr.mxu0 0.0
    %3272 = vmatpush1.msra.mxu0 %v3237
    %3273 = vmatprep.subr.mxu0 0.0
    %3274 = vmatpush1.msra.mxu0 %v3235
    %3275 = vmatprep.subr.mxu0 0.0
    %3276 = vmatpush1.msra.mxu0 %v3233
    %3277 = vmatprep.subr.mxu0 0.0
    %3278 = vmatpush1.msra.mxu0 %v3231
    %3279 = vmatprep.subr.mxu0 0.0
    %3280 = vmatpush1.msra.mxu0 %v3229
    %3281 = vmatprep.subr.mxu0 0.0
    %3282 = vmatpush1.msra.mxu0 %v3227
    %3283 = vmatprep.subr.mxu0 0.0
    %3284 = vmatpush1.msra.mxu0 %v3225
    %3285 = vmatprep.subr.mxu0 0.0
    %3286 = vmatpush1.msra.mxu0 %v3223
    %3287 = vmatprep.subr.mxu0 0.0
    %3288 = vmatpush1.msra.mxu0 %v3221
    %3289 = vmatprep.subr.mxu0 0.0
    %3290 = vmatpush1.msra.mxu0 %v3219
    %3291 = vmatprep.subr.mxu0 0.0
    %3292 = vmatpush1.msra.mxu0 %v3217
    %3293 = vmatprep.subr.mxu0 0.0
    %3294 = vmatpush2.msra.mxu0 0.0
    %3295 = vmatprep.subr.mxu0 0.0
    %3296 = vmatpush2.msra.mxu0 0.0
    %3297 = vmatprep.subr.mxu0 0.0
    %3298 = vmatpush2.msra.mxu0 0.0
    %3299 = vmatprep.subr.mxu0 0.0
    %3300 = vmatpush2.msra.mxu0 0.0
    %3301 = vmatprep.subr.mxu0 0.0
    %3302 = vmatpush2.msra.mxu0 0.0
    %3303 = vmatprep.subr.mxu0 0.0
    %3304 = vmatpush2.msra.mxu0 0.0
    %3305 = vmatprep.subr.mxu0 0.0
    %3306 = vmatpush2.msra.mxu0 0.0
    %3307 = vmatprep.subr.mxu0 0.0
    %3308 = vmatpush2.msra.mxu0 0.0
    %3309 = vmatprep.subr.mxu0 0.0
    %3310 = vmatpush2.msra.mxu0 0.0
    %3311 = vmatprep.subr.mxu0 0.0
    %3312 = vmatpush2.msra.mxu0 0.0
    %3313 = vmatprep.subr.mxu0 0.0
    %3314 = vmatpush2.msra.mxu0 0.0
    %3315 = vmatprep.subr.mxu0 0.0
    %3316 = vmatpush2.msra.mxu0 0.0
    %3317 = vmatprep.subr.mxu0 0.0
    %3318 = vmatpush2.msra.mxu0 0.0
    %3319 = vmatprep.subr.mxu0 0.0
    %3320 = vmatpush2.msra.mxu0 0.0
    %3321 = vmatprep.subr.mxu0 0.0
    %3322 = vmatpush2.msra.mxu0 0.0
    %3323 = vmatprep.subr.mxu0 0.0
    %3324 = vmatpush2.msra.mxu0 0.0
    %3325 = vmatprep.mubr.f32.mxu0 0.0
    %3326 = vmatmul.mubr.f32.gmra.mxu0 %v1050
    %v3327 = vpop.f32.mrf.mxu0
    %v3328 = vadd.f32 0.0, %v3327
    %v3329 = vpop.f32.mrf.mxu0
    %3330 = vmatprep.mubr.f32.mxu0 0.0
    %3331 = vmatmul.mubr.f32.gmra.mxu0 %v1053
    %v3332 = vpop.f32.mrf.mxu0
    %v3333 = vadd.f32 0.0, %v3332
    %v3334 = vpop.f32.mrf.mxu0
    %3335 = vmatprep.mubr.f32.mxu0 0.0
    %3336 = vmatmul.mubr.f32.gmra.mxu0 %v1056
    %v3337 = vpop.f32.mrf.mxu0
    %v3338 = vadd.f32 0.0, %v3337
    %v3339 = vpop.f32.mrf.mxu0
    %3340 = vmatprep.mubr.f32.mxu0 0.0
    %3341 = vmatmul.mubr.f32.gmra.mxu0 %v1059
    %v3342 = vpop.f32.mrf.mxu0
    %v3343 = vadd.f32 0.0, %v3342
    %v3344 = vpop.f32.mrf.mxu0
    %3345 = vmatprep.mubr.f32.mxu0 0.0
    %3346 = vmatmul.mubr.f32.gmra.mxu0 %v1062
    %v3347 = vpop.f32.mrf.mxu0
    %v3348 = vadd.f32 0.0, %v3347
    %v3349 = vpop.f32.mrf.mxu0
    %3350 = vmatprep.mubr.f32.mxu0 0.0
    %3351 = vmatmul.mubr.f32.gmra.mxu0 %v1065
    %v3352 = vpop.f32.mrf.mxu0
    %v3353 = vadd.f32 0.0, %v3352
    %v3354 = vpop.f32.mrf.mxu0
    %3355 = vdwg.mxu0
    %v3356 = vadd.f32 %v2020, %v3328
    %v3357 = vadd.f32 %v2021, %v3333
    %v3358 = vadd.f32 %v2022, %v3338
    %v3359 = vadd.f32 %v2023, %v3343
    %v3360 = vadd.f32 %v2024, %v3348
    %v3361 = vadd.f32 %v2025, %v3353
    %v3362 = vsel %vm138, %v3356, 0.0
    %3363 = vadd.xlane.f32.xlu0 %v3362
    %v3364 = vpop.xlane.xlu0 %3363
    %v3365 = vsel %vm138, %v3357, 0.0
    %3366 = vadd.xlane.f32.xlu0 %v3365
    %v3367 = vpop.xlane.xlu0 %3366
    %v3368 = vsel %vm138, %v3358, 0.0
    %3369 = vadd.xlane.f32.xlu0 %v3368
    %v3370 = vpop.xlane.xlu0 %3369
    %v3371 = vsel %vm138, %v3359, 0.0
    %3372 = vadd.xlane.f32.xlu0 %v3371
    %v3373 = vpop.xlane.xlu0 %3372
    %v3374 = vsel %vm138, %v3360, 0.0
    %3375 = vadd.xlane.f32.xlu0 %v3374
    %v3376 = vpop.xlane.xlu0 %3375
    %v3377 = vsel %vm138, %v3361, 0.0
    %3378 = vadd.xlane.f32.xlu0 %v3377
    %v3379 = vpop.xlane.xlu0 %3378
    %v3380 = vmul.f32 %v3364, %v157
    %v3381 = vmul.f32 %v3367, %v157
    %v3382 = vmul.f32 %v3370, %v157
    %v3383 = vmul.f32 %v3373, %v157
    %v3384 = vmul.f32 %v3376, %v157
    %v3385 = vmul.f32 %v3379, %v157
    %v3386 = vsub.f32 %v3356, %v3380
    %v3387 = vsub.f32 %v3357, %v3381
    %v3388 = vsub.f32 %v3358, %v3382
    %v3389 = vsub.f32 %v3359, %v3383
    %v3390 = vsub.f32 %v3360, %v3384
    %v3391 = vsub.f32 %v3361, %v3385
    %v3392 = vmul.f32 %v3386, %v3386
    %v3393 = vmul.f32 %v3387, %v3387
    %v3394 = vmul.f32 %v3388, %v3388
    %v3395 = vmul.f32 %v3389, %v3389
    %v3396 = vmul.f32 %v3390, %v3390
    %v3397 = vmul.f32 %v3391, %v3391
    %v3398 = vsel %vm138, %v3392, 0.0
    %3399 = vadd.xlane.f32.xlu0 %v3398
    %v3400 = vpop.xlane.xlu0 %3399
    %v3401 = vsel %vm138, %v3393, 0.0
    %3402 = vadd.xlane.f32.xlu0 %v3401
    %v3403 = vpop.xlane.xlu0 %3402
    %v3404 = vsel %vm138, %v3394, 0.0
    %3405 = vadd.xlane.f32.xlu0 %v3404
    %v3406 = vpop.xlane.xlu0 %3405
    %v3407 = vsel %vm138, %v3395, 0.0
    %3408 = vadd.xlane.f32.xlu0 %v3407
    %v3409 = vpop.xlane.xlu0 %3408
    %v3410 = vsel %vm138, %v3396, 0.0
    %3411 = vadd.xlane.f32.xlu0 %v3410
    %v3412 = vpop.xlane.xlu0 %3411
    %v3413 = vsel %vm138, %v3397, 0.0
    %3414 = vadd.xlane.f32.xlu0 %v3413
    %v3415 = vpop.xlane.xlu0 %3414
    %v3416 = vmul.f32 %v3400, %v157
    %v3417 = vmul.f32 %v3403, %v157
    %v3418 = vmul.f32 %v3406, %v157
    %v3419 = vmul.f32 %v3409, %v157
    %v3420 = vmul.f32 %v3412, %v157
    %v3421 = vmul.f32 %v3415, %v157
    %v3422 = vadd.f32 %v3416, 1e-05
    %v3423 = vadd.f32 %v3417, 1e-05
    %v3424 = vadd.f32 %v3418, 1e-05
    %v3425 = vadd.f32 %v3419, 1e-05
    %v3426 = vadd.f32 %v3420, 1e-05
    %v3427 = vadd.f32 %v3421, 1e-05
    %v3428 = vrsqrt.pop %v3422
    %v3429 = vrsqrt.pop %v3423
    %v3430 = vrsqrt.pop %v3424
    %v3431 = vrsqrt.pop %v3425
    %v3432 = vrsqrt.pop %v3426
    %v3433 = vrsqrt.pop %v3427
    %v3434 = vmul.f32 %v3386, %v3428
    %v3435 = vmul.f32 %v3387, %v3429
    %v3436 = vmul.f32 %v3388, %v3430
    %v3437 = vmul.f32 %v3389, %v3431
    %v3438 = vmul.f32 %v3390, %v3432
    %v3439 = vmul.f32 %v3391, %v3433
    %v3440 = vlaneseq
    %v3441 = vshrl.u32 %v3440, 7
    %v3442 = vsub.s32 0, %v3441
    %v3443 = vrot.slane %v2074, %v3442
    %v3444 = vmul.f32 %v3434, %v3443
    %v3445 = vmul.f32 %v3435, %v3443
    %v3446 = vmul.f32 %v3436, %v3443
    %v3447 = vmul.f32 %v3437, %v3443
    %v3448 = vmul.f32 %v3438, %v3443
    %v3449 = vmul.f32 %v3439, %v3443
    %v3450 = vlaneseq
    %v3451 = vshrl.u32 %v3450, 7
    %v3452 = vsub.s32 0, %v3451
    %v3453 = vrot.slane %v2075, %v3452
    %v3454 = vadd.f32 %v3444, %v3453
    %v3455 = vadd.f32 %v3445, %v3453
    %v3456 = vadd.f32 %v3446, %v3453
    %v3457 = vadd.f32 %v3447, %v3453
    %v3458 = vadd.f32 %v3448, %v3453
    %v3459 = vadd.f32 %v3449, %v3453
    %v3460 = vlaneseq
    %v3461 = vshrl.u32 %v3460, 7
    %v3462 = vsub.s32 0, %v3461
    %v3463 = vrot.slane %v2076, %v3462
    %v3465 = vsel %vm138, %v3454, 0
    %v3468 = vsel %vm138, %v3455, 0
    %v3471 = vsel %vm138, %v3456, 0
    %v3474 = vsel %vm138, %v3457, 0
    %v3477 = vsel %vm138, %v3458, 0
    %v3480 = vsel %vm138, %v3459, 0
    %3482 = vmatprep.subr.mxu0 0.0
    %3483 = vmatpush1.msra.mxu0 0.0
    %3484 = vmatprep.subr.mxu0 0.0
    %3485 = vmatpush1.msra.mxu0 0.0
    %3486 = vmatprep.subr.mxu0 0.0
    %3487 = vmatpush1.msra.mxu0 0.0
    %3488 = vmatprep.subr.mxu0 0.0
    %3489 = vmatpush1.msra.mxu0 0.0
    %3490 = vmatprep.subr.mxu0 0.0
    %3491 = vmatpush1.msra.mxu0 0.0
    %3492 = vmatprep.subr.mxu0 0.0
    %3493 = vmatpush1.msra.mxu0 0.0
    %3494 = vmatprep.subr.mxu0 0.0
    %3495 = vmatpush1.msra.mxu0 0.0
    %3496 = vmatprep.subr.mxu0 0.0
    %3497 = vmatpush1.msra.mxu0 0.0
    %3498 = vmatprep.subr.mxu0 0.0
    %3499 = vmatpush1.msra.mxu0 %v2053
    %3500 = vmatprep.subr.mxu0 0.0
    %3501 = vmatpush1.msra.mxu0 %v2052
    %3502 = vmatprep.subr.mxu0 0.0
    %3503 = vmatpush1.msra.mxu0 %v2051
    %3504 = vmatprep.subr.mxu0 0.0
    %3505 = vmatpush1.msra.mxu0 %v2050
    %3506 = vmatprep.subr.mxu0 0.0
    %3507 = vmatpush1.msra.mxu0 %v2049
    %3508 = vmatprep.subr.mxu0 0.0
    %3509 = vmatpush1.msra.mxu0 %v2048
    %3510 = vmatprep.subr.mxu0 0.0
    %3511 = vmatpush1.msra.mxu0 %v2047
    %3512 = vmatprep.subr.mxu0 0.0
    %3513 = vmatpush1.msra.mxu0 %v2046
    %3514 = vmatprep.subr.mxu0 0.0
    %3515 = vmatpush2.msra.mxu0 0.0
    %3516 = vmatprep.subr.mxu0 0.0
    %3517 = vmatpush2.msra.mxu0 0.0
    %3518 = vmatprep.subr.mxu0 0.0
    %3519 = vmatpush2.msra.mxu0 0.0
    %3520 = vmatprep.subr.mxu0 0.0
    %3521 = vmatpush2.msra.mxu0 0.0
    %3522 = vmatprep.subr.mxu0 0.0
    %3523 = vmatpush2.msra.mxu0 0.0
    %3524 = vmatprep.subr.mxu0 0.0
    %3525 = vmatpush2.msra.mxu0 0.0
    %3526 = vmatprep.subr.mxu0 0.0
    %3527 = vmatpush2.msra.mxu0 0.0
    %3528 = vmatprep.subr.mxu0 0.0
    %3529 = vmatpush2.msra.mxu0 0.0
    %3530 = vmatprep.subr.mxu0 0.0
    %3531 = vmatpush2.msra.mxu0 0.0
    %3532 = vmatprep.subr.mxu0 0.0
    %3533 = vmatpush2.msra.mxu0 0.0
    %3534 = vmatprep.subr.mxu0 0.0
    %3535 = vmatpush2.msra.mxu0 0.0
    %3536 = vmatprep.subr.mxu0 0.0
    %3537 = vmatpush2.msra.mxu0 0.0
    %3538 = vmatprep.subr.mxu0 0.0
    %3539 = vmatpush2.msra.mxu0 0.0
    %3540 = vmatprep.subr.mxu0 0.0
    %3541 = vmatpush2.msra.mxu0 0.0
    %3542 = vmatprep.subr.mxu0 0.0
    %3543 = vmatpush2.msra.mxu0 0.0
    %3544 = vmatprep.subr.mxu0 0.0
    %3545 = vmatpush2.msra.mxu0 0.0
    %3546 = vmatprep.mubr.f32.mxu0 0.0
    %3547 = vmatmul.mubr.f32.gmra.mxu0 %v3465
    %v3548 = vpop.f32.mrf.mxu0
    %v3549 = vadd.f32 %v3463, %v3548
    %v3550 = vpop.f32.mrf.mxu0
    %3551 = vmatprep.mubr.f32.mxu0 0.0
    %3552 = vmatmul.mubr.f32.gmra.mxu0 %v3468
    %v3553 = vpop.f32.mrf.mxu0
    %v3554 = vadd.f32 %v3463, %v3553
    %v3555 = vpop.f32.mrf.mxu0
    %3556 = vmatprep.mubr.f32.mxu0 0.0
    %3557 = vmatmul.mubr.f32.gmra.mxu0 %v3471
    %v3558 = vpop.f32.mrf.mxu0
    %v3559 = vadd.f32 %v3463, %v3558
    %v3560 = vpop.f32.mrf.mxu0
    %3561 = vmatprep.mubr.f32.mxu0 0.0
    %3562 = vmatmul.mubr.f32.gmra.mxu0 %v3474
    %v3563 = vpop.f32.mrf.mxu0
    %v3564 = vadd.f32 %v3463, %v3563
    %v3565 = vpop.f32.mrf.mxu0
    %3566 = vmatprep.mubr.f32.mxu0 0.0
    %3567 = vmatmul.mubr.f32.gmra.mxu0 %v3477
    %v3568 = vpop.f32.mrf.mxu0
    %v3569 = vadd.f32 %v3463, %v3568
    %v3570 = vpop.f32.mrf.mxu0
    %3571 = vmatprep.mubr.f32.mxu0 0.0
    %3572 = vmatmul.mubr.f32.gmra.mxu0 %v3480
    %v3573 = vpop.f32.mrf.mxu0
    %v3574 = vadd.f32 %v3463, %v3573
    %v3575 = vpop.f32.mrf.mxu0
    %3576 = vdwg.mxu0
    %v3577 = vmax.f32 %v3549, 0.0
    %v3578 = vmax.f32 %v3554, 0.0
    %v3579 = vmax.f32 %v3559, 0.0
    %v3580 = vmax.f32 %v3564, 0.0
    %v3581 = vmax.f32 %v3569, 0.0
    %v3582 = vmax.f32 %v3574, 0.0
    %v3583 = vlaneseq
    %v3584 = vshrl.u32 %v3583, 7
    %v3585 = vsub.s32 0, %v3584
    %v3586 = vrot.slane %v2077, %v3585
    %v3588 = vsel %vm138, %v3577, 0
    %v3591 = vsel %vm138, %v3578, 0
    %v3594 = vsel %vm138, %v3579, 0
    %v3597 = vsel %vm138, %v3580, 0
    %v3600 = vsel %vm138, %v3581, 0
    %v3603 = vsel %vm138, %v3582, 0
    %3605 = vmatprep.subr.mxu0 0.0
    %3606 = vmatpush1.msra.mxu0 0.0
    %3607 = vmatprep.subr.mxu0 0.0
    %3608 = vmatpush1.msra.mxu0 0.0
    %3609 = vmatprep.subr.mxu0 0.0
    %3610 = vmatpush1.msra.mxu0 0.0
    %3611 = vmatprep.subr.mxu0 0.0
    %3612 = vmatpush1.msra.mxu0 0.0
    %3613 = vmatprep.subr.mxu0 0.0
    %3614 = vmatpush1.msra.mxu0 0.0
    %3615 = vmatprep.subr.mxu0 0.0
    %3616 = vmatpush1.msra.mxu0 0.0
    %3617 = vmatprep.subr.mxu0 0.0
    %3618 = vmatpush1.msra.mxu0 0.0
    %3619 = vmatprep.subr.mxu0 0.0
    %3620 = vmatpush1.msra.mxu0 0.0
    %3621 = vmatprep.subr.mxu0 0.0
    %3622 = vmatpush1.msra.mxu0 %v2061
    %3623 = vmatprep.subr.mxu0 0.0
    %3624 = vmatpush1.msra.mxu0 %v2060
    %3625 = vmatprep.subr.mxu0 0.0
    %3626 = vmatpush1.msra.mxu0 %v2059
    %3627 = vmatprep.subr.mxu0 0.0
    %3628 = vmatpush1.msra.mxu0 %v2058
    %3629 = vmatprep.subr.mxu0 0.0
    %3630 = vmatpush1.msra.mxu0 %v2057
    %3631 = vmatprep.subr.mxu0 0.0
    %3632 = vmatpush1.msra.mxu0 %v2056
    %3633 = vmatprep.subr.mxu0 0.0
    %3634 = vmatpush1.msra.mxu0 %v2055
    %3635 = vmatprep.subr.mxu0 0.0
    %3636 = vmatpush1.msra.mxu0 %v2054
    %3637 = vmatprep.subr.mxu0 0.0
    %3638 = vmatpush2.msra.mxu0 0.0
    %3639 = vmatprep.subr.mxu0 0.0
    %3640 = vmatpush2.msra.mxu0 0.0
    %3641 = vmatprep.subr.mxu0 0.0
    %3642 = vmatpush2.msra.mxu0 0.0
    %3643 = vmatprep.subr.mxu0 0.0
    %3644 = vmatpush2.msra.mxu0 0.0
    %3645 = vmatprep.subr.mxu0 0.0
    %3646 = vmatpush2.msra.mxu0 0.0
    %3647 = vmatprep.subr.mxu0 0.0
    %3648 = vmatpush2.msra.mxu0 0.0
    %3649 = vmatprep.subr.mxu0 0.0
    %3650 = vmatpush2.msra.mxu0 0.0
    %3651 = vmatprep.subr.mxu0 0.0
    %3652 = vmatpush2.msra.mxu0 0.0
    %3653 = vmatprep.subr.mxu0 0.0
    %3654 = vmatpush2.msra.mxu0 0.0
    %3655 = vmatprep.subr.mxu0 0.0
    %3656 = vmatpush2.msra.mxu0 0.0
    %3657 = vmatprep.subr.mxu0 0.0
    %3658 = vmatpush2.msra.mxu0 0.0
    %3659 = vmatprep.subr.mxu0 0.0
    %3660 = vmatpush2.msra.mxu0 0.0
    %3661 = vmatprep.subr.mxu0 0.0
    %3662 = vmatpush2.msra.mxu0 0.0
    %3663 = vmatprep.subr.mxu0 0.0
    %3664 = vmatpush2.msra.mxu0 0.0
    %3665 = vmatprep.subr.mxu0 0.0
    %3666 = vmatpush2.msra.mxu0 0.0
    %3667 = vmatprep.subr.mxu0 0.0
    %3668 = vmatpush2.msra.mxu0 0.0
    %3669 = vmatprep.mubr.f32.mxu0 0.0
    %3670 = vmatmul.mubr.f32.gmra.mxu0 %v3588
    %v3671 = vpop.f32.mrf.mxu0
    %v3672 = vadd.f32 %v3586, %v3671
    %v3673 = vpop.f32.mrf.mxu0
    %3674 = vmatprep.mubr.f32.mxu0 0.0
    %3675 = vmatmul.mubr.f32.gmra.mxu0 %v3591
    %v3676 = vpop.f32.mrf.mxu0
    %v3677 = vadd.f32 %v3586, %v3676
    %v3678 = vpop.f32.mrf.mxu0
    %3679 = vmatprep.mubr.f32.mxu0 0.0
    %3680 = vmatmul.mubr.f32.gmra.mxu0 %v3594
    %v3681 = vpop.f32.mrf.mxu0
    %v3682 = vadd.f32 %v3586, %v3681
    %v3683 = vpop.f32.mrf.mxu0
    %3684 = vmatprep.mubr.f32.mxu0 0.0
    %3685 = vmatmul.mubr.f32.gmra.mxu0 %v3597
    %v3686 = vpop.f32.mrf.mxu0
    %v3687 = vadd.f32 %v3586, %v3686
    %v3688 = vpop.f32.mrf.mxu0
    %3689 = vmatprep.mubr.f32.mxu0 0.0
    %3690 = vmatmul.mubr.f32.gmra.mxu0 %v3600
    %v3691 = vpop.f32.mrf.mxu0
    %v3692 = vadd.f32 %v3586, %v3691
    %v3693 = vpop.f32.mrf.mxu0
    %3694 = vmatprep.mubr.f32.mxu0 0.0
    %3695 = vmatmul.mubr.f32.gmra.mxu0 %v3603
    %v3696 = vpop.f32.mrf.mxu0
    %v3697 = vadd.f32 %v3586, %v3696
    %v3698 = vpop.f32.mrf.mxu0
    %3699 = vdwg.mxu0
    %v3700 = vlaneseq
    %v3701 = vshrl.u32 %v3700, 7
    %v3702 = vsub.s32 0, %v3701
    %v3703 = vrot.slane %v2078, %v3702
    %v3705 = vsel %vm138, %v3672, 0
    %v3708 = vsel %vm138, %v3677, 0
    %v3711 = vsel %vm138, %v3682, 0
    %v3714 = vsel %vm138, %v3687, 0
    %v3717 = vsel %vm138, %v3692, 0
    %v3720 = vsel %vm138, %v3697, 0
    %3722 = vmatprep.subr.mxu0 0.0
    %3723 = vmatpush1.msra.mxu0 0.0
    %3724 = vmatprep.subr.mxu0 0.0
    %3725 = vmatpush1.msra.mxu0 0.0
    %3726 = vmatprep.subr.mxu0 0.0
    %3727 = vmatpush1.msra.mxu0 0.0
    %3728 = vmatprep.subr.mxu0 0.0
    %3729 = vmatpush1.msra.mxu0 0.0
    %3730 = vmatprep.subr.mxu0 0.0
    %3731 = vmatpush1.msra.mxu0 0.0
    %3732 = vmatprep.subr.mxu0 0.0
    %3733 = vmatpush1.msra.mxu0 0.0
    %3734 = vmatprep.subr.mxu0 0.0
    %3735 = vmatpush1.msra.mxu0 0.0
    %3736 = vmatprep.subr.mxu0 0.0
    %3737 = vmatpush1.msra.mxu0 0.0
    %3738 = vmatprep.subr.mxu0 0.0
    %3739 = vmatpush1.msra.mxu0 %v2069
    %3740 = vmatprep.subr.mxu0 0.0
    %3741 = vmatpush1.msra.mxu0 %v2068
    %3742 = vmatprep.subr.mxu0 0.0
    %3743 = vmatpush1.msra.mxu0 %v2067
    %3744 = vmatprep.subr.mxu0 0.0
    %3745 = vmatpush1.msra.mxu0 %v2066
    %3746 = vmatprep.subr.mxu0 0.0
    %3747 = vmatpush1.msra.mxu0 %v2065
    %3748 = vmatprep.subr.mxu0 0.0
    %3749 = vmatpush1.msra.mxu0 %v2064
    %3750 = vmatprep.subr.mxu0 0.0
    %3751 = vmatpush1.msra.mxu0 %v2063
    %3752 = vmatprep.subr.mxu0 0.0
    %3753 = vmatpush1.msra.mxu0 %v2062
    %3754 = vmatprep.subr.mxu0 0.0
    %3755 = vmatpush2.msra.mxu0 0.0
    %3756 = vmatprep.subr.mxu0 0.0
    %3757 = vmatpush2.msra.mxu0 0.0
    %3758 = vmatprep.subr.mxu0 0.0
    %3759 = vmatpush2.msra.mxu0 0.0
    %3760 = vmatprep.subr.mxu0 0.0
    %3761 = vmatpush2.msra.mxu0 0.0
    %3762 = vmatprep.subr.mxu0 0.0
    %3763 = vmatpush2.msra.mxu0 0.0
    %3764 = vmatprep.subr.mxu0 0.0
    %3765 = vmatpush2.msra.mxu0 0.0
    %3766 = vmatprep.subr.mxu0 0.0
    %3767 = vmatpush2.msra.mxu0 0.0
    %3768 = vmatprep.subr.mxu0 0.0
    %3769 = vmatpush2.msra.mxu0 0.0
    %3770 = vmatprep.subr.mxu0 0.0
    %3771 = vmatpush2.msra.mxu0 0.0
    %3772 = vmatprep.subr.mxu0 0.0
    %3773 = vmatpush2.msra.mxu0 0.0
    %3774 = vmatprep.subr.mxu0 0.0
    %3775 = vmatpush2.msra.mxu0 0.0
    %3776 = vmatprep.subr.mxu0 0.0
    %3777 = vmatpush2.msra.mxu0 0.0
    %3778 = vmatprep.subr.mxu0 0.0
    %3779 = vmatpush2.msra.mxu0 0.0
    %3780 = vmatprep.subr.mxu0 0.0
    %3781 = vmatpush2.msra.mxu0 0.0
    %3782 = vmatprep.subr.mxu0 0.0
    %3783 = vmatpush2.msra.mxu0 0.0
    %3784 = vmatprep.subr.mxu0 0.0
    %3785 = vmatpush2.msra.mxu0 0.0
    %3786 = vmatprep.mubr.f32.mxu0 0.0
    %3787 = vmatmul.mubr.f32.gmra.mxu0 %v3705
    %v3788 = vpop.f32.mrf.mxu0
    %v3789 = vadd.f32 %v3703, %v3788
    %v3790 = vpop.f32.mrf.mxu0
    %3791 = vmatprep.mubr.f32.mxu0 0.0
    %3792 = vmatmul.mubr.f32.gmra.mxu0 %v3708
    %v3793 = vpop.f32.mrf.mxu0
    %v3794 = vadd.f32 %v3703, %v3793
    %v3795 = vpop.f32.mrf.mxu0
    %3796 = vmatprep.mubr.f32.mxu0 0.0
    %3797 = vmatmul.mubr.f32.gmra.mxu0 %v3711
    %v3798 = vpop.f32.mrf.mxu0
    %v3799 = vadd.f32 %v3703, %v3798
    %v3800 = vpop.f32.mrf.mxu0
    %3801 = vmatprep.mubr.f32.mxu0 0.0
    %3802 = vmatmul.mubr.f32.gmra.mxu0 %v3714
    %v3803 = vpop.f32.mrf.mxu0
    %v3804 = vadd.f32 %v3703, %v3803
    %v3805 = vpop.f32.mrf.mxu0
    %3806 = vmatprep.mubr.f32.mxu0 0.0
    %3807 = vmatmul.mubr.f32.gmra.mxu0 %v3717
    %v3808 = vpop.f32.mrf.mxu0
    %v3809 = vadd.f32 %v3703, %v3808
    %v3810 = vpop.f32.mrf.mxu0
    %3811 = vmatprep.mubr.f32.mxu0 0.0
    %3812 = vmatmul.mubr.f32.gmra.mxu0 %v3720
    %v3813 = vpop.f32.mrf.mxu0
    %v3814 = vadd.f32 %v3703, %v3813
    %v3815 = vpop.f32.mrf.mxu0
    %3816 = vdwg.mxu0
    %v3817 = vadd.f32 %v3356, %v3789
    %v3818 = vadd.f32 %v3357, %v3794
    %v3819 = vadd.f32 %v3358, %v3799
    %v3820 = vadd.f32 %v3359, %v3804
    %v3821 = vadd.f32 %v3360, %v3809
    %v3822 = vadd.f32 %v3361, %v3814
    %3823 = vst.msk [vmem:[#allocation2] sm:$0xff] %vm138, %v3817
    %3824 = vst.msk [vmem:[#allocation2 + $0x8] sm:$0xff] %vm138, %v3818
    %3825 = vst.msk [vmem:[#allocation2 + $0x10] sm:$0xff] %vm138, %v3819
    %3826 = vst.msk [vmem:[#allocation2 + $0x18] sm:$0xff] %vm138, %v3820
    %3827 = vst.msk [vmem:[#allocation2 + $0x20] sm:$0xff] %vm138, %v3821
    %3828 = vst.msk [vmem:[#allocation2 + $0x28] sm:$0xff] %vm138, %v3822
    // Predicated region
    $region34: #{tpu_custom_call.1} parent=1 // pred_check
      _
    $region35: #{tpu_custom_call.1} parent=1 // pred_check_branch
      %3830 = sbr.rel (0) target = $region37
    $region36: #{tpu_custom_call.1} parent=1 // pred_region
      %s3832 = ssub.s32 768, 768
      %3833 = vsyncadd [#allocation3], %s3832
      %s3834 = sshll.u32 [#allocation2], 4
      %s3835 = int_to_ptr.vmem [resolvable:$true] %s3834
      %3840 = dma.vmem_to_hbm [thread:$0]  %s3835, 768, %s8, [#allocation3], 128, 128, 8
    $region37: #{tpu_custom_call.1} parent=1 // pred_fallthru
      _
    // Predicated region
    $region38: #{tpu_custom_call.1} parent=1 // pred_check
      _
    $region39: #{tpu_custom_call.1} parent=1 // pred_check_branch
      %3842 = sbr.rel (0) target = $region41
    $region40: #{tpu_custom_call.1} parent=1 // pred_region
      %3843 = dma.done [#allocation3], 768
    $region41: #{tpu_custom_call.1} parent=1 // pred_fallthru
      _
    %3844 = vsyncpa [#allocation3], 1

</llo_original>
